<compile_context>
chip_gen: v5e
topology: v5e:2x2
jax: 0.10.0
libtpu: 0.0.40
codegen_flags: <defaults>
</compile_context>

<pallas_src>
import functools

import jax
import jax.numpy as jnp
from jax import lax
from jax.experimental import pallas as pl
from jax.experimental.pallas import tpu as pltpu


def _round_up(x, m):
    return (x + m - 1) // m * m


def _pad_hw(a, ph, pw, value):
    """Pad a (B, H, W, C) register array along H and W with `value` (non-minor concats)."""
    b, h, w, c = a.shape
    if ph:
        rows = jnp.full((b, ph, w, c), value, dtype=a.dtype)
        a = jnp.concatenate([rows, a, rows], axis=1)
    if pw:
        cols = jnp.full((b, h + 2 * ph, pw, c), value, dtype=a.dtype)
        a = jnp.concatenate([cols, a, cols], axis=2)
    return a


def inception_resnet_kernel(x_ref, w_s1_ref, b_s1_ref, w_conv_ref, out_ref,
                            *, c1, crc, cp_pad):
    B, H, W, Cin = x_ref.shape
    cout_pad = out_ref.shape[-1]           # multiple of 128 -> lane-dense store
    M = B * H * W
    cdtype = w_s1_ref.dtype                # MXU operand dtype (f32 or bf16); acc stays f32

    x = x_ref[...]
    x_flat = x.reshape(M, Cin)

    # ---- branch-pool maxpool: separable 3x3 (pad=1), register-resident, f32 ----
    xw = _pad_hw(x, 0, 1, -jnp.inf)
    rowmax = jnp.maximum(jnp.maximum(xw[:, :, 0:W, :], xw[:, :, 1:W + 1, :]),
                         xw[:, :, 2:W + 2, :])
    rm = _pad_hw(rowmax, 1, 0, -jnp.inf)
    pooled = jnp.maximum(jnp.maximum(rm[:, 0:H], rm[:, 1:H + 1]), rm[:, 2:H + 2])

    # ---- stage 1: ONE block-diagonal matmul over [x | pooled] ->
    #      [branch1x1 | 3x3-reduce | 5x5-reduce | pool-proj(+lane pad) | scaled residual] ----
    op1 = jnp.concatenate([x_flat, pooled.reshape(M, Cin)], axis=-1).astype(cdtype)
    stage1 = jnp.dot(op1, w_s1_ref[...],
                     preferred_element_type=jnp.float32) + b_s1_ref[...]

    y1 = stage1[:, 0:c1]                                       # branch1x1 (+ b1)
    rc = stage1[:, c1:c1 + crc].reshape(B, H, W, crc)           # [3x3-reduce | 5x5-reduce]
    yp = stage1[:, c1 + crc:c1 + crc + cp_pad]                  # pool proj (+ bp) + zero pad
    res = stage1[:, c1 + crc + cp_pad:]                         # scale*resid + tail biases

    # ---- fused 3x3 + 5x5 conv: 5 per-row (dy) packed-K block-diagonal matmuls,
    #      accumulated in f32 (one padded-K MXU pass per row) ----
    rcp = _pad_hw(rc, 2, 2, 0.0)
    acc35 = None
    for dy in range(5):
        cols = jnp.concatenate(
            [rcp[:, dy:dy + H, dx:dx + W, :].reshape(M, crc) for dx in range(5)],
            axis=-1)
        part = jnp.dot(cols.astype(cdtype), w_conv_ref[dy],
                       preferred_element_type=jnp.float32)
        acc35 = part if acc35 is None else acc35 + part

    # ---- epilogue: single add, single lane-dense (multiple-of-128) store ----
    final = jnp.concatenate([y1, acc35, yp], axis=-1) + res
    out_ref[...] = final.reshape(B, H, W, cout_pad)


def _vmem_capacity_bytes():
    try:
        cap = int(pltpu.get_tpu_info().vmem_capacity_bytes)
    except Exception:
        cap = 64 * 1024 * 1024          # conservative default (v7x per-TensorCore VMEM)
    return min(max(cap, 32 * 1024 * 1024), 128 * 1024 * 1024)


def _choose_batch_tile(n, per_image_bytes, budget_bytes):
    cap = max(1, budget_bytes // max(per_image_bytes, 1))
    cap = min(cap, n)
    if n >= 2:
        cap = min(cap, n // 2)   # keep >= 2 grid steps so "parallel" shards over 2 TCs (v7x)
    cap = max(cap, 1)
    for b in range(cap, 0, -1):
        if n % b == 0:
            return b
    return 1


def inception_resnet_forward(x, params, scale_factor=0.2, operand_dtype=jnp.float32):
    (w1, b1, w3r, b3r, w3, b3, w5r, b5r, w5, b5, wp, bp, wres, bres) = params
    N, H, W, Cin = x.shape
    c1, c3r, c3 = w1.shape[1], w3r.shape[1], w3.shape[3]
    c5r, c5, cp = w5r.shape[1], w5.shape[3], wp.shape[1]
    cout = c1 + c3 + c5 + cp
    crc = c3r + c5r
    f32 = jnp.float32

    if wres is None:                      # identity residual (cout == Cin)
        assert cout == Cin
        wres = jnp.eye(Cin, dtype=f32)
        bres = jnp.zeros((cout,), f32)

    # Lane-dense output: pad output channels up to a multiple of 128; the pad columns are
    # generated as extra zero columns of the stage-1 matmul (free), stripped in the wrapper.
    cout_pad = _round_up(cout, 128)
    cp_pad = cp + (cout_pad - cout)

    # ---- fused stage-1 weight over [x | pooled] (block-diagonal in K) ----
    # columns: [c1 | c3r | c5r | cp (+pad) | cout_pad (scaled residual)]
    s1_cols = c1 + crc + cp_pad + cout_pad
    w_s1 = jnp.zeros((2 * Cin, s1_cols), f32)
    w_s1 = w_s1.at[:Cin, 0:c1].set(w1)
    w_s1 = w_s1.at[:Cin, c1:c1 + c3r].set(w3r)
    w_s1 = w_s1.at[:Cin, c1 + c3r:c1 + crc].set(w5r)
    w_s1 = w_s1.at[Cin:, c1 + crc:c1 + crc + cp].set(wp)               # pool projection
    w_s1 = w_s1.at[:Cin, c1 + crc + cp_pad:c1 + crc + cp_pad + cout].set(scale_factor * wres)

    # Bias (kept f32, added post-matmul): b1/b3r/b5r/bp in their own columns; the tail conv
    # biases b3/b5 and scale*bres are folded into the residual columns.
    b_res = jnp.zeros((cout_pad,), f32)
    b_res = b_res.at[:cout].set(
        scale_factor * bres
        + jnp.concatenate([jnp.zeros((c1,), f32), b3, b5, jnp.zeros((cp,), f32)]))
    b_s1 = jnp.zeros((1, s1_cols), f32)
    b_s1 = b_s1.at[0, 0:c1].set(b1)
    b_s1 = b_s1.at[0, c1:c1 + c3r].set(b3r)
    b_s1 = b_s1.at[0, c1 + c3r:c1 + crc].set(b5r)
    b_s1 = b_s1.at[0, c1 + crc:c1 + crc + cp].set(bp)
    b_s1 = b_s1.at[0, c1 + crc + cp_pad:].set(b_res)

    # ---- fused 3x3/5x5 conv weights: per-dy block-diagonal rows over the combined
    #      [3x3-reduce | 5x5-reduce] channels (3x3 kernel zero-padded to 5x5) ----
    w3p = jnp.zeros((5, 5, c3r, c3), f32).at[1:4, 1:4].set(w3)
    w_conv = jnp.zeros((5, 5 * crc, c3 + c5), f32)
    for dy in range(5):
        for dx in range(5):
            w_conv = w_conv.at[dy, dx * crc:dx * crc + c3r, 0:c3].set(w3p[dy, dx])
            w_conv = w_conv.at[dy, dx * crc + c3r:(dx + 1) * crc, c3:].set(w5[dy, dx])

    w_s1 = w_s1.astype(operand_dtype)
    w_conv = w_conv.astype(operand_dtype)

    # ---- batch tile from a generation-aware VMEM budget; grid stays >= 2 steps ----
    vmem_cap = _vmem_capacity_bytes()
    hw = H * W
    per_image = 4 * (hw * (2 * Cin            # input tile (double-buffered)
                           + 2 * cout_pad     # output tile (double-buffered)
                           + 2 * Cin          # stage-1 operand
                           + s1_cols          # stage-1 result
                           + 5 * crc          # one row-packed im2col operand
                           + (c3 + c5)        # conv accumulator
                           + cout_pad)        # final
                     + (H + 4) * (W + 4) * crc)
    per_image *= 2                             # headroom for relayout temporaries / spills
    b_tile = _choose_batch_tile(N, per_image, vmem_cap // 4)
    grid = (N // b_tile,)

    kernel = functools.partial(inception_resnet_kernel, c1=c1, crc=crc, cp_pad=cp_pad)

    out = pl.pallas_call(
        kernel,
        out_shape=jax.ShapeDtypeStruct((N, H, W, cout_pad), jnp.float32),
        grid=grid,
        in_specs=[
            pl.BlockSpec((b_tile, H, W, Cin), lambda n: (n, 0, 0, 0)),
            pl.BlockSpec(w_s1.shape, lambda n: (0, 0)),
            pl.BlockSpec(b_s1.shape, lambda n: (0, 0)),
            pl.BlockSpec(w_conv.shape, lambda n: (0, 0, 0)),
        ],
        out_specs=pl.BlockSpec((b_tile, H, W, cout_pad), lambda n: (n, 0, 0, 0)),
        compiler_params=pltpu.CompilerParams(
            dimension_semantics=("parallel",),
            vmem_limit_bytes=(3 * vmem_cap) // 4),
    )(x, w_s1, b_s1, w_conv)

    return out[..., :cout]      # strip the lane padding


# ---------------- plain-JAX reference (for correctness check) ----------------
def _conv_ref(x, w_hwio, b, pad):
    y = lax.conv_general_dilated(
        x, w_hwio, window_strides=(1, 1),
        padding=[(pad, pad), (pad, pad)],
        dimension_numbers=("NHWC", "HWIO", "NHWC"))
    return y + b.reshape(1, 1, 1, -1)


def inception_resnet_reference(x, params, scale_factor=0.2):
    (w1, b1, w3r, b3r, w3, b3, w5r, b5r, w5, b5, wp, bp, wres, bres) = params
    br1 = _conv_ref(x, w1[None, None], b1, 0)
    br3 = _conv_ref(_conv_ref(x, w3r[None, None], b3r, 0), w3, b3, 1)
    br5 = _conv_ref(_conv_ref(x, w5r[None, None], b5r, 0), w5, b5, 2)
    pooled = lax.reduce_window(x, -jnp.inf, lax.max,
                               window_dimensions=(1, 3, 3, 1),
                               window_strides=(1, 1, 1, 1),
                               padding=[(0, 0), (1, 1), (1, 1), (0, 0)])
    brp = _conv_ref(pooled, wp[None, None], bp, 0)
    cat = jnp.concatenate([br1, br3, br5, brp], axis=-1)
    resid = _conv_ref(x, wres[None, None], bres, 0) if wres is not None else x
    return cat + scale_factor * resid


if __name__ == "__main__":
    def _make_case(key, N, H, W, Cin, c1, c3r, c3, c5r, c5, cp):
        cout = c1 + c3 + c5 + cp
        ks = jax.random.split(key, 15)
        s = 0.1
        x = jax.random.normal(ks[0], (N, H, W, Cin), jnp.float32)
        w1 = s * jax.random.normal(ks[1], (Cin, c1), jnp.float32)
        b1 = s * jax.random.normal(ks[2], (c1,), jnp.float32)
        w3r = s * jax.random.normal(ks[3], (Cin, c3r), jnp.float32)
        b3r = s * jax.random.normal(ks[4], (c3r,), jnp.float32)
        w3 = s * jax.random.normal(ks[5], (3, 3, c3r, c3), jnp.float32)
        b3 = s * jax.random.normal(ks[6], (c3,), jnp.float32)
        w5r = s * jax.random.normal(ks[7], (Cin, c5r), jnp.float32)
        b5r = s * jax.random.normal(ks[8], (c5r,), jnp.float32)
        w5 = s * jax.random.normal(ks[9], (5, 5, c5r, c5), jnp.float32)
        b5 = s * jax.random.normal(ks[10], (c5,), jnp.float32)
        wp = s * jax.random.normal(ks[11], (Cin, cp), jnp.float32)
        bp = s * jax.random.normal(ks[12], (cp,), jnp.float32)
        if cout != Cin:
            wres = s * jax.random.normal(ks[13], (Cin, cout), jnp.float32)
            bres = s * jax.random.normal(ks[14], (cout,), jnp.float32)
        else:
            wres, bres = None, None
        return x, (w1, b1, w3r, b3r, w3, b3, w5r, b5r, w5, b5, wp, bp, wres, bres)

    scale = 0.2
    k1, k2 = jax.random.split(jax.random.PRNGKey(0))

    # Case 1: cout != Cin -> residual 1x1 conv path (toy widths; real modules have
    # Cin = 192..832 and branch widths 32..384, where lane occupancy is adequate).
    x1, p1 = _make_case(k1, N=2, H=16, W=16, Cin=4, c1=8, c3r=4, c3=8, c5r=4, c5=8, cp=8)
    ref1 = inception_resnet_reference(x1, p1, scale)

    out1 = jax.block_until_ready(inception_resnet_forward(x1, p1, scale))
    assert out1.shape == ref1.shape
    assert jnp.allclose(out1, ref1, atol=1e-4, rtol=1e-4), "f32 kernel mismatch vs reference"

    # Same case with bf16 MXU operands (f32 accumulation) -> looser tolerance.
    out1_bf16 = jax.block_until_ready(
        inception_resnet_forward(x1, p1, scale, operand_dtype=jnp.bfloat16))
    assert jnp.allclose(out1_bf16, ref1, atol=3e-2, rtol=3e-2), "bf16 kernel mismatch vs reference"

    # Case 2: cout == Cin -> identity residual path.
    x2, p2 = _make_case(k2, N=2, H=8, W=8, Cin=32, c1=8, c3r=4, c3=8, c5r=4, c5=8, cp=8)
    ref2 = inception_resnet_reference(x2, p2, scale)
    out2 = jax.block_until_ready(inception_resnet_forward(x2, p2, scale))
    assert jnp.allclose(out2, ref2, atol=1e-4, rtol=1e-4), "identity-residual kernel mismatch"

    print("KERNEL_OK")
</pallas_src>

<mosaic_0001>
module attributes {stable_mosaic.version = 11 : i64} {
  func.func @inception_resnet_kernel(%arg0: i32, %arg1: memref<1x16x16x4xf32, #tpu.memory_space<vmem>>, %arg2: memref<8x248xf32, #tpu.memory_space<vmem>>, %arg3: memref<1x248xf32, #tpu.memory_space<vmem>>, %arg4: memref<5x40x16xf32, #tpu.memory_space<vmem>>, %arg5: memref<1x16x16x128xf32, #tpu.memory_space<vmem>>) attributes {dimension_semantics = [#tpu.dimension_semantics<parallel>], iteration_bounds = array<i64: 2>, scalar_prefetch = 0 : i64, scratch_operands = 0 : i64, tpu.core_type = #tpu.core_type<tc>, window_params = [{transform_indices = @transform_0, window_bounds = array<i64: 1, 16, 16, 4>}, {pipeline_mode = #tpu.pipeline_mode<synchronous>, transform_indices = @transform_1, window_bounds = array<i64: 8, 248>}, {pipeline_mode = #tpu.pipeline_mode<synchronous>, transform_indices = @transform_2, window_bounds = array<i64: 1, 248>}, {pipeline_mode = #tpu.pipeline_mode<synchronous>, transform_indices = @transform_3, window_bounds = array<i64: 5, 40, 16>}, {transform_indices = @transform_4, window_bounds = array<i64: 1, 16, 16, 128>}]} {
    %c0 = arith.constant 0 : index
    %c0_0 = arith.constant 0 : index
    %c0_1 = arith.constant 0 : index
    %c0_2 = arith.constant 0 : index
    %0 = vector.load %arg1[%c0, %c0_0, %c0_1, %c0_2] : memref<1x16x16x4xf32, #tpu.memory_space<vmem>>, vector<1x16x16x4xf32>
    %1 = vector.shape_cast %0 : vector<1x16x16x4xf32> to vector<256x4xf32>
    %cst = arith.constant 0xFF800000 : f32
    %2 = vector.broadcast %cst : f32 to vector<1x16x1x4xf32>
    %3 = tpu.concatenate %2, %0, %2 in 2 : vector<1x16x1x4xf32>, vector<1x16x16x4xf32>, vector<1x16x1x4xf32> -> vector<1x16x18x4xf32>
    %4 = vector.extract_strided_slice %3 {offsets = [0, 0, 0, 0], sizes = [1, 16, 16, 4], strides = [1, 1, 1, 1]} : vector<1x16x18x4xf32> to vector<1x16x16x4xf32>
    %5 = vector.extract_strided_slice %3 {offsets = [0, 0, 1, 0], sizes = [1, 16, 16, 4], strides = [1, 1, 1, 1]} : vector<1x16x18x4xf32> to vector<1x16x16x4xf32>
    %6 = arith.maximumf %4, %5 : vector<1x16x16x4xf32>
    %7 = vector.extract_strided_slice %3 {offsets = [0, 0, 2, 0], sizes = [1, 16, 16, 4], strides = [1, 1, 1, 1]} : vector<1x16x18x4xf32> to vector<1x16x16x4xf32>
    %8 = arith.maximumf %6, %7 : vector<1x16x16x4xf32>
    %cst_3 = arith.constant 0xFF800000 : f32
    %9 = vector.broadcast %cst_3 : f32 to vector<1x1x16x4xf32>
    %10 = tpu.concatenate %9, %8, %9 in 1 : vector<1x1x16x4xf32>, vector<1x16x16x4xf32>, vector<1x1x16x4xf32> -> vector<1x18x16x4xf32>
    %11 = vector.extract_strided_slice %10 {offsets = [0, 0, 0, 0], sizes = [1, 16, 16, 4], strides = [1, 1, 1, 1]} : vector<1x18x16x4xf32> to vector<1x16x16x4xf32>
    %12 = vector.extract_strided_slice %10 {offsets = [0, 1, 0, 0], sizes = [1, 16, 16, 4], strides = [1, 1, 1, 1]} : vector<1x18x16x4xf32> to vector<1x16x16x4xf32>
    %13 = arith.maximumf %11, %12 : vector<1x16x16x4xf32>
    %14 = vector.extract_strided_slice %10 {offsets = [0, 2, 0, 0], sizes = [1, 16, 16, 4], strides = [1, 1, 1, 1]} : vector<1x18x16x4xf32> to vector<1x16x16x4xf32>
    %15 = arith.maximumf %13, %14 : vector<1x16x16x4xf32>
    %16 = vector.shape_cast %15 : vector<1x16x16x4xf32> to vector<256x4xf32>
    %17 = tpu.concatenate %1, %16 in 1 : vector<256x4xf32>, vector<256x4xf32> -> vector<256x8xf32>
    %c0_4 = arith.constant 0 : index
    %c0_5 = arith.constant 0 : index
    %18 = vector.load %arg2[%c0_4, %c0_5] : memref<8x248xf32, #tpu.memory_space<vmem>>, vector<8x248xf32>
    %cst_6 = arith.constant dense<0.000000e+00> : vector<256x248xf32>
    %19 = tpu.matmul %17, %18, %cst_6 {dimension_numbers = #tpu.dot_dimension_numbers<[1], [0], [0], [1], [0, 0, 1, 1], [], []>} : vector<256x8xf32>, vector<8x248xf32>, vector<256x248xf32> -> vector<256x248xf32>
    %c0_7 = arith.constant 0 : index
    %c0_8 = arith.constant 0 : index
    %20 = vector.load %arg3[%c0_7, %c0_8] : memref<1x248xf32, #tpu.memory_space<vmem>>, vector<1x248xf32>
    %21 = vector.broadcast %20 : vector<1x248xf32> to vector<256x248xf32>
    %22 = arith.addf %19, %21 : vector<256x248xf32>
    %23 = vector.extract_strided_slice %22 {offsets = [0, 0], sizes = [256, 8], strides = [1, 1]} : vector<256x248xf32> to vector<256x8xf32>
    %24 = vector.extract_strided_slice %22 {offsets = [0, 8], sizes = [256, 8], strides = [1, 1]} : vector<256x248xf32> to vector<256x8xf32>
    %25 = vector.shape_cast %24 : vector<256x8xf32> to vector<1x16x16x8xf32>
    %26 = vector.extract_strided_slice %22 {offsets = [0, 16], sizes = [256, 104], strides = [1, 1]} : vector<256x248xf32> to vector<256x104xf32>
    %27 = vector.extract_strided_slice %22 {offsets = [0, 120], sizes = [256, 128], strides = [1, 1]} : vector<256x248xf32> to vector<256x128xf32>
    %cst_9 = arith.constant 0.000000e+00 : f32
    %28 = vector.broadcast %cst_9 : f32 to vector<1x2x16x8xf32>
    %29 = tpu.concatenate %28, %25, %28 in 1 : vector<1x2x16x8xf32>, vector<1x16x16x8xf32>, vector<1x2x16x8xf32> -> vector<1x20x16x8xf32>
    %cst_10 = arith.constant 0.000000e+00 : f32
    %30 = vector.broadcast %cst_10 : f32 to vector<1x20x2x8xf32>
    %31 = tpu.concatenate %30, %29, %30 in 2 : vector<1x20x2x8xf32>, vector<1x20x16x8xf32>, vector<1x20x2x8xf32> -> vector<1x20x20x8xf32>
    %32 = vector.extract_strided_slice %31 {offsets = [0, 0, 0, 0], sizes = [1, 16, 16, 8], strides = [1, 1, 1, 1]} : vector<1x20x20x8xf32> to vector<1x16x16x8xf32>
    %33 = vector.shape_cast %32 : vector<1x16x16x8xf32> to vector<256x8xf32>
    %34 = vector.extract_strided_slice %31 {offsets = [0, 0, 1, 0], sizes = [1, 16, 16, 8], strides = [1, 1, 1, 1]} : vector<1x20x20x8xf32> to vector<1x16x16x8xf32>
    %35 = vector.shape_cast %34 : vector<1x16x16x8xf32> to vector<256x8xf32>
    %36 = vector.extract_strided_slice %31 {offsets = [0, 0, 2, 0], sizes = [1, 16, 16, 8], strides = [1, 1, 1, 1]} : vector<1x20x20x8xf32> to vector<1x16x16x8xf32>
    %37 = vector.shape_cast %36 : vector<1x16x16x8xf32> to vector<256x8xf32>
    %38 = vector.extract_strided_slice %31 {offsets = [0, 0, 3, 0], sizes = [1, 16, 16, 8], strides = [1, 1, 1, 1]} : vector<1x20x20x8xf32> to vector<1x16x16x8xf32>
    %39 = vector.shape_cast %38 : vector<1x16x16x8xf32> to vector<256x8xf32>
    %40 = vector.extract_strided_slice %31 {offsets = [0, 0, 4, 0], sizes = [1, 16, 16, 8], strides = [1, 1, 1, 1]} : vector<1x20x20x8xf32> to vector<1x16x16x8xf32>
    %41 = vector.shape_cast %40 : vector<1x16x16x8xf32> to vector<256x8xf32>
    %42 = tpu.concatenate %33, %35, %37, %39, %41 in 1 : vector<256x8xf32>, vector<256x8xf32>, vector<256x8xf32>, vector<256x8xf32>, vector<256x8xf32> -> vector<256x40xf32>
    %c0_11 = arith.constant 0 : index
    %c0_12 = arith.constant 0 : index
    %c0_13 = arith.constant 0 : index
    %43 = vector.load %arg4[%c0_11, %c0_12, %c0_13] : memref<5x40x16xf32, #tpu.memory_space<vmem>>, vector<1x40x16xf32>
    %44 = vector.shape_cast %43 : vector<1x40x16xf32> to vector<40x16xf32>
    %cst_14 = arith.constant dense<0.000000e+00> : vector<256x16xf32>
    %45 = tpu.matmul %42, %44, %cst_14 {dimension_numbers = #tpu.dot_dimension_numbers<[1], [0], [0], [1], [0, 0, 1, 1], [], []>} : vector<256x40xf32>, vector<40x16xf32>, vector<256x16xf32> -> vector<256x16xf32>
    %46 = vector.extract_strided_slice %31 {offsets = [0, 1, 0, 0], sizes = [1, 16, 16, 8], strides = [1, 1, 1, 1]} : vector<1x20x20x8xf32> to vector<1x16x16x8xf32>
    %47 = vector.shape_cast %46 : vector<1x16x16x8xf32> to vector<256x8xf32>
    %48 = vector.extract_strided_slice %31 {offsets = [0, 1, 1, 0], sizes = [1, 16, 16, 8], strides = [1, 1, 1, 1]} : vector<1x20x20x8xf32> to vector<1x16x16x8xf32>
    %49 = vector.shape_cast %48 : vector<1x16x16x8xf32> to vector<256x8xf32>
    %50 = vector.extract_strided_slice %31 {offsets = [0, 1, 2, 0], sizes = [1, 16, 16, 8], strides = [1, 1, 1, 1]} : vector<1x20x20x8xf32> to vector<1x16x16x8xf32>
    %51 = vector.shape_cast %50 : vector<1x16x16x8xf32> to vector<256x8xf32>
    %52 = vector.extract_strided_slice %31 {offsets = [0, 1, 3, 0], sizes = [1, 16, 16, 8], strides = [1, 1, 1, 1]} : vector<1x20x20x8xf32> to vector<1x16x16x8xf32>
    %53 = vector.shape_cast %52 : vector<1x16x16x8xf32> to vector<256x8xf32>
    %54 = vector.extract_strided_slice %31 {offsets = [0, 1, 4, 0], sizes = [1, 16, 16, 8], strides = [1, 1, 1, 1]} : vector<1x20x20x8xf32> to vector<1x16x16x8xf32>
    %55 = vector.shape_cast %54 : vector<1x16x16x8xf32> to vector<256x8xf32>
    %56 = tpu.concatenate %47, %49, %51, %53, %55 in 1 : vector<256x8xf32>, vector<256x8xf32>, vector<256x8xf32>, vector<256x8xf32>, vector<256x8xf32> -> vector<256x40xf32>
    %c1 = arith.constant 1 : index
    %c0_15 = arith.constant 0 : index
    %c0_16 = arith.constant 0 : index
    %57 = vector.load %arg4[%c1, %c0_15, %c0_16] : memref<5x40x16xf32, #tpu.memory_space<vmem>>, vector<1x40x16xf32>
    %58 = vector.shape_cast %57 : vector<1x40x16xf32> to vector<40x16xf32>
    %cst_17 = arith.constant dense<0.000000e+00> : vector<256x16xf32>
    %59 = tpu.matmul %56, %58, %cst_17 {dimension_numbers = #tpu.dot_dimension_numbers<[1], [0], [0], [1], [0, 0, 1, 1], [], []>} : vector<256x40xf32>, vector<40x16xf32>, vector<256x16xf32> -> vector<256x16xf32>
    %60 = arith.addf %45, %59 : vector<256x16xf32>
    %61 = vector.extract_strided_slice %31 {offsets = [0, 2, 0, 0], sizes = [1, 16, 16, 8], strides = [1, 1, 1, 1]} : vector<1x20x20x8xf32> to vector<1x16x16x8xf32>
    %62 = vector.shape_cast %61 : vector<1x16x16x8xf32> to vector<256x8xf32>
    %63 = vector.extract_strided_slice %31 {offsets = [0, 2, 1, 0], sizes = [1, 16, 16, 8], strides = [1, 1, 1, 1]} : vector<1x20x20x8xf32> to vector<1x16x16x8xf32>
    %64 = vector.shape_cast %63 : vector<1x16x16x8xf32> to vector<256x8xf32>
    %65 = vector.extract_strided_slice %31 {offsets = [0, 2, 2, 0], sizes = [1, 16, 16, 8], strides = [1, 1, 1, 1]} : vector<1x20x20x8xf32> to vector<1x16x16x8xf32>
    %66 = vector.shape_cast %65 : vector<1x16x16x8xf32> to vector<256x8xf32>
    %67 = vector.extract_strided_slice %31 {offsets = [0, 2, 3, 0], sizes = [1, 16, 16, 8], strides = [1, 1, 1, 1]} : vector<1x20x20x8xf32> to vector<1x16x16x8xf32>
    %68 = vector.shape_cast %67 : vector<1x16x16x8xf32> to vector<256x8xf32>
    %69 = vector.extract_strided_slice %31 {offsets = [0, 2, 4, 0], sizes = [1, 16, 16, 8], strides = [1, 1, 1, 1]} : vector<1x20x20x8xf32> to vector<1x16x16x8xf32>
    %70 = vector.shape_cast %69 : vector<1x16x16x8xf32> to vector<256x8xf32>
    %71 = tpu.concatenate %62, %64, %66, %68, %70 in 1 : vector<256x8xf32>, vector<256x8xf32>, vector<256x8xf32>, vector<256x8xf32>, vector<256x8xf32> -> vector<256x40xf32>
    %c2 = arith.constant 2 : index
    %c0_18 = arith.constant 0 : index
    %c0_19 = arith.constant 0 : index
    %72 = vector.load %arg4[%c2, %c0_18, %c0_19] : memref<5x40x16xf32, #tpu.memory_space<vmem>>, vector<1x40x16xf32>
    %73 = vector.shape_cast %72 : vector<1x40x16xf32> to vector<40x16xf32>
    %cst_20 = arith.constant dense<0.000000e+00> : vector<256x16xf32>
    %74 = tpu.matmul %71, %73, %cst_20 {dimension_numbers = #tpu.dot_dimension_numbers<[1], [0], [0], [1], [0, 0, 1, 1], [], []>} : vector<256x40xf32>, vector<40x16xf32>, vector<256x16xf32> -> vector<256x16xf32>
    %75 = arith.addf %60, %74 : vector<256x16xf32>
    %76 = vector.extract_strided_slice %31 {offsets = [0, 3, 0, 0], sizes = [1, 16, 16, 8], strides = [1, 1, 1, 1]} : vector<1x20x20x8xf32> to vector<1x16x16x8xf32>
    %77 = vector.shape_cast %76 : vector<1x16x16x8xf32> to vector<256x8xf32>
    %78 = vector.extract_strided_slice %31 {offsets = [0, 3, 1, 0], sizes = [1, 16, 16, 8], strides = [1, 1, 1, 1]} : vector<1x20x20x8xf32> to vector<1x16x16x8xf32>
    %79 = vector.shape_cast %78 : vector<1x16x16x8xf32> to vector<256x8xf32>
    %80 = vector.extract_strided_slice %31 {offsets = [0, 3, 2, 0], sizes = [1, 16, 16, 8], strides = [1, 1, 1, 1]} : vector<1x20x20x8xf32> to vector<1x16x16x8xf32>
    %81 = vector.shape_cast %80 : vector<1x16x16x8xf32> to vector<256x8xf32>
    %82 = vector.extract_strided_slice %31 {offsets = [0, 3, 3, 0], sizes = [1, 16, 16, 8], strides = [1, 1, 1, 1]} : vector<1x20x20x8xf32> to vector<1x16x16x8xf32>
    %83 = vector.shape_cast %82 : vector<1x16x16x8xf32> to vector<256x8xf32>
    %84 = vector.extract_strided_slice %31 {offsets = [0, 3, 4, 0], sizes = [1, 16, 16, 8], strides = [1, 1, 1, 1]} : vector<1x20x20x8xf32> to vector<1x16x16x8xf32>
    %85 = vector.shape_cast %84 : vector<1x16x16x8xf32> to vector<256x8xf32>
    %86 = tpu.concatenate %77, %79, %81, %83, %85 in 1 : vector<256x8xf32>, vector<256x8xf32>, vector<256x8xf32>, vector<256x8xf32>, vector<256x8xf32> -> vector<256x40xf32>
    %c3 = arith.constant 3 : index
    %c0_21 = arith.constant 0 : index
    %c0_22 = arith.constant 0 : index
    %87 = vector.load %arg4[%c3, %c0_21, %c0_22] : memref<5x40x16xf32, #tpu.memory_space<vmem>>, vector<1x40x16xf32>
    %88 = vector.shape_cast %87 : vector<1x40x16xf32> to vector<40x16xf32>
    %cst_23 = arith.constant dense<0.000000e+00> : vector<256x16xf32>
    %89 = tpu.matmul %86, %88, %cst_23 {dimension_numbers = #tpu.dot_dimension_numbers<[1], [0], [0], [1], [0, 0, 1, 1], [], []>} : vector<256x40xf32>, vector<40x16xf32>, vector<256x16xf32> -> vector<256x16xf32>
    %90 = arith.addf %75, %89 : vector<256x16xf32>
    %91 = vector.extract_strided_slice %31 {offsets = [0, 4, 0, 0], sizes = [1, 16, 16, 8], strides = [1, 1, 1, 1]} : vector<1x20x20x8xf32> to vector<1x16x16x8xf32>
    %92 = vector.shape_cast %91 : vector<1x16x16x8xf32> to vector<256x8xf32>
    %93 = vector.extract_strided_slice %31 {offsets = [0, 4, 1, 0], sizes = [1, 16, 16, 8], strides = [1, 1, 1, 1]} : vector<1x20x20x8xf32> to vector<1x16x16x8xf32>
    %94 = vector.shape_cast %93 : vector<1x16x16x8xf32> to vector<256x8xf32>
    %95 = vector.extract_strided_slice %31 {offsets = [0, 4, 2, 0], sizes = [1, 16, 16, 8], strides = [1, 1, 1, 1]} : vector<1x20x20x8xf32> to vector<1x16x16x8xf32>
    %96 = vector.shape_cast %95 : vector<1x16x16x8xf32> to vector<256x8xf32>
    %97 = vector.extract_strided_slice %31 {offsets = [0, 4, 3, 0], sizes = [1, 16, 16, 8], strides = [1, 1, 1, 1]} : vector<1x20x20x8xf32> to vector<1x16x16x8xf32>
    %98 = vector.shape_cast %97 : vector<1x16x16x8xf32> to vector<256x8xf32>
    %99 = vector.extract_strided_slice %31 {offsets = [0, 4, 4, 0], sizes = [1, 16, 16, 8], strides = [1, 1, 1, 1]} : vector<1x20x20x8xf32> to vector<1x16x16x8xf32>
    %100 = vector.shape_cast %99 : vector<1x16x16x8xf32> to vector<256x8xf32>
    %101 = tpu.concatenate %92, %94, %96, %98, %100 in 1 : vector<256x8xf32>, vector<256x8xf32>, vector<256x8xf32>, vector<256x8xf32>, vector<256x8xf32> -> vector<256x40xf32>
    %c4 = arith.constant 4 : index
    %c0_24 = arith.constant 0 : index
    %c0_25 = arith.constant 0 : index
    %102 = vector.load %arg4[%c4, %c0_24, %c0_25] : memref<5x40x16xf32, #tpu.memory_space<vmem>>, vector<1x40x16xf32>
    %103 = vector.shape_cast %102 : vector<1x40x16xf32> to vector<40x16xf32>
    %cst_26 = arith.constant dense<0.000000e+00> : vector<256x16xf32>
    %104 = tpu.matmul %101, %103, %cst_26 {dimension_numbers = #tpu.dot_dimension_numbers<[1], [0], [0], [1], [0, 0, 1, 1], [], []>} : vector<256x40xf32>, vector<40x16xf32>, vector<256x16xf32> -> vector<256x16xf32>
    %105 = arith.addf %90, %104 : vector<256x16xf32>
    %106 = tpu.concatenate %23, %105, %26 in 1 : vector<256x8xf32>, vector<256x16xf32>, vector<256x104xf32> -> vector<256x128xf32>
    %107 = arith.addf %106, %27 : vector<256x128xf32>
    %108 = vector.shape_cast %107 : vector<256x128xf32> to vector<1x16x16x128xf32>
    %c0_27 = arith.constant 0 : index
    %c0_28 = arith.constant 0 : index
    %c0_29 = arith.constant 0 : index
    %c0_30 = arith.constant 0 : index
    %109 = vector.load %arg5[%c0_27, %c0_28, %c0_29, %c0_30] : memref<1x16x16x128xf32, #tpu.memory_space<vmem>>, vector<1x16x16x128xf32>
    tpu.vector_store %arg5[%c0_27, %c0_28, %c0_29, %c0_30], %108 {strides = array<i32>} : memref<1x16x16x128xf32, #tpu.memory_space<vmem>>, vector<1x16x16x128xf32>,
    return
  }
  func.func @transform_0(%arg0: i32) -> (i32, i32, i32, i32) {
    %c0_i32 = arith.constant 0 : i32
    %c0_i32_0 = arith.constant 0 : i32
    %c0_i32_1 = arith.constant 0 : i32
    %c0_i32_2 = arith.constant 0 : i32
    return %arg0, %c0_i32, %c0_i32_0, %c0_i32_1 : i32, i32, i32, i32
  }
  func.func @transform_1(%arg0: i32) -> (i32, i32) {
    %c0_i32 = arith.constant 0 : i32
    %c0_i32_0 = arith.constant 0 : i32
    %c0_i32_1 = arith.constant 0 : i32
    return %c0_i32, %c0_i32_0 : i32, i32
  }
  func.func @transform_2(%arg0: i32) -> (i32, i32) {
    %c0_i32 = arith.constant 0 : i32
    %c0_i32_0 = arith.constant 0 : i32
    %c0_i32_1 = arith.constant 0 : i32
    return %c0_i32, %c0_i32_0 : i32, i32
  }
  func.func @transform_3(%arg0: i32) -> (i32, i32, i32) {
    %c0_i32 = arith.constant 0 : i32
    %c0_i32_0 = arith.constant 0 : i32
    %c0_i32_1 = arith.constant 0 : i32
    %c0_i32_2 = arith.constant 0 : i32
    return %c0_i32, %c0_i32_0, %c0_i32_1 : i32, i32, i32
  }
  func.func @transform_4(%arg0: i32) -> (i32, i32, i32, i32) {
    %c0_i32 = arith.constant 0 : i32
    %c0_i32_0 = arith.constant 0 : i32
    %c0_i32_1 = arith.constant 0 : i32
    %c0_i32_2 = arith.constant 0 : i32
    return %arg0, %c0_i32, %c0_i32_0, %c0_i32_1 : i32, i32, i32, i32
  }
}

</mosaic_0001>

<llo_original>
// kernel: tpu_custom_call.1
$region0: #{tpu_custom_call.1}
  #allocation0 [shape = 'u32[]', space=smem, size = 0x4, offset = 0x4, fixed_abs, tag = 'smem constant byte address 0x4 - core index']
  #allocation1 [shape = 'u32[72,128]{1,0:T(1,128)}', space=vmem, size = 0x9000, scoped, tag = 'internal scratch']
  %s0 = inlined_call_operand.vmem [shape: f32[2,16,16,4], index: 0, kind: input, shape index: {}]
  %s1 = inlined_call_operand.vmem [shape: f32[8,248], index: 1, kind: input, shape index: {}]
  %s2 = inlined_call_operand.vmem [shape: f32[1,248], index: 2, kind: input, shape index: {}]
  %s3 = inlined_call_operand.vmem [shape: f32[5,40,16], index: 3, kind: input, shape index: {}]
  %s4 = inlined_call_operand.hbm [shape: f32[2,16,16,128], index: 4, kind: output, shape index: {}]
  %s5 = sld [smem:[#allocation0]]
  $region49: #{tpu_custom_call.1} parent=0
    _
  %s7 = ssub.s32 1, %s5
  %s8 = scalar_select 0, %s7, %s5
  $region1: #{tpu_custom_call.1} parent=0
    #allocation2 [shape = 'u8[262144]{0}', space=vmem, size = 0x40000, scoped, tag = 'output window, operand 0']
    #allocation3 [shape = 's32[2]{0}', space=sflag, size = 0x8, scoped, tag = 'scoped memory for tpu_custom_call.1']
    %9 = vsyncpa [#allocation3], 0
    %s10 = scalar_lea.sflag [#allocation3], 1
    %11 = vsyncpa %s10, 0
    loop: start=0, step=1, limit=4
    $region2: #{tpu_custom_call.1} parent=1 // loop_pre_header
      _
    $region3: #{tpu_custom_call.1} parent=1 // loop_header
      %s13 = sphi 0, %s17
      %p14 = scmp.ge.s32.totalorder %s13, 4
      %s23 = sphi 0, %s25
      %s26 = sphi 0, %s23
      %s27 = sphi 0, %s26
      %s43 = sphi 0, %s27
      %s47 = sphi 0, %s47
      %s49 = sphi 0, %s47
      %s50 = sphi 0, %s49
      %s64 = sphi 0, %s50
      %s68 = sphi 0, %s68
      %s70 = sphi 0, %s68
      %s71 = sphi 0, %s70
      %s85 = sphi 0, %s71
      %s89 = sphi 0, %s89
      %s91 = sphi 0, %s89
      %s92 = sphi 0, %s91
      %s106 = sphi 0, %s92
      %s112 = sphi 0, %s114
      %s115 = sphi 0, %s112
      %s116 = sphi 0, %s115
      %s132 = sphi 0, %s116
    $region4: #{tpu_custom_call.1} parent=1 // loop_header_branch
      %16 = sbr.rel (%p14) target = $region8
    $region5: #{tpu_custom_call.1} parent=1 // loop_body
      %s18 = ssub.s32 %s13, 1
      %s19 = ssub.s32 %s13, 2
      %s20 = sadd.s32 %s13, 1
      %s21 = ssub.s32 %s13, %s20
      %p22 = scmp.eq.s32.totalorder %s21, 0
      %s24 = sadd.s32 %s23, 1
      %s25 = scalar_select %p22, %s23, %s24
      %p28 = pneg %p22
      %p29 = scmp.eq.s32.totalorder %s13, 1
      %p30 = por %p28, %p29
      %p31 = scmp.ne.s32.totalorder %s23, %s26
      %p32 = scmp.eq.s32.totalorder %s13, 0
      %p33 = por %p31, %p32
      %p34 = scmp.ne.s32.totalorder %s23, %s26
      %p35 = scmp.eq.s32.totalorder %s18, 1
      %p36 = por %p34, %p35
      %p37 = scmp.ne.s32.totalorder %s26, %s27
      %p38 = scmp.eq.s32.totalorder %s18, 0
      %p39 = por %p37, %p38
      %p40 = scmp.ne.s32.totalorder %s26, %s27
      %p41 = scmp.eq.s32.totalorder %s19, 1
      %p42 = por %p40, %p41
      %p44 = scmp.ne.s32.totalorder %s27, %s43
      %p45 = scmp.eq.s32.totalorder %s19, 0
      %p46 = por %p44, %p45
      %s48 = sadd.s32 %s47, 1
      %p51 = scmp.eq.s32.totalorder %s13, 1
      %p52 = scmp.ne.s32.totalorder %s47, %s49
      %p53 = scmp.eq.s32.totalorder %s13, 0
      %p54 = por %p52, %p53
      %p55 = scmp.ne.s32.totalorder %s47, %s49
      %p56 = scmp.eq.s32.totalorder %s18, 1
      %p57 = por %p55, %p56
      %p58 = scmp.ne.s32.totalorder %s49, %s50
      %p59 = scmp.eq.s32.totalorder %s18, 0
      %p60 = por %p58, %p59
      %p61 = scmp.ne.s32.totalorder %s49, %s50
      %p62 = scmp.eq.s32.totalorder %s19, 1
      %p63 = por %p61, %p62
      %p65 = scmp.ne.s32.totalorder %s50, %s64
      %p66 = scmp.eq.s32.totalorder %s19, 0
      %p67 = por %p65, %p66
      %s69 = sadd.s32 %s68, 1
      %p72 = scmp.eq.s32.totalorder %s13, 1
      %p73 = scmp.ne.s32.totalorder %s68, %s70
      %p74 = scmp.eq.s32.totalorder %s13, 0
      %p75 = por %p73, %p74
      %p76 = scmp.ne.s32.totalorder %s68, %s70
      %p77 = scmp.eq.s32.totalorder %s18, 1
      %p78 = por %p76, %p77
      %p79 = scmp.ne.s32.totalorder %s70, %s71
      %p80 = scmp.eq.s32.totalorder %s18, 0
      %p81 = por %p79, %p80
      %p82 = scmp.ne.s32.totalorder %s70, %s71
      %p83 = scmp.eq.s32.totalorder %s19, 1
      %p84 = por %p82, %p83
      %p86 = scmp.ne.s32.totalorder %s71, %s85
      %p87 = scmp.eq.s32.totalorder %s19, 0
      %p88 = por %p86, %p87
      %s90 = sadd.s32 %s89, 1
      %p93 = scmp.eq.s32.totalorder %s13, 1
      %p94 = scmp.ne.s32.totalorder %s89, %s91
      %p95 = scmp.eq.s32.totalorder %s13, 0
      %p96 = por %p94, %p95
      %p97 = scmp.ne.s32.totalorder %s89, %s91
      %p98 = scmp.eq.s32.totalorder %s18, 1
      %p99 = por %p97, %p98
      %p100 = scmp.ne.s32.totalorder %s91, %s92
      %p101 = scmp.eq.s32.totalorder %s18, 0
      %p102 = por %p100, %p101
      %p103 = scmp.ne.s32.totalorder %s91, %s92
      %p104 = scmp.eq.s32.totalorder %s19, 1
      %p105 = por %p103, %p104
      %p107 = scmp.ne.s32.totalorder %s92, %s106
      %p108 = scmp.eq.s32.totalorder %s19, 0
      %p109 = por %p107, %p108
      %s110 = ssub.s32 %s13, %s20
      %p111 = scmp.eq.s32.totalorder %s110, 0
      %s113 = sadd.s32 %s112, 1
      %s114 = scalar_select %p111, %s112, %s113
      %p117 = pneg %p111
      %p118 = scmp.eq.s32.totalorder %s13, 1
      %p119 = por %p117, %p118
      %p120 = scmp.ne.s32.totalorder %s112, %s115
      %p121 = scmp.eq.s32.totalorder %s13, 0
      %p122 = por %p120, %p121
      %p123 = scmp.ne.s32.totalorder %s112, %s115
      %p124 = scmp.eq.s32.totalorder %s18, 1
      %p125 = por %p123, %p124
      %p126 = scmp.ne.s32.totalorder %s115, %s116
      %p127 = scmp.eq.s32.totalorder %s18, 0
      %p128 = por %p126, %p127
      %p129 = scmp.ne.s32.totalorder %s115, %s116
      %p130 = scmp.eq.s32.totalorder %s19, 1
      %p131 = por %p129, %p130
      %p133 = scmp.ne.s32.totalorder %s116, %s132
      %p134 = scmp.eq.s32.totalorder %s19, 0
      %p135 = por %p133, %p134
      %p136 = scmp.le.s32.totalorder 1, %s13
      %p137 = scmp.lt.s32.totalorder %s13, 3
      %p138 = pnand %p136, %p137
      %p139 = pneg %p138
      // Predicated region
      $region9: #{tpu_custom_call.1} parent=5 // pred_check
        _
      $region10: #{tpu_custom_call.1} parent=5 // pred_check_branch
        %141 = sbr.rel (%p138) target = $region12
      $region11: #{tpu_custom_call.1} parent=5 // pred_region
        %s142 = ssub.s32 %s13, 1
        // Predicated region
        $region13: #{tpu_custom_call.1} parent=11 // pred_check
          %p143 = pneg %p60
        $region14: #{tpu_custom_call.1} parent=11 // pred_check_branch
          %145 = sbr.rel (%p143) target = $region16
        $region15: #{tpu_custom_call.1} parent=11 // pred_region
          _
        $region16: #{tpu_custom_call.1} parent=11 // pred_fallthru
          _
        // Predicated region
        $region17: #{tpu_custom_call.1} parent=11 // pred_check
          %p146 = pneg %p81
        $region18: #{tpu_custom_call.1} parent=11 // pred_check_branch
          %148 = sbr.rel (%p146) target = $region20
        $region19: #{tpu_custom_call.1} parent=11 // pred_region
          _
        $region20: #{tpu_custom_call.1} parent=11 // pred_fallthru
          _
        // Predicated region
        $region21: #{tpu_custom_call.1} parent=11 // pred_check
          %p149 = pneg %p102
        $region22: #{tpu_custom_call.1} parent=11 // pred_check_branch
          %151 = sbr.rel (%p149) target = $region24
        $region23: #{tpu_custom_call.1} parent=11 // pred_region
          _
        $region24: #{tpu_custom_call.1} parent=11 // pred_fallthru
          _
      $region12: #{tpu_custom_call.1} parent=5 // pred_fallthru
        _
      %p152 = scmp.lt.s32.totalorder %s13, 2
      // Predicated region
      $region25: #{tpu_custom_call.1} parent=5 // pred_check
        %p153 = pneg %p152
      $region26: #{tpu_custom_call.1} parent=5 // pred_check_branch
        %155 = sbr.rel (%p153) target = $region28
      $region27: #{tpu_custom_call.1} parent=5 // pred_region
        // Predicated region
        $region29: #{tpu_custom_call.1} parent=27 // pred_check
          %p156 = pneg %p33
        $region30: #{tpu_custom_call.1} parent=27 // pred_check_branch
          %158 = sbr.rel (%p156) target = $region32
        $region31: #{tpu_custom_call.1} parent=27 // pred_region
          %p159 = scmp.lt.s32.totalorder %s13, 1
          %s160 = scalar_select %p159, %s13, 1
          %s161 = smul.addr %s160, 32
          %s162 = smul.addr %s161, 8
          %s163 = scalar_lea.vmem %s0, %s162
        $region32: #{tpu_custom_call.1} parent=27 // pred_fallthru
          _
      $region28: #{tpu_custom_call.1} parent=5 // pred_fallthru
        _
      %p164 = scmp.le.s32.totalorder 1, %s13
      %p165 = scmp.lt.s32.totalorder %s13, 3
      %p166 = pnand %p164, %p165
      %p167 = pneg %p166
      // Predicated region
      $region33: #{tpu_custom_call.1} parent=5 // pred_check
        _
      $region34: #{tpu_custom_call.1} parent=5 // pred_check_branch
        %169 = sbr.rel (%p166) target = $region36
      $region35: #{tpu_custom_call.1} parent=5 // pred_region
        %s170 = ssub.s32 %s13, 1
        %p171 = scmp.lt.s32.totalorder %s18, 1
        %s172 = scalar_select %p171, %s18, 1
        %s173 = smul.addr %s172, 32
        %s174 = smul.addr %s173, 8
        %s175 = scalar_lea.vmem %s0, %s174
        %p176 = pneg %p39
        %p177 = pneg %p36
        %p178 = pneg %p60
        %p179 = pneg %p57
        %p180 = pneg %p81
        %p181 = pneg %p78
        %p182 = pneg %p102
        %p183 = pneg %p99
        %p184 = pneg %p128
        %p185 = pneg %p125
        %s186 = sand.u32 %s115, 1
        %s187 = scalar_lea.sflag [#allocation3], %s186
        %s188 = sand.u32 %s115, 1
        %s189 = smul.addr %s188, 256
        %s190 = scalar_lea.vmem [#allocation2], %s189
        %p191 = scmp.lt.s32.totalorder %s18, 1
        %s192 = scalar_select %p191, %s18, 1
        %s193 = smul.addr %s192, 32
        %s194 = smul.addr %s193, 8
        %s195 = scalar_lea.vmem %s0, %s194
        %v196 = vld [vmem:[%s195] sm:$0xff]
        %v197 = vld [vmem:[%s195 + $0x8] sm:$0xff]
        %v198 = vld [vmem:[%s195 + $0x10] sm:$0xff]
        %v199 = vld [vmem:[%s195 + $0x18] sm:$0xff]
        %v200 = vld [vmem:[%s195 + $0x20] sm:$0xff]
        %v201 = vld [vmem:[%s195 + $0x28] sm:$0xff]
        %v202 = vld [vmem:[%s195 + $0x30] sm:$0xff]
        %v203 = vld [vmem:[%s195 + $0x38] sm:$0xff]
        %v204 = vld [vmem:[%s195 + $0x40] sm:$0xff]
        %v205 = vld [vmem:[%s195 + $0x48] sm:$0xff]
        %v206 = vld [vmem:[%s195 + $0x50] sm:$0xff]
        %v207 = vld [vmem:[%s195 + $0x58] sm:$0xff]
        %v208 = vld [vmem:[%s195 + $0x60] sm:$0xff]
        %v209 = vld [vmem:[%s195 + $0x68] sm:$0xff]
        %v210 = vld [vmem:[%s195 + $0x70] sm:$0xff]
        %v211 = vld [vmem:[%s195 + $0x78] sm:$0xff]
        %v212 = vld [vmem:[%s195 + $0x80] sm:$0xff]
        %v213 = vld [vmem:[%s195 + $0x88] sm:$0xff]
        %v214 = vld [vmem:[%s195 + $0x90] sm:$0xff]
        %v215 = vld [vmem:[%s195 + $0x98] sm:$0xff]
        %v216 = vld [vmem:[%s195 + $0xa0] sm:$0xff]
        %v217 = vld [vmem:[%s195 + $0xa8] sm:$0xff]
        %v218 = vld [vmem:[%s195 + $0xb0] sm:$0xff]
        %v219 = vld [vmem:[%s195 + $0xb8] sm:$0xff]
        %v220 = vld [vmem:[%s195 + $0xc0] sm:$0xff]
        %v221 = vld [vmem:[%s195 + $0xc8] sm:$0xff]
        %v222 = vld [vmem:[%s195 + $0xd0] sm:$0xff]
        %v223 = vld [vmem:[%s195 + $0xd8] sm:$0xff]
        %v224 = vld [vmem:[%s195 + $0xe0] sm:$0xff]
        %v225 = vld [vmem:[%s195 + $0xe8] sm:$0xff]
        %v226 = vld [vmem:[%s195 + $0xf0] sm:$0xff]
        %v227 = vld [vmem:[%s195 + $0xf8] sm:$0xff]
        %vm260 = vcmask 1040384
        %v261 = vrot.slane %v196, 7
        %v262 = vrot.slane %v197, 7
        %v263 = vsel %vm260, %v261, %v262
        %v264 = vrot.slane %v198, 7
        %v265 = vrot.slane %v199, 7
        %v266 = vsel %vm260, %v264, %v265
        %v267 = vrot.slane %v200, 7
        %v268 = vrot.slane %v201, 7
        %v269 = vsel %vm260, %v267, %v268
        %v270 = vrot.slane %v202, 7
        %v271 = vrot.slane %v203, 7
        %v272 = vsel %vm260, %v270, %v271
        %v273 = vrot.slane %v204, 7
        %v274 = vrot.slane %v205, 7
        %v275 = vsel %vm260, %v273, %v274
        %v276 = vrot.slane %v206, 7
        %v277 = vrot.slane %v207, 7
        %v278 = vsel %vm260, %v276, %v277
        %v279 = vrot.slane %v208, 7
        %v280 = vrot.slane %v209, 7
        %v281 = vsel %vm260, %v279, %v280
        %v282 = vrot.slane %v210, 7
        %v283 = vrot.slane %v211, 7
        %v284 = vsel %vm260, %v282, %v283
        %v285 = vrot.slane %v212, 7
        %v286 = vrot.slane %v213, 7
        %v287 = vsel %vm260, %v285, %v286
        %v288 = vrot.slane %v214, 7
        %v289 = vrot.slane %v215, 7
        %v290 = vsel %vm260, %v288, %v289
        %v291 = vrot.slane %v216, 7
        %v292 = vrot.slane %v217, 7
        %v293 = vsel %vm260, %v291, %v292
        %v294 = vrot.slane %v218, 7
        %v295 = vrot.slane %v219, 7
        %v296 = vsel %vm260, %v294, %v295
        %v297 = vrot.slane %v220, 7
        %v298 = vrot.slane %v221, 7
        %v299 = vsel %vm260, %v297, %v298
        %v300 = vrot.slane %v222, 7
        %v301 = vrot.slane %v223, 7
        %v302 = vsel %vm260, %v300, %v301
        %v303 = vrot.slane %v224, 7
        %v304 = vrot.slane %v225, 7
        %v305 = vsel %vm260, %v303, %v304
        %v306 = vrot.slane %v226, 7
        %v307 = vrot.slane %v227, 7
        %v308 = vsel %vm260, %v306, %v307
        %v357 = vsel %vm260, -inf, %v261
        %v358 = vsel %vm260, -inf, %v264
        %v359 = vsel %vm260, -inf, %v267
        %v360 = vsel %vm260, -inf, %v270
        %v361 = vsel %vm260, -inf, %v273
        %v362 = vsel %vm260, -inf, %v276
        %v363 = vsel %vm260, -inf, %v279
        %v364 = vsel %vm260, -inf, %v282
        %v365 = vsel %vm260, -inf, %v285
        %v366 = vsel %vm260, -inf, %v288
        %v367 = vsel %vm260, -inf, %v291
        %v368 = vsel %vm260, -inf, %v294
        %v369 = vsel %vm260, -inf, %v297
        %v370 = vsel %vm260, -inf, %v300
        %v371 = vsel %vm260, -inf, %v303
        %v372 = vsel %vm260, -inf, %v306
        %v373 = vsel %vm260, %v262, -inf
        %v374 = vsel %vm260, %v265, -inf
        %v375 = vsel %vm260, %v268, -inf
        %v376 = vsel %vm260, %v271, -inf
        %v377 = vsel %vm260, %v274, -inf
        %v378 = vsel %vm260, %v277, -inf
        %v379 = vsel %vm260, %v280, -inf
        %v380 = vsel %vm260, %v283, -inf
        %v381 = vsel %vm260, %v286, -inf
        %v382 = vsel %vm260, %v289, -inf
        %v383 = vsel %vm260, %v292, -inf
        %v384 = vsel %vm260, %v295, -inf
        %v385 = vsel %vm260, %v298, -inf
        %v386 = vsel %vm260, %v301, -inf
        %v387 = vsel %vm260, %v304, -inf
        %v388 = vsel %vm260, %v307, -inf
        %vm421 = vcmask 1046528
        %v422 = vrot.slane %v357, 1
        %v423 = vrot.slane %v263, 1
        %v424 = vsel %vm421, %v422, %v423
        %v425 = vrot.slane %v373, 1
        %v426 = vsel %vm421, %v423, %v425
        %v427 = vrot.slane %v358, 1
        %v428 = vrot.slane %v266, 1
        %v429 = vsel %vm421, %v427, %v428
        %v430 = vrot.slane %v374, 1
        %v431 = vsel %vm421, %v428, %v430
        %v432 = vrot.slane %v359, 1
        %v433 = vrot.slane %v269, 1
        %v434 = vsel %vm421, %v432, %v433
        %v435 = vrot.slane %v375, 1
        %v436 = vsel %vm421, %v433, %v435
        %v437 = vrot.slane %v360, 1
        %v438 = vrot.slane %v272, 1
        %v439 = vsel %vm421, %v437, %v438
        %v440 = vrot.slane %v376, 1
        %v441 = vsel %vm421, %v438, %v440
        %v442 = vrot.slane %v361, 1
        %v443 = vrot.slane %v275, 1
        %v444 = vsel %vm421, %v442, %v443
        %v445 = vrot.slane %v377, 1
        %v446 = vsel %vm421, %v443, %v445
        %v447 = vrot.slane %v362, 1
        %v448 = vrot.slane %v278, 1
        %v449 = vsel %vm421, %v447, %v448
        %v450 = vrot.slane %v378, 1
        %v451 = vsel %vm421, %v448, %v450
        %v452 = vrot.slane %v363, 1
        %v453 = vrot.slane %v281, 1
        %v454 = vsel %vm421, %v452, %v453
        %v455 = vrot.slane %v379, 1
        %v456 = vsel %vm421, %v453, %v455
        %v457 = vrot.slane %v364, 1
        %v458 = vrot.slane %v284, 1
        %v459 = vsel %vm421, %v457, %v458
        %v460 = vrot.slane %v380, 1
        %v461 = vsel %vm421, %v458, %v460
        %v462 = vrot.slane %v365, 1
        %v463 = vrot.slane %v287, 1
        %v464 = vsel %vm421, %v462, %v463
        %v465 = vrot.slane %v381, 1
        %v466 = vsel %vm421, %v463, %v465
        %v467 = vrot.slane %v366, 1
        %v468 = vrot.slane %v290, 1
        %v469 = vsel %vm421, %v467, %v468
        %v470 = vrot.slane %v382, 1
        %v471 = vsel %vm421, %v468, %v470
        %v472 = vrot.slane %v367, 1
        %v473 = vrot.slane %v293, 1
        %v474 = vsel %vm421, %v472, %v473
        %v475 = vrot.slane %v383, 1
        %v476 = vsel %vm421, %v473, %v475
        %v477 = vrot.slane %v368, 1
        %v478 = vrot.slane %v296, 1
        %v479 = vsel %vm421, %v477, %v478
        %v480 = vrot.slane %v384, 1
        %v481 = vsel %vm421, %v478, %v480
        %v482 = vrot.slane %v369, 1
        %v483 = vrot.slane %v299, 1
        %v484 = vsel %vm421, %v482, %v483
        %v485 = vrot.slane %v385, 1
        %v486 = vsel %vm421, %v483, %v485
        %v487 = vrot.slane %v370, 1
        %v488 = vrot.slane %v302, 1
        %v489 = vsel %vm421, %v487, %v488
        %v490 = vrot.slane %v386, 1
        %v491 = vsel %vm421, %v488, %v490
        %v492 = vrot.slane %v371, 1
        %v493 = vrot.slane %v305, 1
        %v494 = vsel %vm421, %v492, %v493
        %v495 = vrot.slane %v387, 1
        %v496 = vsel %vm421, %v493, %v495
        %v497 = vrot.slane %v372, 1
        %v498 = vrot.slane %v308, 1
        %v499 = vsel %vm421, %v497, %v498
        %v500 = vrot.slane %v388, 1
        %v501 = vsel %vm421, %v498, %v500
        %v534 = vmax.f32 %v357, %v424
        %v535 = vmax.f32 %v263, %v426
        %v536 = vmax.f32 %v358, %v429
        %v537 = vmax.f32 %v266, %v431
        %v538 = vmax.f32 %v359, %v434
        %v539 = vmax.f32 %v269, %v436
        %v540 = vmax.f32 %v360, %v439
        %v541 = vmax.f32 %v272, %v441
        %v542 = vmax.f32 %v361, %v444
        %v543 = vmax.f32 %v275, %v446
        %v544 = vmax.f32 %v362, %v449
        %v545 = vmax.f32 %v278, %v451
        %v546 = vmax.f32 %v363, %v454
        %v547 = vmax.f32 %v281, %v456
        %v548 = vmax.f32 %v364, %v459
        %v549 = vmax.f32 %v284, %v461
        %v550 = vmax.f32 %v365, %v464
        %v551 = vmax.f32 %v287, %v466
        %v552 = vmax.f32 %v366, %v469
        %v553 = vmax.f32 %v290, %v471
        %v554 = vmax.f32 %v367, %v474
        %v555 = vmax.f32 %v293, %v476
        %v556 = vmax.f32 %v368, %v479
        %v557 = vmax.f32 %v296, %v481
        %v558 = vmax.f32 %v369, %v484
        %v559 = vmax.f32 %v299, %v486
        %v560 = vmax.f32 %v370, %v489
        %v561 = vmax.f32 %v302, %v491
        %v562 = vmax.f32 %v371, %v494
        %v563 = vmax.f32 %v305, %v496
        %v564 = vmax.f32 %v372, %v499
        %v565 = vmax.f32 %v308, %v501
        %vm566 = vcmask 1045504
        %v567 = vrot.slane %v357, 2
        %v568 = vrot.slane %v263, 2
        %v569 = vsel %vm566, %v567, %v568
        %v570 = vrot.slane %v373, 2
        %v571 = vsel %vm566, %v568, %v570
        %v572 = vrot.slane %v358, 2
        %v573 = vrot.slane %v266, 2
        %v574 = vsel %vm566, %v572, %v573
        %v575 = vrot.slane %v374, 2
        %v576 = vsel %vm566, %v573, %v575
        %v577 = vrot.slane %v359, 2
        %v578 = vrot.slane %v269, 2
        %v579 = vsel %vm566, %v577, %v578
        %v580 = vrot.slane %v375, 2
        %v581 = vsel %vm566, %v578, %v580
        %v582 = vrot.slane %v360, 2
        %v583 = vrot.slane %v272, 2
        %v584 = vsel %vm566, %v582, %v583
        %v585 = vrot.slane %v376, 2
        %v586 = vsel %vm566, %v583, %v585
        %v587 = vrot.slane %v361, 2
        %v588 = vrot.slane %v275, 2
        %v589 = vsel %vm566, %v587, %v588
        %v590 = vrot.slane %v377, 2
        %v591 = vsel %vm566, %v588, %v590
        %v592 = vrot.slane %v362, 2
        %v593 = vrot.slane %v278, 2
        %v594 = vsel %vm566, %v592, %v593
        %v595 = vrot.slane %v378, 2
        %v596 = vsel %vm566, %v593, %v595
        %v597 = vrot.slane %v363, 2
        %v598 = vrot.slane %v281, 2
        %v599 = vsel %vm566, %v597, %v598
        %v600 = vrot.slane %v379, 2
        %v601 = vsel %vm566, %v598, %v600
        %v602 = vrot.slane %v364, 2
        %v603 = vrot.slane %v284, 2
        %v604 = vsel %vm566, %v602, %v603
        %v605 = vrot.slane %v380, 2
        %v606 = vsel %vm566, %v603, %v605
        %v607 = vrot.slane %v365, 2
        %v608 = vrot.slane %v287, 2
        %v609 = vsel %vm566, %v607, %v608
        %v610 = vrot.slane %v381, 2
        %v611 = vsel %vm566, %v608, %v610
        %v612 = vrot.slane %v366, 2
        %v613 = vrot.slane %v290, 2
        %v614 = vsel %vm566, %v612, %v613
        %v615 = vrot.slane %v382, 2
        %v616 = vsel %vm566, %v613, %v615
        %v617 = vrot.slane %v367, 2
        %v618 = vrot.slane %v293, 2
        %v619 = vsel %vm566, %v617, %v618
        %v620 = vrot.slane %v383, 2
        %v621 = vsel %vm566, %v618, %v620
        %v622 = vrot.slane %v368, 2
        %v623 = vrot.slane %v296, 2
        %v624 = vsel %vm566, %v622, %v623
        %v625 = vrot.slane %v384, 2
        %v626 = vsel %vm566, %v623, %v625
        %v627 = vrot.slane %v369, 2
        %v628 = vrot.slane %v299, 2
        %v629 = vsel %vm566, %v627, %v628
        %v630 = vrot.slane %v385, 2
        %v631 = vsel %vm566, %v628, %v630
        %v632 = vrot.slane %v370, 2
        %v633 = vrot.slane %v302, 2
        %v634 = vsel %vm566, %v632, %v633
        %v635 = vrot.slane %v386, 2
        %v636 = vsel %vm566, %v633, %v635
        %v637 = vrot.slane %v371, 2
        %v638 = vrot.slane %v305, 2
        %v639 = vsel %vm566, %v637, %v638
        %v640 = vrot.slane %v387, 2
        %v641 = vsel %vm566, %v638, %v640
        %v642 = vrot.slane %v372, 2
        %v643 = vrot.slane %v308, 2
        %v644 = vsel %vm566, %v642, %v643
        %v645 = vrot.slane %v388, 2
        %v646 = vsel %vm566, %v643, %v645
        %v679 = vmax.f32 %v534, %v569
        %v680 = vmax.f32 %v535, %v571
        %v681 = vmax.f32 %v536, %v574
        %v682 = vmax.f32 %v537, %v576
        %v683 = vmax.f32 %v538, %v579
        %v684 = vmax.f32 %v539, %v581
        %v685 = vmax.f32 %v540, %v584
        %v686 = vmax.f32 %v541, %v586
        %v687 = vmax.f32 %v542, %v589
        %v688 = vmax.f32 %v543, %v591
        %v689 = vmax.f32 %v544, %v594
        %v690 = vmax.f32 %v545, %v596
        %v691 = vmax.f32 %v546, %v599
        %v692 = vmax.f32 %v547, %v601
        %v693 = vmax.f32 %v548, %v604
        %v694 = vmax.f32 %v549, %v606
        %v695 = vmax.f32 %v550, %v609
        %v696 = vmax.f32 %v551, %v611
        %v697 = vmax.f32 %v552, %v614
        %v698 = vmax.f32 %v553, %v616
        %v699 = vmax.f32 %v554, %v619
        %v700 = vmax.f32 %v555, %v621
        %v701 = vmax.f32 %v556, %v624
        %v702 = vmax.f32 %v557, %v626
        %v703 = vmax.f32 %v558, %v629
        %v704 = vmax.f32 %v559, %v631
        %v705 = vmax.f32 %v560, %v634
        %v706 = vmax.f32 %v561, %v636
        %v707 = vmax.f32 %v562, %v639
        %v708 = vmax.f32 %v563, %v641
        %v709 = vmax.f32 %v564, %v644
        %v710 = vmax.f32 %v565, %v646
        %v711 = vmax.f32 %v679, %v681
        %v712 = vmax.f32 %v680, %v682
        %v713 = vmax.f32 %v681, %v683
        %v714 = vmax.f32 %v682, %v684
        %v715 = vmax.f32 %v683, %v685
        %v716 = vmax.f32 %v684, %v686
        %v717 = vmax.f32 %v685, %v687
        %v718 = vmax.f32 %v686, %v688
        %v719 = vmax.f32 %v687, %v689
        %v720 = vmax.f32 %v688, %v690
        %v721 = vmax.f32 %v689, %v691
        %v722 = vmax.f32 %v690, %v692
        %v723 = vmax.f32 %v691, %v693
        %v724 = vmax.f32 %v692, %v694
        %v725 = vmax.f32 %v693, %v695
        %v726 = vmax.f32 %v694, %v696
        %v727 = vmax.f32 %v695, %v697
        %v728 = vmax.f32 %v696, %v698
        %v729 = vmax.f32 %v697, %v699
        %v730 = vmax.f32 %v698, %v700
        %v731 = vmax.f32 %v699, %v701
        %v732 = vmax.f32 %v700, %v702
        %v733 = vmax.f32 %v701, %v703
        %v734 = vmax.f32 %v702, %v704
        %v735 = vmax.f32 %v703, %v705
        %v736 = vmax.f32 %v704, %v706
        %v737 = vmax.f32 %v705, %v707
        %v738 = vmax.f32 %v706, %v708
        %v739 = vmax.f32 %v707, %v709
        %v740 = vmax.f32 %v708, %v710
        %v741 = vmax.f32 %v711, %v683
        %v742 = vmax.f32 %v712, %v684
        %v743 = vmax.f32 %v713, %v685
        %v744 = vmax.f32 %v714, %v686
        %v745 = vmax.f32 %v715, %v687
        %v746 = vmax.f32 %v716, %v688
        %v747 = vmax.f32 %v717, %v689
        %v748 = vmax.f32 %v718, %v690
        %v749 = vmax.f32 %v719, %v691
        %v750 = vmax.f32 %v720, %v692
        %v751 = vmax.f32 %v721, %v693
        %v752 = vmax.f32 %v722, %v694
        %v753 = vmax.f32 %v723, %v695
        %v754 = vmax.f32 %v724, %v696
        %v755 = vmax.f32 %v725, %v697
        %v756 = vmax.f32 %v726, %v698
        %v757 = vmax.f32 %v727, %v699
        %v758 = vmax.f32 %v728, %v700
        %v759 = vmax.f32 %v729, %v701
        %v760 = vmax.f32 %v730, %v702
        %v761 = vmax.f32 %v731, %v703
        %v762 = vmax.f32 %v732, %v704
        %v763 = vmax.f32 %v733, %v705
        %v764 = vmax.f32 %v734, %v706
        %v765 = vmax.f32 %v735, %v707
        %v766 = vmax.f32 %v736, %v708
        %v767 = vmax.f32 %v737, %v709
        %v768 = vmax.f32 %v738, %v710
        %801 = vrot.lane.b32.xlu0 %v711, 4
        %v802 = vpop.permute.xlu0 %801
        %803 = vrot.lane.b32.xlu0 %v712, 4
        %v804 = vpop.permute.xlu0 %803
        %805 = vrot.lane.b32.xlu0 %v741, 4
        %v806 = vpop.permute.xlu0 %805
        %807 = vrot.lane.b32.xlu0 %v742, 4
        %v808 = vpop.permute.xlu0 %807
        %809 = vrot.lane.b32.xlu0 %v743, 4
        %v810 = vpop.permute.xlu0 %809
        %811 = vrot.lane.b32.xlu0 %v744, 4
        %v812 = vpop.permute.xlu0 %811
        %813 = vrot.lane.b32.xlu0 %v745, 4
        %v814 = vpop.permute.xlu0 %813
        %815 = vrot.lane.b32.xlu0 %v746, 4
        %v816 = vpop.permute.xlu0 %815
        %817 = vrot.lane.b32.xlu0 %v747, 4
        %v818 = vpop.permute.xlu0 %817
        %819 = vrot.lane.b32.xlu0 %v748, 4
        %v820 = vpop.permute.xlu0 %819
        %821 = vrot.lane.b32.xlu0 %v749, 4
        %v822 = vpop.permute.xlu0 %821
        %823 = vrot.lane.b32.xlu0 %v750, 4
        %v824 = vpop.permute.xlu0 %823
        %825 = vrot.lane.b32.xlu0 %v751, 4
        %v826 = vpop.permute.xlu0 %825
        %827 = vrot.lane.b32.xlu0 %v752, 4
        %v828 = vpop.permute.xlu0 %827
        %829 = vrot.lane.b32.xlu0 %v753, 4
        %v830 = vpop.permute.xlu0 %829
        %831 = vrot.lane.b32.xlu0 %v754, 4
        %v832 = vpop.permute.xlu0 %831
        %833 = vrot.lane.b32.xlu0 %v755, 4
        %v834 = vpop.permute.xlu0 %833
        %835 = vrot.lane.b32.xlu0 %v756, 4
        %v836 = vpop.permute.xlu0 %835
        %837 = vrot.lane.b32.xlu0 %v757, 4
        %v838 = vpop.permute.xlu0 %837
        %839 = vrot.lane.b32.xlu0 %v758, 4
        %v840 = vpop.permute.xlu0 %839
        %841 = vrot.lane.b32.xlu0 %v759, 4
        %v842 = vpop.permute.xlu0 %841
        %843 = vrot.lane.b32.xlu0 %v760, 4
        %v844 = vpop.permute.xlu0 %843
        %845 = vrot.lane.b32.xlu0 %v761, 4
        %v846 = vpop.permute.xlu0 %845
        %847 = vrot.lane.b32.xlu0 %v762, 4
        %v848 = vpop.permute.xlu0 %847
        %849 = vrot.lane.b32.xlu0 %v763, 4
        %v850 = vpop.permute.xlu0 %849
        %851 = vrot.lane.b32.xlu0 %v764, 4
        %v852 = vpop.permute.xlu0 %851
        %853 = vrot.lane.b32.xlu0 %v765, 4
        %v854 = vpop.permute.xlu0 %853
        %855 = vrot.lane.b32.xlu0 %v766, 4
        %v856 = vpop.permute.xlu0 %855
        %857 = vrot.lane.b32.xlu0 %v767, 4
        %v858 = vpop.permute.xlu0 %857
        %859 = vrot.lane.b32.xlu0 %v768, 4
        %v860 = vpop.permute.xlu0 %859
        %861 = vrot.lane.b32.xlu0 %v739, 4
        %v862 = vpop.permute.xlu0 %861
        %863 = vrot.lane.b32.xlu0 %v740, 4
        %v864 = vpop.permute.xlu0 %863
        %vm897 = vcmask 31744
        %v898 = vsel %vm897, %v196, %v802
        %v899 = vsel %vm897, %v197, %v804
        %v900 = vsel %vm897, %v198, %v806
        %v901 = vsel %vm897, %v199, %v808
        %v902 = vsel %vm897, %v200, %v810
        %v903 = vsel %vm897, %v201, %v812
        %v904 = vsel %vm897, %v202, %v814
        %v905 = vsel %vm897, %v203, %v816
        %v906 = vsel %vm897, %v204, %v818
        %v907 = vsel %vm897, %v205, %v820
        %v908 = vsel %vm897, %v206, %v822
        %v909 = vsel %vm897, %v207, %v824
        %v910 = vsel %vm897, %v208, %v826
        %v911 = vsel %vm897, %v209, %v828
        %v912 = vsel %vm897, %v210, %v830
        %v913 = vsel %vm897, %v211, %v832
        %v914 = vsel %vm897, %v212, %v834
        %v915 = vsel %vm897, %v213, %v836
        %v916 = vsel %vm897, %v214, %v838
        %v917 = vsel %vm897, %v215, %v840
        %v918 = vsel %vm897, %v216, %v842
        %v919 = vsel %vm897, %v217, %v844
        %v920 = vsel %vm897, %v218, %v846
        %v921 = vsel %vm897, %v219, %v848
        %v922 = vsel %vm897, %v220, %v850
        %v923 = vsel %vm897, %v221, %v852
        %v924 = vsel %vm897, %v222, %v854
        %v925 = vsel %vm897, %v223, %v856
        %v926 = vsel %vm897, %v224, %v858
        %v927 = vsel %vm897, %v225, %v860
        %v928 = vsel %vm897, %v226, %v862
        %v929 = vsel %vm897, %v227, %v864
        %v930 = vld [vmem:[%s1] sm:$0xff]
        %v931 = vld [vmem:[%s1 + $0x8] sm:$0xff]
        %v932 = vld [vmem:[%s2] sm:$0x3]
        %v934 = vperm.slane %v932, 0
        %v935 = vperm.slane %v932, 1
        %vm938 = vcmask 64512
        %v940 = vsel %vm938, %v898, 0
        %v943 = vsel %vm938, %v899, 0
        %v946 = vsel %vm938, %v900, 0
        %v949 = vsel %vm938, %v901, 0
        %v952 = vsel %vm938, %v902, 0
        %v955 = vsel %vm938, %v903, 0
        %v958 = vsel %vm938, %v904, 0
        %v961 = vsel %vm938, %v905, 0
        %v964 = vsel %vm938, %v906, 0
        %v967 = vsel %vm938, %v907, 0
        %v970 = vsel %vm938, %v908, 0
        %v973 = vsel %vm938, %v909, 0
        %v976 = vsel %vm938, %v910, 0
        %v979 = vsel %vm938, %v911, 0
        %v982 = vsel %vm938, %v912, 0
        %v985 = vsel %vm938, %v913, 0
        %v988 = vsel %vm938, %v914, 0
        %v991 = vsel %vm938, %v915, 0
        %v994 = vsel %vm938, %v916, 0
        %v997 = vsel %vm938, %v917, 0
        %v1000 = vsel %vm938, %v918, 0
        %v1003 = vsel %vm938, %v919, 0
        %v1006 = vsel %vm938, %v920, 0
        %v1009 = vsel %vm938, %v921, 0
        %v1012 = vsel %vm938, %v922, 0
        %v1015 = vsel %vm938, %v923, 0
        %v1018 = vsel %vm938, %v924, 0
        %v1021 = vsel %vm938, %v925, 0
        %v1024 = vsel %vm938, %v926, 0
        %v1027 = vsel %vm938, %v927, 0
        %v1030 = vsel %vm938, %v928, 0
        %v1033 = vsel %vm938, %v929, 0
        %1035 = vmatpush.msra.mxu0 0.0
        %1036 = vmatpush.msra.mxu0 0.0
        %1037 = vmatpush.msra.mxu0 0.0
        %1038 = vmatpush.msra.mxu0 0.0
        %1039 = vmatpush.msra.mxu0 0.0
        %1040 = vmatpush.msra.mxu0 0.0
        %1041 = vmatpush.msra.mxu0 0.0
        %1042 = vmatpush.msra.mxu0 0.0
        %1043 = vmatpush.msra.mxu0 0.0
        %1044 = vmatpush.msra.mxu0 0.0
        %1045 = vmatpush.msra.mxu0 0.0
        %1046 = vmatpush.msra.mxu0 0.0
        %1047 = vmatpush.msra.mxu0 0.0
        %1048 = vmatpush.msra.mxu0 0.0
        %1049 = vmatpush.msra.mxu0 0.0
        %1050 = vmatpush.msra.mxu0 %v930
        %1051 = vmatmul.f32.gmra.mxu0 %v940
        %v1052 = vpop.f32.mrf.mxu0
        %v1053 = vadd.f32 %v934, %v1052
        %1054 = vmatmul.f32.gmra.mxu0 %v943
        %v1055 = vpop.f32.mrf.mxu0
        %v1056 = vadd.f32 %v934, %v1055
        %1057 = vmatmul.f32.gmra.mxu0 %v946
        %v1058 = vpop.f32.mrf.mxu0
        %v1059 = vadd.f32 %v934, %v1058
        %1060 = vmatmul.f32.gmra.mxu0 %v949
        %v1061 = vpop.f32.mrf.mxu0
        %v1062 = vadd.f32 %v934, %v1061
        %1063 = vmatmul.f32.gmra.mxu0 %v952
        %v1064 = vpop.f32.mrf.mxu0
        %v1065 = vadd.f32 %v934, %v1064
        %1066 = vmatmul.f32.gmra.mxu0 %v955
        %v1067 = vpop.f32.mrf.mxu0
        %v1068 = vadd.f32 %v934, %v1067
        %1069 = vmatmul.f32.gmra.mxu0 %v958
        %v1070 = vpop.f32.mrf.mxu0
        %v1071 = vadd.f32 %v934, %v1070
        %1072 = vmatmul.f32.gmra.mxu0 %v961
        %v1073 = vpop.f32.mrf.mxu0
        %v1074 = vadd.f32 %v934, %v1073
        %1075 = vmatmul.f32.gmra.mxu0 %v964
        %v1076 = vpop.f32.mrf.mxu0
        %v1077 = vadd.f32 %v934, %v1076
        %1078 = vmatmul.f32.gmra.mxu0 %v967
        %v1079 = vpop.f32.mrf.mxu0
        %v1080 = vadd.f32 %v934, %v1079
        %1081 = vmatmul.f32.gmra.mxu0 %v970
        %v1082 = vpop.f32.mrf.mxu0
        %v1083 = vadd.f32 %v934, %v1082
        %1084 = vmatmul.f32.gmra.mxu0 %v973
        %v1085 = vpop.f32.mrf.mxu0
        %v1086 = vadd.f32 %v934, %v1085
        %1087 = vmatmul.f32.gmra.mxu0 %v976
        %v1088 = vpop.f32.mrf.mxu0
        %v1089 = vadd.f32 %v934, %v1088
        %1090 = vmatmul.f32.gmra.mxu0 %v979
        %v1091 = vpop.f32.mrf.mxu0
        %v1092 = vadd.f32 %v934, %v1091
        %1093 = vmatmul.f32.gmra.mxu0 %v982
        %v1094 = vpop.f32.mrf.mxu0
        %v1095 = vadd.f32 %v934, %v1094
        %1096 = vmatmul.f32.gmra.mxu0 %v985
        %v1097 = vpop.f32.mrf.mxu0
        %v1098 = vadd.f32 %v934, %v1097
        %1099 = vmatmul.f32.gmra.mxu0 %v988
        %v1100 = vpop.f32.mrf.mxu0
        %v1101 = vadd.f32 %v934, %v1100
        %1102 = vmatmul.f32.gmra.mxu0 %v991
        %v1103 = vpop.f32.mrf.mxu0
        %v1104 = vadd.f32 %v934, %v1103
        %1105 = vmatmul.f32.gmra.mxu0 %v994
        %v1106 = vpop.f32.mrf.mxu0
        %v1107 = vadd.f32 %v934, %v1106
        %1108 = vmatmul.f32.gmra.mxu0 %v997
        %v1109 = vpop.f32.mrf.mxu0
        %v1110 = vadd.f32 %v934, %v1109
        %1111 = vmatmul.f32.gmra.mxu0 %v1000
        %v1112 = vpop.f32.mrf.mxu0
        %v1113 = vadd.f32 %v934, %v1112
        %1114 = vmatmul.f32.gmra.mxu0 %v1003
        %v1115 = vpop.f32.mrf.mxu0
        %v1116 = vadd.f32 %v934, %v1115
        %1117 = vmatmul.f32.gmra.mxu0 %v1006
        %v1118 = vpop.f32.mrf.mxu0
        %v1119 = vadd.f32 %v934, %v1118
        %1120 = vmatmul.f32.gmra.mxu0 %v1009
        %v1121 = vpop.f32.mrf.mxu0
        %v1122 = vadd.f32 %v934, %v1121
        %1123 = vmatmul.f32.gmra.mxu0 %v1012
        %v1124 = vpop.f32.mrf.mxu0
        %v1125 = vadd.f32 %v934, %v1124
        %1126 = vmatmul.f32.gmra.mxu0 %v1015
        %v1127 = vpop.f32.mrf.mxu0
        %v1128 = vadd.f32 %v934, %v1127
        %1129 = vmatmul.f32.gmra.mxu0 %v1018
        %v1130 = vpop.f32.mrf.mxu0
        %v1131 = vadd.f32 %v934, %v1130
        %1132 = vmatmul.f32.gmra.mxu0 %v1021
        %v1133 = vpop.f32.mrf.mxu0
        %v1134 = vadd.f32 %v934, %v1133
        %1135 = vmatmul.f32.gmra.mxu0 %v1024
        %v1136 = vpop.f32.mrf.mxu0
        %v1137 = vadd.f32 %v934, %v1136
        %1138 = vmatmul.f32.gmra.mxu0 %v1027
        %v1139 = vpop.f32.mrf.mxu0
        %v1140 = vadd.f32 %v934, %v1139
        %1141 = vmatmul.f32.gmra.mxu0 %v1030
        %v1142 = vpop.f32.mrf.mxu0
        %v1143 = vadd.f32 %v934, %v1142
        %1144 = vmatmul.f32.gmra.mxu0 %v1033
        %v1145 = vpop.f32.mrf.mxu0
        %v1146 = vadd.f32 %v934, %v1145
        %1147 = vdwg.mxu0
        %1148 = vmatpush.msra.mxu0 0.0
        %1149 = vmatpush.msra.mxu0 0.0
        %1150 = vmatpush.msra.mxu0 0.0
        %1151 = vmatpush.msra.mxu0 0.0
        %1152 = vmatpush.msra.mxu0 0.0
        %1153 = vmatpush.msra.mxu0 0.0
        %1154 = vmatpush.msra.mxu0 0.0
        %1155 = vmatpush.msra.mxu0 0.0
        %1156 = vmatpush.msra.mxu0 0.0
        %1157 = vmatpush.msra.mxu0 0.0
        %1158 = vmatpush.msra.mxu0 0.0
        %1159 = vmatpush.msra.mxu0 0.0
        %1160 = vmatpush.msra.mxu0 0.0
        %1161 = vmatpush.msra.mxu0 0.0
        %1162 = vmatpush.msra.mxu0 0.0
        %1163 = vmatpush.msra.mxu0 %v931
        %1164 = vmatmul.f32.gmra.mxu0 %v940
        %v1165 = vpop.f32.mrf.mxu0
        %v1166 = vadd.f32 %v935, %v1165
        %1167 = vmatmul.f32.gmra.mxu0 %v943
        %v1168 = vpop.f32.mrf.mxu0
        %v1169 = vadd.f32 %v935, %v1168
        %1170 = vmatmul.f32.gmra.mxu0 %v946
        %v1171 = vpop.f32.mrf.mxu0
        %v1172 = vadd.f32 %v935, %v1171
        %1173 = vmatmul.f32.gmra.mxu0 %v949
        %v1174 = vpop.f32.mrf.mxu0
        %v1175 = vadd.f32 %v935, %v1174
        %1176 = vmatmul.f32.gmra.mxu0 %v952
        %v1177 = vpop.f32.mrf.mxu0
        %v1178 = vadd.f32 %v935, %v1177
        %1179 = vmatmul.f32.gmra.mxu0 %v955
        %v1180 = vpop.f32.mrf.mxu0
        %v1181 = vadd.f32 %v935, %v1180
        %1182 = vmatmul.f32.gmra.mxu0 %v958
        %v1183 = vpop.f32.mrf.mxu0
        %v1184 = vadd.f32 %v935, %v1183
        %1185 = vmatmul.f32.gmra.mxu0 %v961
        %v1186 = vpop.f32.mrf.mxu0
        %v1187 = vadd.f32 %v935, %v1186
        %1188 = vmatmul.f32.gmra.mxu0 %v964
        %v1189 = vpop.f32.mrf.mxu0
        %v1190 = vadd.f32 %v935, %v1189
        %1191 = vmatmul.f32.gmra.mxu0 %v967
        %v1192 = vpop.f32.mrf.mxu0
        %v1193 = vadd.f32 %v935, %v1192
        %1194 = vmatmul.f32.gmra.mxu0 %v970
        %v1195 = vpop.f32.mrf.mxu0
        %v1196 = vadd.f32 %v935, %v1195
        %1197 = vmatmul.f32.gmra.mxu0 %v973
        %v1198 = vpop.f32.mrf.mxu0
        %v1199 = vadd.f32 %v935, %v1198
        %1200 = vmatmul.f32.gmra.mxu0 %v976
        %v1201 = vpop.f32.mrf.mxu0
        %v1202 = vadd.f32 %v935, %v1201
        %1203 = vmatmul.f32.gmra.mxu0 %v979
        %v1204 = vpop.f32.mrf.mxu0
        %v1205 = vadd.f32 %v935, %v1204
        %1206 = vmatmul.f32.gmra.mxu0 %v982
        %v1207 = vpop.f32.mrf.mxu0
        %v1208 = vadd.f32 %v935, %v1207
        %1209 = vmatmul.f32.gmra.mxu0 %v985
        %v1210 = vpop.f32.mrf.mxu0
        %v1211 = vadd.f32 %v935, %v1210
        %1212 = vmatmul.f32.gmra.mxu0 %v988
        %v1213 = vpop.f32.mrf.mxu0
        %v1214 = vadd.f32 %v935, %v1213
        %1215 = vmatmul.f32.gmra.mxu0 %v991
        %v1216 = vpop.f32.mrf.mxu0
        %v1217 = vadd.f32 %v935, %v1216
        %1218 = vmatmul.f32.gmra.mxu0 %v994
        %v1219 = vpop.f32.mrf.mxu0
        %v1220 = vadd.f32 %v935, %v1219
        %1221 = vmatmul.f32.gmra.mxu0 %v997
        %v1222 = vpop.f32.mrf.mxu0
        %v1223 = vadd.f32 %v935, %v1222
        %1224 = vmatmul.f32.gmra.mxu0 %v1000
        %v1225 = vpop.f32.mrf.mxu0
        %v1226 = vadd.f32 %v935, %v1225
        %1227 = vmatmul.f32.gmra.mxu0 %v1003
        %v1228 = vpop.f32.mrf.mxu0
        %v1229 = vadd.f32 %v935, %v1228
        %1230 = vmatmul.f32.gmra.mxu0 %v1006
        %v1231 = vpop.f32.mrf.mxu0
        %v1232 = vadd.f32 %v935, %v1231
        %1233 = vmatmul.f32.gmra.mxu0 %v1009
        %v1234 = vpop.f32.mrf.mxu0
        %v1235 = vadd.f32 %v935, %v1234
        %1236 = vmatmul.f32.gmra.mxu0 %v1012
        %v1237 = vpop.f32.mrf.mxu0
        %v1238 = vadd.f32 %v935, %v1237
        %1239 = vmatmul.f32.gmra.mxu0 %v1015
        %v1240 = vpop.f32.mrf.mxu0
        %v1241 = vadd.f32 %v935, %v1240
        %1242 = vmatmul.f32.gmra.mxu0 %v1018
        %v1243 = vpop.f32.mrf.mxu0
        %v1244 = vadd.f32 %v935, %v1243
        %1245 = vmatmul.f32.gmra.mxu0 %v1021
        %v1246 = vpop.f32.mrf.mxu0
        %v1247 = vadd.f32 %v935, %v1246
        %1248 = vmatmul.f32.gmra.mxu0 %v1024
        %v1249 = vpop.f32.mrf.mxu0
        %v1250 = vadd.f32 %v935, %v1249
        %1251 = vmatmul.f32.gmra.mxu0 %v1027
        %v1252 = vpop.f32.mrf.mxu0
        %v1253 = vadd.f32 %v935, %v1252
        %1254 = vmatmul.f32.gmra.mxu0 %v1030
        %v1255 = vpop.f32.mrf.mxu0
        %v1256 = vadd.f32 %v935, %v1255
        %1257 = vmatmul.f32.gmra.mxu0 %v1033
        %v1258 = vpop.f32.mrf.mxu0
        %v1259 = vadd.f32 %v935, %v1258
        %1260 = vdwg.mxu0
        %1293 = vrot.lane.b32.xlu0 %v1053, 120
        %v1294 = vpop.permute.xlu0 %1293
        %1295 = vrot.lane.b32.xlu0 %v1056, 120
        %v1296 = vpop.permute.xlu0 %1295
        %1297 = vrot.lane.b32.xlu0 %v1059, 120
        %v1298 = vpop.permute.xlu0 %1297
        %1299 = vrot.lane.b32.xlu0 %v1062, 120
        %v1300 = vpop.permute.xlu0 %1299
        %1301 = vrot.lane.b32.xlu0 %v1065, 120
        %v1302 = vpop.permute.xlu0 %1301
        %1303 = vrot.lane.b32.xlu0 %v1068, 120
        %v1304 = vpop.permute.xlu0 %1303
        %1305 = vrot.lane.b32.xlu0 %v1071, 120
        %v1306 = vpop.permute.xlu0 %1305
        %1307 = vrot.lane.b32.xlu0 %v1074, 120
        %v1308 = vpop.permute.xlu0 %1307
        %1309 = vrot.lane.b32.xlu0 %v1077, 120
        %v1310 = vpop.permute.xlu0 %1309
        %1311 = vrot.lane.b32.xlu0 %v1080, 120
        %v1312 = vpop.permute.xlu0 %1311
        %1313 = vrot.lane.b32.xlu0 %v1083, 120
        %v1314 = vpop.permute.xlu0 %1313
        %1315 = vrot.lane.b32.xlu0 %v1086, 120
        %v1316 = vpop.permute.xlu0 %1315
        %1317 = vrot.lane.b32.xlu0 %v1089, 120
        %v1318 = vpop.permute.xlu0 %1317
        %1319 = vrot.lane.b32.xlu0 %v1092, 120
        %v1320 = vpop.permute.xlu0 %1319
        %1321 = vrot.lane.b32.xlu0 %v1095, 120
        %v1322 = vpop.permute.xlu0 %1321
        %1323 = vrot.lane.b32.xlu0 %v1098, 120
        %v1324 = vpop.permute.xlu0 %1323
        %1325 = vrot.lane.b32.xlu0 %v1101, 120
        %v1326 = vpop.permute.xlu0 %1325
        %1327 = vrot.lane.b32.xlu0 %v1104, 120
        %v1328 = vpop.permute.xlu0 %1327
        %1329 = vrot.lane.b32.xlu0 %v1107, 120
        %v1330 = vpop.permute.xlu0 %1329
        %1331 = vrot.lane.b32.xlu0 %v1110, 120
        %v1332 = vpop.permute.xlu0 %1331
        %1333 = vrot.lane.b32.xlu0 %v1113, 120
        %v1334 = vpop.permute.xlu0 %1333
        %1335 = vrot.lane.b32.xlu0 %v1116, 120
        %v1336 = vpop.permute.xlu0 %1335
        %1337 = vrot.lane.b32.xlu0 %v1119, 120
        %v1338 = vpop.permute.xlu0 %1337
        %1339 = vrot.lane.b32.xlu0 %v1122, 120
        %v1340 = vpop.permute.xlu0 %1339
        %1341 = vrot.lane.b32.xlu0 %v1125, 120
        %v1342 = vpop.permute.xlu0 %1341
        %1343 = vrot.lane.b32.xlu0 %v1128, 120
        %v1344 = vpop.permute.xlu0 %1343
        %1345 = vrot.lane.b32.xlu0 %v1131, 120
        %v1346 = vpop.permute.xlu0 %1345
        %1347 = vrot.lane.b32.xlu0 %v1134, 120
        %v1348 = vpop.permute.xlu0 %1347
        %1349 = vrot.lane.b32.xlu0 %v1137, 120
        %v1350 = vpop.permute.xlu0 %1349
        %1351 = vrot.lane.b32.xlu0 %v1140, 120
        %v1352 = vpop.permute.xlu0 %1351
        %1353 = vrot.lane.b32.xlu0 %v1143, 120
        %v1354 = vpop.permute.xlu0 %1353
        %1355 = vrot.lane.b32.xlu0 %v1146, 120
        %v1356 = vpop.permute.xlu0 %1355
        %vm1358 = vcmask 1041408
        %v1359 = vrot.slane 0.0, 6
        %v1360 = vsel %vm1358, %v1359, %v1359
        %v1361 = vrot.slane %v1294, 6
        %v1362 = vrot.slane %v1296, 6
        %v1363 = vsel %vm1358, %v1361, %v1362
        %v1364 = vrot.slane %v1298, 6
        %v1365 = vrot.slane %v1300, 6
        %v1366 = vsel %vm1358, %v1364, %v1365
        %v1367 = vrot.slane %v1302, 6
        %v1368 = vrot.slane %v1304, 6
        %v1369 = vsel %vm1358, %v1367, %v1368
        %v1370 = vrot.slane %v1306, 6
        %v1371 = vrot.slane %v1308, 6
        %v1372 = vsel %vm1358, %v1370, %v1371
        %v1373 = vrot.slane %v1310, 6
        %v1374 = vrot.slane %v1312, 6
        %v1375 = vsel %vm1358, %v1373, %v1374
        %v1376 = vrot.slane %v1314, 6
        %v1377 = vrot.slane %v1316, 6
        %v1378 = vsel %vm1358, %v1376, %v1377
        %v1379 = vrot.slane %v1318, 6
        %v1380 = vrot.slane %v1320, 6
        %v1381 = vsel %vm1358, %v1379, %v1380
        %v1382 = vrot.slane %v1322, 6
        %v1383 = vrot.slane %v1324, 6
        %v1384 = vsel %vm1358, %v1382, %v1383
        %v1385 = vrot.slane %v1326, 6
        %v1386 = vrot.slane %v1328, 6
        %v1387 = vsel %vm1358, %v1385, %v1386
        %v1388 = vrot.slane %v1330, 6
        %v1389 = vrot.slane %v1332, 6
        %v1390 = vsel %vm1358, %v1388, %v1389
        %v1391 = vrot.slane %v1334, 6
        %v1392 = vrot.slane %v1336, 6
        %v1393 = vsel %vm1358, %v1391, %v1392
        %v1394 = vrot.slane %v1338, 6
        %v1395 = vrot.slane %v1340, 6
        %v1396 = vsel %vm1358, %v1394, %v1395
        %v1397 = vrot.slane %v1342, 6
        %v1398 = vrot.slane %v1344, 6
        %v1399 = vsel %vm1358, %v1397, %v1398
        %v1400 = vrot.slane %v1346, 6
        %v1401 = vrot.slane %v1348, 6
        %v1402 = vsel %vm1358, %v1400, %v1401
        %v1403 = vrot.slane %v1350, 6
        %v1404 = vrot.slane %v1352, 6
        %v1405 = vsel %vm1358, %v1403, %v1404
        %v1406 = vrot.slane %v1354, 6
        %v1407 = vrot.slane %v1356, 6
        %v1408 = vsel %vm1358, %v1406, %v1407
        %v1459 = vsel %vm1358, 0.0, %v1359
        %v1460 = vsel %vm1358, 0.0, %v1361
        %v1461 = vsel %vm1358, 0.0, %v1364
        %v1462 = vsel %vm1358, 0.0, %v1367
        %v1463 = vsel %vm1358, 0.0, %v1370
        %v1464 = vsel %vm1358, 0.0, %v1373
        %v1465 = vsel %vm1358, 0.0, %v1376
        %v1466 = vsel %vm1358, 0.0, %v1379
        %v1467 = vsel %vm1358, 0.0, %v1382
        %v1468 = vsel %vm1358, 0.0, %v1385
        %v1469 = vsel %vm1358, 0.0, %v1388
        %v1470 = vsel %vm1358, 0.0, %v1391
        %v1471 = vsel %vm1358, 0.0, %v1394
        %v1472 = vsel %vm1358, 0.0, %v1397
        %v1473 = vsel %vm1358, 0.0, %v1400
        %v1474 = vsel %vm1358, 0.0, %v1403
        %v1475 = vsel %vm1358, 0.0, %v1406
        %v1476 = vsel %vm1358, %v1359, 0.0
        %v1477 = vsel %vm1358, %v1362, 0.0
        %v1478 = vsel %vm1358, %v1365, 0.0
        %v1479 = vsel %vm1358, %v1368, 0.0
        %v1480 = vsel %vm1358, %v1371, 0.0
        %v1481 = vsel %vm1358, %v1374, 0.0
        %v1482 = vsel %vm1358, %v1377, 0.0
        %v1483 = vsel %vm1358, %v1380, 0.0
        %v1484 = vsel %vm1358, %v1383, 0.0
        %v1485 = vsel %vm1358, %v1386, 0.0
        %v1486 = vsel %vm1358, %v1389, 0.0
        %v1487 = vsel %vm1358, %v1392, 0.0
        %v1488 = vsel %vm1358, %v1395, 0.0
        %v1489 = vsel %vm1358, %v1398, 0.0
        %v1490 = vsel %vm1358, %v1401, 0.0
        %v1491 = vsel %vm1358, %v1404, 0.0
        %v1492 = vsel %vm1358, %v1407, 0.0
        %v1523 = vrot.slane %v1459, 1
        %v1524 = vrot.slane %v1360, 1
        %v1525 = vsel %vm421, %v1523, %v1524
        %v1526 = vrot.slane %v1476, 1
        %v1527 = vsel %vm421, %v1524, %v1526
        %v1528 = vrot.slane %v1460, 1
        %v1529 = vrot.slane %v1363, 1
        %v1530 = vsel %vm421, %v1528, %v1529
        %v1531 = vrot.slane %v1477, 1
        %v1532 = vsel %vm421, %v1529, %v1531
        %v1533 = vrot.slane %v1461, 1
        %v1534 = vrot.slane %v1366, 1
        %v1535 = vsel %vm421, %v1533, %v1534
        %v1536 = vrot.slane %v1478, 1
        %v1537 = vsel %vm421, %v1534, %v1536
        %v1538 = vrot.slane %v1462, 1
        %v1539 = vrot.slane %v1369, 1
        %v1540 = vsel %vm421, %v1538, %v1539
        %v1541 = vrot.slane %v1479, 1
        %v1542 = vsel %vm421, %v1539, %v1541
        %v1543 = vrot.slane %v1463, 1
        %v1544 = vrot.slane %v1372, 1
        %v1545 = vsel %vm421, %v1543, %v1544
        %v1546 = vrot.slane %v1480, 1
        %v1547 = vsel %vm421, %v1544, %v1546
        %v1548 = vrot.slane %v1464, 1
        %v1549 = vrot.slane %v1375, 1
        %v1550 = vsel %vm421, %v1548, %v1549
        %v1551 = vrot.slane %v1481, 1
        %v1552 = vsel %vm421, %v1549, %v1551
        %v1553 = vrot.slane %v1465, 1
        %v1554 = vrot.slane %v1378, 1
        %v1555 = vsel %vm421, %v1553, %v1554
        %v1556 = vrot.slane %v1482, 1
        %v1557 = vsel %vm421, %v1554, %v1556
        %v1558 = vrot.slane %v1466, 1
        %v1559 = vrot.slane %v1381, 1
        %v1560 = vsel %vm421, %v1558, %v1559
        %v1561 = vrot.slane %v1483, 1
        %v1562 = vsel %vm421, %v1559, %v1561
        %v1563 = vrot.slane %v1467, 1
        %v1564 = vrot.slane %v1384, 1
        %v1565 = vsel %vm421, %v1563, %v1564
        %v1566 = vrot.slane %v1484, 1
        %v1567 = vsel %vm421, %v1564, %v1566
        %v1568 = vrot.slane %v1468, 1
        %v1569 = vrot.slane %v1387, 1
        %v1570 = vsel %vm421, %v1568, %v1569
        %v1571 = vrot.slane %v1485, 1
        %v1572 = vsel %vm421, %v1569, %v1571
        %v1573 = vrot.slane %v1469, 1
        %v1574 = vrot.slane %v1390, 1
        %v1575 = vsel %vm421, %v1573, %v1574
        %v1576 = vrot.slane %v1486, 1
        %v1577 = vsel %vm421, %v1574, %v1576
        %v1578 = vrot.slane %v1470, 1
        %v1579 = vrot.slane %v1393, 1
        %v1580 = vsel %vm421, %v1578, %v1579
        %v1581 = vrot.slane %v1487, 1
        %v1582 = vsel %vm421, %v1579, %v1581
        %v1583 = vrot.slane %v1471, 1
        %v1584 = vrot.slane %v1396, 1
        %v1585 = vsel %vm421, %v1583, %v1584
        %v1586 = vrot.slane %v1488, 1
        %v1587 = vsel %vm421, %v1584, %v1586
        %v1588 = vrot.slane %v1472, 1
        %v1589 = vrot.slane %v1399, 1
        %v1590 = vsel %vm421, %v1588, %v1589
        %v1591 = vrot.slane %v1489, 1
        %v1592 = vsel %vm421, %v1589, %v1591
        %v1593 = vrot.slane %v1473, 1
        %v1594 = vrot.slane %v1402, 1
        %v1595 = vsel %vm421, %v1593, %v1594
        %v1596 = vrot.slane %v1490, 1
        %v1597 = vsel %vm421, %v1594, %v1596
        %v1598 = vrot.slane %v1459, 2
        %v1599 = vrot.slane %v1360, 2
        %v1600 = vsel %vm566, %v1598, %v1599
        %v1601 = vrot.slane %v1476, 2
        %v1602 = vsel %vm566, %v1599, %v1601
        %v1603 = vrot.slane %v1460, 2
        %v1604 = vrot.slane %v1363, 2
        %v1605 = vsel %vm566, %v1603, %v1604
        %v1606 = vrot.slane %v1477, 2
        %v1607 = vsel %vm566, %v1604, %v1606
        %v1608 = vrot.slane %v1461, 2
        %v1609 = vrot.slane %v1366, 2
        %v1610 = vsel %vm566, %v1608, %v1609
        %v1611 = vrot.slane %v1478, 2
        %v1612 = vsel %vm566, %v1609, %v1611
        %v1613 = vrot.slane %v1462, 2
        %v1614 = vrot.slane %v1369, 2
        %v1615 = vsel %vm566, %v1613, %v1614
        %v1616 = vrot.slane %v1479, 2
        %v1617 = vsel %vm566, %v1614, %v1616
        %v1618 = vrot.slane %v1463, 2
        %v1619 = vrot.slane %v1372, 2
        %v1620 = vsel %vm566, %v1618, %v1619
        %v1621 = vrot.slane %v1480, 2
        %v1622 = vsel %vm566, %v1619, %v1621
        %v1623 = vrot.slane %v1464, 2
        %v1624 = vrot.slane %v1375, 2
        %v1625 = vsel %vm566, %v1623, %v1624
        %v1626 = vrot.slane %v1481, 2
        %v1627 = vsel %vm566, %v1624, %v1626
        %v1628 = vrot.slane %v1465, 2
        %v1629 = vrot.slane %v1378, 2
        %v1630 = vsel %vm566, %v1628, %v1629
        %v1631 = vrot.slane %v1482, 2
        %v1632 = vsel %vm566, %v1629, %v1631
        %v1633 = vrot.slane %v1466, 2
        %v1634 = vrot.slane %v1381, 2
        %v1635 = vsel %vm566, %v1633, %v1634
        %v1636 = vrot.slane %v1483, 2
        %v1637 = vsel %vm566, %v1634, %v1636
        %v1638 = vrot.slane %v1467, 2
        %v1639 = vrot.slane %v1384, 2
        %v1640 = vsel %vm566, %v1638, %v1639
        %v1641 = vrot.slane %v1484, 2
        %v1642 = vsel %vm566, %v1639, %v1641
        %v1643 = vrot.slane %v1468, 2
        %v1644 = vrot.slane %v1387, 2
        %v1645 = vsel %vm566, %v1643, %v1644
        %v1646 = vrot.slane %v1485, 2
        %v1647 = vsel %vm566, %v1644, %v1646
        %v1648 = vrot.slane %v1469, 2
        %v1649 = vrot.slane %v1390, 2
        %v1650 = vsel %vm566, %v1648, %v1649
        %v1651 = vrot.slane %v1486, 2
        %v1652 = vsel %vm566, %v1649, %v1651
        %v1653 = vrot.slane %v1470, 2
        %v1654 = vrot.slane %v1393, 2
        %v1655 = vsel %vm566, %v1653, %v1654
        %v1656 = vrot.slane %v1487, 2
        %v1657 = vsel %vm566, %v1654, %v1656
        %v1658 = vrot.slane %v1471, 2
        %v1659 = vrot.slane %v1396, 2
        %v1660 = vsel %vm566, %v1658, %v1659
        %v1661 = vrot.slane %v1488, 2
        %v1662 = vsel %vm566, %v1659, %v1661
        %v1663 = vrot.slane %v1472, 2
        %v1664 = vrot.slane %v1399, 2
        %v1665 = vsel %vm566, %v1663, %v1664
        %v1666 = vrot.slane %v1489, 2
        %v1667 = vsel %vm566, %v1664, %v1666
        %v1668 = vrot.slane %v1473, 2
        %v1669 = vrot.slane %v1402, 2
        %v1670 = vsel %vm566, %v1668, %v1669
        %v1671 = vrot.slane %v1490, 2
        %v1672 = vsel %vm566, %v1669, %v1671
        %vm1673 = vcmask 1044480
        %v1674 = vrot.slane %v1459, 3
        %v1675 = vrot.slane %v1360, 3
        %v1676 = vsel %vm1673, %v1674, %v1675
        %v1677 = vrot.slane %v1476, 3
        %v1678 = vsel %vm1673, %v1675, %v1677
        %v1679 = vrot.slane %v1460, 3
        %v1680 = vrot.slane %v1363, 3
        %v1681 = vsel %vm1673, %v1679, %v1680
        %v1682 = vrot.slane %v1477, 3
        %v1683 = vsel %vm1673, %v1680, %v1682
        %v1684 = vrot.slane %v1461, 3
        %v1685 = vrot.slane %v1366, 3
        %v1686 = vsel %vm1673, %v1684, %v1685
        %v1687 = vrot.slane %v1478, 3
        %v1688 = vsel %vm1673, %v1685, %v1687
        %v1689 = vrot.slane %v1462, 3
        %v1690 = vrot.slane %v1369, 3
        %v1691 = vsel %vm1673, %v1689, %v1690
        %v1692 = vrot.slane %v1479, 3
        %v1693 = vsel %vm1673, %v1690, %v1692
        %v1694 = vrot.slane %v1463, 3
        %v1695 = vrot.slane %v1372, 3
        %v1696 = vsel %vm1673, %v1694, %v1695
        %v1697 = vrot.slane %v1480, 3
        %v1698 = vsel %vm1673, %v1695, %v1697
        %v1699 = vrot.slane %v1464, 3
        %v1700 = vrot.slane %v1375, 3
        %v1701 = vsel %vm1673, %v1699, %v1700
        %v1702 = vrot.slane %v1481, 3
        %v1703 = vsel %vm1673, %v1700, %v1702
        %v1704 = vrot.slane %v1465, 3
        %v1705 = vrot.slane %v1378, 3
        %v1706 = vsel %vm1673, %v1704, %v1705
        %v1707 = vrot.slane %v1482, 3
        %v1708 = vsel %vm1673, %v1705, %v1707
        %v1709 = vrot.slane %v1466, 3
        %v1710 = vrot.slane %v1381, 3
        %v1711 = vsel %vm1673, %v1709, %v1710
        %v1712 = vrot.slane %v1483, 3
        %v1713 = vsel %vm1673, %v1710, %v1712
        %v1714 = vrot.slane %v1467, 3
        %v1715 = vrot.slane %v1384, 3
        %v1716 = vsel %vm1673, %v1714, %v1715
        %v1717 = vrot.slane %v1484, 3
        %v1718 = vsel %vm1673, %v1715, %v1717
        %v1719 = vrot.slane %v1468, 3
        %v1720 = vrot.slane %v1387, 3
        %v1721 = vsel %vm1673, %v1719, %v1720
        %v1722 = vrot.slane %v1485, 3
        %v1723 = vsel %vm1673, %v1720, %v1722
        %v1724 = vrot.slane %v1469, 3
        %v1725 = vrot.slane %v1390, 3
        %v1726 = vsel %vm1673, %v1724, %v1725
        %v1727 = vrot.slane %v1486, 3
        %v1728 = vsel %vm1673, %v1725, %v1727
        %v1729 = vrot.slane %v1470, 3
        %v1730 = vrot.slane %v1393, 3
        %v1731 = vsel %vm1673, %v1729, %v1730
        %v1732 = vrot.slane %v1487, 3
        %v1733 = vsel %vm1673, %v1730, %v1732
        %v1734 = vrot.slane %v1471, 3
        %v1735 = vrot.slane %v1396, 3
        %v1736 = vsel %vm1673, %v1734, %v1735
        %v1737 = vrot.slane %v1488, 3
        %v1738 = vsel %vm1673, %v1735, %v1737
        %v1739 = vrot.slane %v1472, 3
        %v1740 = vrot.slane %v1399, 3
        %v1741 = vsel %vm1673, %v1739, %v1740
        %v1742 = vrot.slane %v1489, 3
        %v1743 = vsel %vm1673, %v1740, %v1742
        %v1744 = vrot.slane %v1473, 3
        %v1745 = vrot.slane %v1402, 3
        %v1746 = vsel %vm1673, %v1744, %v1745
        %v1747 = vrot.slane %v1490, 3
        %v1748 = vsel %vm1673, %v1745, %v1747
        %vm1749 = vcmask 1043456
        %v1750 = vrot.slane %v1459, 4
        %v1751 = vrot.slane %v1360, 4
        %v1752 = vsel %vm1749, %v1750, %v1751
        %v1753 = vrot.slane %v1476, 4
        %v1754 = vsel %vm1749, %v1751, %v1753
        %v1755 = vrot.slane %v1460, 4
        %v1756 = vrot.slane %v1363, 4
        %v1757 = vsel %vm1749, %v1755, %v1756
        %v1758 = vrot.slane %v1477, 4
        %v1759 = vsel %vm1749, %v1756, %v1758
        %v1760 = vrot.slane %v1461, 4
        %v1761 = vrot.slane %v1366, 4
        %v1762 = vsel %vm1749, %v1760, %v1761
        %v1763 = vrot.slane %v1478, 4
        %v1764 = vsel %vm1749, %v1761, %v1763
        %v1765 = vrot.slane %v1462, 4
        %v1766 = vrot.slane %v1369, 4
        %v1767 = vsel %vm1749, %v1765, %v1766
        %v1768 = vrot.slane %v1479, 4
        %v1769 = vsel %vm1749, %v1766, %v1768
        %v1770 = vrot.slane %v1463, 4
        %v1771 = vrot.slane %v1372, 4
        %v1772 = vsel %vm1749, %v1770, %v1771
        %v1773 = vrot.slane %v1480, 4
        %v1774 = vsel %vm1749, %v1771, %v1773
        %v1775 = vrot.slane %v1464, 4
        %v1776 = vrot.slane %v1375, 4
        %v1777 = vsel %vm1749, %v1775, %v1776
        %v1778 = vrot.slane %v1481, 4
        %v1779 = vsel %vm1749, %v1776, %v1778
        %v1780 = vrot.slane %v1465, 4
        %v1781 = vrot.slane %v1378, 4
        %v1782 = vsel %vm1749, %v1780, %v1781
        %v1783 = vrot.slane %v1482, 4
        %v1784 = vsel %vm1749, %v1781, %v1783
        %v1785 = vrot.slane %v1466, 4
        %v1786 = vrot.slane %v1381, 4
        %v1787 = vsel %vm1749, %v1785, %v1786
        %v1788 = vrot.slane %v1483, 4
        %v1789 = vsel %vm1749, %v1786, %v1788
        %v1790 = vrot.slane %v1467, 4
        %v1791 = vrot.slane %v1384, 4
        %v1792 = vsel %vm1749, %v1790, %v1791
        %v1793 = vrot.slane %v1484, 4
        %v1794 = vsel %vm1749, %v1791, %v1793
        %v1795 = vrot.slane %v1468, 4
        %v1796 = vrot.slane %v1387, 4
        %v1797 = vsel %vm1749, %v1795, %v1796
        %v1798 = vrot.slane %v1485, 4
        %v1799 = vsel %vm1749, %v1796, %v1798
        %v1800 = vrot.slane %v1469, 4
        %v1801 = vrot.slane %v1390, 4
        %v1802 = vsel %vm1749, %v1800, %v1801
        %v1803 = vrot.slane %v1486, 4
        %v1804 = vsel %vm1749, %v1801, %v1803
        %v1805 = vrot.slane %v1470, 4
        %v1806 = vrot.slane %v1393, 4
        %v1807 = vsel %vm1749, %v1805, %v1806
        %v1808 = vrot.slane %v1487, 4
        %v1809 = vsel %vm1749, %v1806, %v1808
        %v1810 = vrot.slane %v1471, 4
        %v1811 = vrot.slane %v1396, 4
        %v1812 = vsel %vm1749, %v1810, %v1811
        %v1813 = vrot.slane %v1488, 4
        %v1814 = vsel %vm1749, %v1811, %v1813
        %v1815 = vrot.slane %v1472, 4
        %v1816 = vrot.slane %v1399, 4
        %v1817 = vsel %vm1749, %v1815, %v1816
        %v1818 = vrot.slane %v1489, 4
        %v1819 = vsel %vm1749, %v1816, %v1818
        %v1820 = vrot.slane %v1473, 4
        %v1821 = vrot.slane %v1402, 4
        %v1822 = vsel %vm1749, %v1820, %v1821
        %v1823 = vrot.slane %v1490, 4
        %v1824 = vsel %vm1749, %v1821, %v1823
        %1825 = vrot.lane.b32.xlu0 %v1525, 8
        %v1826 = vpop.permute.xlu0 %1825
        %1827 = vrot.lane.b32.xlu0 %v1527, 8
        %v1828 = vpop.permute.xlu0 %1827
        %1829 = vrot.lane.b32.xlu0 %v1530, 8
        %v1830 = vpop.permute.xlu0 %1829
        %1831 = vrot.lane.b32.xlu0 %v1532, 8
        %v1832 = vpop.permute.xlu0 %1831
        %1833 = vrot.lane.b32.xlu0 %v1535, 8
        %v1834 = vpop.permute.xlu0 %1833
        %1835 = vrot.lane.b32.xlu0 %v1537, 8
        %v1836 = vpop.permute.xlu0 %1835
        %1837 = vrot.lane.b32.xlu0 %v1540, 8
        %v1838 = vpop.permute.xlu0 %1837
        %1839 = vrot.lane.b32.xlu0 %v1542, 8
        %v1840 = vpop.permute.xlu0 %1839
        %1841 = vrot.lane.b32.xlu0 %v1545, 8
        %v1842 = vpop.permute.xlu0 %1841
        %1843 = vrot.lane.b32.xlu0 %v1547, 8
        %v1844 = vpop.permute.xlu0 %1843
        %1845 = vrot.lane.b32.xlu0 %v1550, 8
        %v1846 = vpop.permute.xlu0 %1845
        %1847 = vrot.lane.b32.xlu0 %v1552, 8
        %v1848 = vpop.permute.xlu0 %1847
        %1849 = vrot.lane.b32.xlu0 %v1555, 8
        %v1850 = vpop.permute.xlu0 %1849
        %1851 = vrot.lane.b32.xlu0 %v1557, 8
        %v1852 = vpop.permute.xlu0 %1851
        %1853 = vrot.lane.b32.xlu0 %v1560, 8
        %v1854 = vpop.permute.xlu0 %1853
        %1855 = vrot.lane.b32.xlu0 %v1562, 8
        %v1856 = vpop.permute.xlu0 %1855
        %1857 = vrot.lane.b32.xlu0 %v1565, 8
        %v1858 = vpop.permute.xlu0 %1857
        %1859 = vrot.lane.b32.xlu0 %v1567, 8
        %v1860 = vpop.permute.xlu0 %1859
        %1861 = vrot.lane.b32.xlu0 %v1570, 8
        %v1862 = vpop.permute.xlu0 %1861
        %1863 = vrot.lane.b32.xlu0 %v1572, 8
        %v1864 = vpop.permute.xlu0 %1863
        %1865 = vrot.lane.b32.xlu0 %v1575, 8
        %v1866 = vpop.permute.xlu0 %1865
        %1867 = vrot.lane.b32.xlu0 %v1577, 8
        %v1868 = vpop.permute.xlu0 %1867
        %1869 = vrot.lane.b32.xlu0 %v1580, 8
        %v1870 = vpop.permute.xlu0 %1869
        %1871 = vrot.lane.b32.xlu0 %v1582, 8
        %v1872 = vpop.permute.xlu0 %1871
        %1873 = vrot.lane.b32.xlu0 %v1585, 8
        %v1874 = vpop.permute.xlu0 %1873
        %1875 = vrot.lane.b32.xlu0 %v1587, 8
        %v1876 = vpop.permute.xlu0 %1875
        %1877 = vrot.lane.b32.xlu0 %v1590, 8
        %v1878 = vpop.permute.xlu0 %1877
        %1879 = vrot.lane.b32.xlu0 %v1592, 8
        %v1880 = vpop.permute.xlu0 %1879
        %1881 = vrot.lane.b32.xlu0 %v1595, 8
        %v1882 = vpop.permute.xlu0 %1881
        %1883 = vrot.lane.b32.xlu0 %v1597, 8
        %v1884 = vpop.permute.xlu0 %1883
        %1915 = vrot.lane.b32.xlu0 %v1600, 16
        %v1916 = vpop.permute.xlu0 %1915
        %1917 = vrot.lane.b32.xlu0 %v1602, 16
        %v1918 = vpop.permute.xlu0 %1917
        %1919 = vrot.lane.b32.xlu0 %v1605, 16
        %v1920 = vpop.permute.xlu0 %1919
        %1921 = vrot.lane.b32.xlu0 %v1607, 16
        %v1922 = vpop.permute.xlu0 %1921
        %1923 = vrot.lane.b32.xlu0 %v1610, 16
        %v1924 = vpop.permute.xlu0 %1923
        %1925 = vrot.lane.b32.xlu0 %v1612, 16
        %v1926 = vpop.permute.xlu0 %1925
        %1927 = vrot.lane.b32.xlu0 %v1615, 16
        %v1928 = vpop.permute.xlu0 %1927
        %1929 = vrot.lane.b32.xlu0 %v1617, 16
        %v1930 = vpop.permute.xlu0 %1929
        %1931 = vrot.lane.b32.xlu0 %v1620, 16
        %v1932 = vpop.permute.xlu0 %1931
        %1933 = vrot.lane.b32.xlu0 %v1622, 16
        %v1934 = vpop.permute.xlu0 %1933
        %1935 = vrot.lane.b32.xlu0 %v1625, 16
        %v1936 = vpop.permute.xlu0 %1935
        %1937 = vrot.lane.b32.xlu0 %v1627, 16
        %v1938 = vpop.permute.xlu0 %1937
        %1939 = vrot.lane.b32.xlu0 %v1630, 16
        %v1940 = vpop.permute.xlu0 %1939
        %1941 = vrot.lane.b32.xlu0 %v1632, 16
        %v1942 = vpop.permute.xlu0 %1941
        %1943 = vrot.lane.b32.xlu0 %v1635, 16
        %v1944 = vpop.permute.xlu0 %1943
        %1945 = vrot.lane.b32.xlu0 %v1637, 16
        %v1946 = vpop.permute.xlu0 %1945
        %1947 = vrot.lane.b32.xlu0 %v1640, 16
        %v1948 = vpop.permute.xlu0 %1947
        %1949 = vrot.lane.b32.xlu0 %v1642, 16
        %v1950 = vpop.permute.xlu0 %1949
        %1951 = vrot.lane.b32.xlu0 %v1645, 16
        %v1952 = vpop.permute.xlu0 %1951
        %1953 = vrot.lane.b32.xlu0 %v1647, 16
        %v1954 = vpop.permute.xlu0 %1953
        %1955 = vrot.lane.b32.xlu0 %v1650, 16
        %v1956 = vpop.permute.xlu0 %1955
        %1957 = vrot.lane.b32.xlu0 %v1652, 16
        %v1958 = vpop.permute.xlu0 %1957
        %1959 = vrot.lane.b32.xlu0 %v1655, 16
        %v1960 = vpop.permute.xlu0 %1959
        %1961 = vrot.lane.b32.xlu0 %v1657, 16
        %v1962 = vpop.permute.xlu0 %1961
        %1963 = vrot.lane.b32.xlu0 %v1660, 16
        %v1964 = vpop.permute.xlu0 %1963
        %1965 = vrot.lane.b32.xlu0 %v1662, 16
        %v1966 = vpop.permute.xlu0 %1965
        %1967 = vrot.lane.b32.xlu0 %v1665, 16
        %v1968 = vpop.permute.xlu0 %1967
        %1969 = vrot.lane.b32.xlu0 %v1667, 16
        %v1970 = vpop.permute.xlu0 %1969
        %1971 = vrot.lane.b32.xlu0 %v1670, 16
        %v1972 = vpop.permute.xlu0 %1971
        %1973 = vrot.lane.b32.xlu0 %v1672, 16
        %v1974 = vpop.permute.xlu0 %1973
        %2005 = vrot.lane.b32.xlu0 %v1676, 24
        %v2006 = vpop.permute.xlu0 %2005
        %2007 = vrot.lane.b32.xlu0 %v1678, 24
        %v2008 = vpop.permute.xlu0 %2007
        %2009 = vrot.lane.b32.xlu0 %v1681, 24
        %v2010 = vpop.permute.xlu0 %2009
        %2011 = vrot.lane.b32.xlu0 %v1683, 24
        %v2012 = vpop.permute.xlu0 %2011
        %2013 = vrot.lane.b32.xlu0 %v1686, 24
        %v2014 = vpop.permute.xlu0 %2013
        %2015 = vrot.lane.b32.xlu0 %v1688, 24
        %v2016 = vpop.permute.xlu0 %2015
        %2017 = vrot.lane.b32.xlu0 %v1691, 24
        %v2018 = vpop.permute.xlu0 %2017
        %2019 = vrot.lane.b32.xlu0 %v1693, 24
        %v2020 = vpop.permute.xlu0 %2019
        %2021 = vrot.lane.b32.xlu0 %v1696, 24
        %v2022 = vpop.permute.xlu0 %2021
        %2023 = vrot.lane.b32.xlu0 %v1698, 24
        %v2024 = vpop.permute.xlu0 %2023
        %2025 = vrot.lane.b32.xlu0 %v1701, 24
        %v2026 = vpop.permute.xlu0 %2025
        %2027 = vrot.lane.b32.xlu0 %v1703, 24
        %v2028 = vpop.permute.xlu0 %2027
        %2029 = vrot.lane.b32.xlu0 %v1706, 24
        %v2030 = vpop.permute.xlu0 %2029
        %2031 = vrot.lane.b32.xlu0 %v1708, 24
        %v2032 = vpop.permute.xlu0 %2031
        %2033 = vrot.lane.b32.xlu0 %v1711, 24
        %v2034 = vpop.permute.xlu0 %2033
        %2035 = vrot.lane.b32.xlu0 %v1713, 24
        %v2036 = vpop.permute.xlu0 %2035
        %2037 = vrot.lane.b32.xlu0 %v1716, 24
        %v2038 = vpop.permute.xlu0 %2037
        %2039 = vrot.lane.b32.xlu0 %v1718, 24
        %v2040 = vpop.permute.xlu0 %2039
        %2041 = vrot.lane.b32.xlu0 %v1721, 24
        %v2042 = vpop.permute.xlu0 %2041
        %2043 = vrot.lane.b32.xlu0 %v1723, 24
        %v2044 = vpop.permute.xlu0 %2043
        %2045 = vrot.lane.b32.xlu0 %v1726, 24
        %v2046 = vpop.permute.xlu0 %2045
        %2047 = vrot.lane.b32.xlu0 %v1728, 24
        %v2048 = vpop.permute.xlu0 %2047
        %2049 = vrot.lane.b32.xlu0 %v1731, 24
        %v2050 = vpop.permute.xlu0 %2049
        %2051 = vrot.lane.b32.xlu0 %v1733, 24
        %v2052 = vpop.permute.xlu0 %2051
        %2053 = vrot.lane.b32.xlu0 %v1736, 24
        %v2054 = vpop.permute.xlu0 %2053
        %2055 = vrot.lane.b32.xlu0 %v1738, 24
        %v2056 = vpop.permute.xlu0 %2055
        %2057 = vrot.lane.b32.xlu0 %v1741, 24
        %v2058 = vpop.permute.xlu0 %2057
        %2059 = vrot.lane.b32.xlu0 %v1743, 24
        %v2060 = vpop.permute.xlu0 %2059
        %2061 = vrot.lane.b32.xlu0 %v1746, 24
        %v2062 = vpop.permute.xlu0 %2061
        %2063 = vrot.lane.b32.xlu0 %v1748, 24
        %v2064 = vpop.permute.xlu0 %2063
        %2095 = vrot.lane.b32.xlu0 %v1752, 32
        %v2096 = vpop.permute.xlu0 %2095
        %2097 = vrot.lane.b32.xlu0 %v1754, 32
        %v2098 = vpop.permute.xlu0 %2097
        %2099 = vrot.lane.b32.xlu0 %v1757, 32
        %v2100 = vpop.permute.xlu0 %2099
        %2101 = vrot.lane.b32.xlu0 %v1759, 32
        %v2102 = vpop.permute.xlu0 %2101
        %2103 = vrot.lane.b32.xlu0 %v1762, 32
        %v2104 = vpop.permute.xlu0 %2103
        %2105 = vrot.lane.b32.xlu0 %v1764, 32
        %v2106 = vpop.permute.xlu0 %2105
        %2107 = vrot.lane.b32.xlu0 %v1767, 32
        %v2108 = vpop.permute.xlu0 %2107
        %2109 = vrot.lane.b32.xlu0 %v1769, 32
        %v2110 = vpop.permute.xlu0 %2109
        %2111 = vrot.lane.b32.xlu0 %v1772, 32
        %v2112 = vpop.permute.xlu0 %2111
        %2113 = vrot.lane.b32.xlu0 %v1774, 32
        %v2114 = vpop.permute.xlu0 %2113
        %2115 = vrot.lane.b32.xlu0 %v1777, 32
        %v2116 = vpop.permute.xlu0 %2115
        %2117 = vrot.lane.b32.xlu0 %v1779, 32
        %v2118 = vpop.permute.xlu0 %2117
        %2119 = vrot.lane.b32.xlu0 %v1782, 32
        %v2120 = vpop.permute.xlu0 %2119
        %2121 = vrot.lane.b32.xlu0 %v1784, 32
        %v2122 = vpop.permute.xlu0 %2121
        %2123 = vrot.lane.b32.xlu0 %v1787, 32
        %v2124 = vpop.permute.xlu0 %2123
        %2125 = vrot.lane.b32.xlu0 %v1789, 32
        %v2126 = vpop.permute.xlu0 %2125
        %2127 = vrot.lane.b32.xlu0 %v1792, 32
        %v2128 = vpop.permute.xlu0 %2127
        %2129 = vrot.lane.b32.xlu0 %v1794, 32
        %v2130 = vpop.permute.xlu0 %2129
        %2131 = vrot.lane.b32.xlu0 %v1797, 32
        %v2132 = vpop.permute.xlu0 %2131
        %2133 = vrot.lane.b32.xlu0 %v1799, 32
        %v2134 = vpop.permute.xlu0 %2133
        %2135 = vrot.lane.b32.xlu0 %v1802, 32
        %v2136 = vpop.permute.xlu0 %2135
        %2137 = vrot.lane.b32.xlu0 %v1804, 32
        %v2138 = vpop.permute.xlu0 %2137
        %2139 = vrot.lane.b32.xlu0 %v1807, 32
        %v2140 = vpop.permute.xlu0 %2139
        %2141 = vrot.lane.b32.xlu0 %v1809, 32
        %v2142 = vpop.permute.xlu0 %2141
        %2143 = vrot.lane.b32.xlu0 %v1812, 32
        %v2144 = vpop.permute.xlu0 %2143
        %2145 = vrot.lane.b32.xlu0 %v1814, 32
        %v2146 = vpop.permute.xlu0 %2145
        %2147 = vrot.lane.b32.xlu0 %v1817, 32
        %v2148 = vpop.permute.xlu0 %2147
        %2149 = vrot.lane.b32.xlu0 %v1819, 32
        %v2150 = vpop.permute.xlu0 %2149
        %2151 = vrot.lane.b32.xlu0 %v1822, 32
        %v2152 = vpop.permute.xlu0 %2151
        %2153 = vrot.lane.b32.xlu0 %v1824, 32
        %v2154 = vpop.permute.xlu0 %2153
        %v2185 = vsel %vm938, %v1459, %v1826
        %v2186 = vsel %vm938, %v1360, %v1828
        %v2187 = vsel %vm938, %v1460, %v1830
        %v2188 = vsel %vm938, %v1363, %v1832
        %v2189 = vsel %vm938, %v1461, %v1834
        %v2190 = vsel %vm938, %v1366, %v1836
        %v2191 = vsel %vm938, %v1462, %v1838
        %v2192 = vsel %vm938, %v1369, %v1840
        %v2193 = vsel %vm938, %v1463, %v1842
        %v2194 = vsel %vm938, %v1372, %v1844
        %v2195 = vsel %vm938, %v1464, %v1846
        %v2196 = vsel %vm938, %v1375, %v1848
        %v2197 = vsel %vm938, %v1465, %v1850
        %v2198 = vsel %vm938, %v1378, %v1852
        %v2199 = vsel %vm938, %v1466, %v1854
        %v2200 = vsel %vm938, %v1381, %v1856
        %v2201 = vsel %vm938, %v1467, %v1858
        %v2202 = vsel %vm938, %v1384, %v1860
        %v2203 = vsel %vm938, %v1468, %v1862
        %v2204 = vsel %vm938, %v1387, %v1864
        %v2205 = vsel %vm938, %v1469, %v1866
        %v2206 = vsel %vm938, %v1390, %v1868
        %v2207 = vsel %vm938, %v1470, %v1870
        %v2208 = vsel %vm938, %v1393, %v1872
        %v2209 = vsel %vm938, %v1471, %v1874
        %v2210 = vsel %vm938, %v1396, %v1876
        %v2211 = vsel %vm938, %v1472, %v1878
        %v2212 = vsel %vm938, %v1399, %v1880
        %v2213 = vsel %vm938, %v1473, %v1882
        %v2214 = vsel %vm938, %v1402, %v1884
        %vm2215 = vcmask 130048
        %v2216 = vsel %vm2215, %v2185, %v1916
        %v2217 = vsel %vm2215, %v2186, %v1918
        %v2218 = vsel %vm2215, %v2187, %v1920
        %v2219 = vsel %vm2215, %v2188, %v1922
        %v2220 = vsel %vm2215, %v2189, %v1924
        %v2221 = vsel %vm2215, %v2190, %v1926
        %v2222 = vsel %vm2215, %v2191, %v1928
        %v2223 = vsel %vm2215, %v2192, %v1930
        %v2224 = vsel %vm2215, %v2193, %v1932
        %v2225 = vsel %vm2215, %v2194, %v1934
        %v2226 = vsel %vm2215, %v2195, %v1936
        %v2227 = vsel %vm2215, %v2196, %v1938
        %v2228 = vsel %vm2215, %v2197, %v1940
        %v2229 = vsel %vm2215, %v2198, %v1942
        %v2230 = vsel %vm2215, %v2199, %v1944
        %v2231 = vsel %vm2215, %v2200, %v1946
        %v2232 = vsel %vm2215, %v2201, %v1948
        %v2233 = vsel %vm2215, %v2202, %v1950
        %v2234 = vsel %vm2215, %v2203, %v1952
        %v2235 = vsel %vm2215, %v2204, %v1954
        %v2236 = vsel %vm2215, %v2205, %v1956
        %v2237 = vsel %vm2215, %v2206, %v1958
        %v2238 = vsel %vm2215, %v2207, %v1960
        %v2239 = vsel %vm2215, %v2208, %v1962
        %v2240 = vsel %vm2215, %v2209, %v1964
        %v2241 = vsel %vm2215, %v2210, %v1966
        %v2242 = vsel %vm2215, %v2211, %v1968
        %v2243 = vsel %vm2215, %v2212, %v1970
        %v2244 = vsel %vm2215, %v2213, %v1972
        %v2245 = vsel %vm2215, %v2214, %v1974
        %vm2246 = vcmask 195584
        %v2247 = vsel %vm2246, %v2216, %v2006
        %v2248 = vsel %vm2246, %v2217, %v2008
        %v2249 = vsel %vm2246, %v2218, %v2010
        %v2250 = vsel %vm2246, %v2219, %v2012
        %v2251 = vsel %vm2246, %v2220, %v2014
        %v2252 = vsel %vm2246, %v2221, %v2016
        %v2253 = vsel %vm2246, %v2222, %v2018
        %v2254 = vsel %vm2246, %v2223, %v2020
        %v2255 = vsel %vm2246, %v2224, %v2022
        %v2256 = vsel %vm2246, %v2225, %v2024
        %v2257 = vsel %vm2246, %v2226, %v2026
        %v2258 = vsel %vm2246, %v2227, %v2028
        %v2259 = vsel %vm2246, %v2228, %v2030
        %v2260 = vsel %vm2246, %v2229, %v2032
        %v2261 = vsel %vm2246, %v2230, %v2034
        %v2262 = vsel %vm2246, %v2231, %v2036
        %v2263 = vsel %vm2246, %v2232, %v2038
        %v2264 = vsel %vm2246, %v2233, %v2040
        %v2265 = vsel %vm2246, %v2234, %v2042
        %v2266 = vsel %vm2246, %v2235, %v2044
        %v2267 = vsel %vm2246, %v2236, %v2046
        %v2268 = vsel %vm2246, %v2237, %v2048
        %v2269 = vsel %vm2246, %v2238, %v2050
        %v2270 = vsel %vm2246, %v2239, %v2052
        %v2271 = vsel %vm2246, %v2240, %v2054
        %v2272 = vsel %vm2246, %v2241, %v2056
        %v2273 = vsel %vm2246, %v2242, %v2058
        %v2274 = vsel %vm2246, %v2243, %v2060
        %v2275 = vsel %vm2246, %v2244, %v2062
        %v2276 = vsel %vm2246, %v2245, %v2064
        %vm2277 = vcmask 261120
        %v2278 = vsel %vm2277, %v2247, %v2096
        %v2279 = vsel %vm2277, %v2248, %v2098
        %v2280 = vsel %vm2277, %v2249, %v2100
        %v2281 = vsel %vm2277, %v2250, %v2102
        %v2282 = vsel %vm2277, %v2251, %v2104
        %v2283 = vsel %vm2277, %v2252, %v2106
        %v2284 = vsel %vm2277, %v2253, %v2108
        %v2285 = vsel %vm2277, %v2254, %v2110
        %v2286 = vsel %vm2277, %v2255, %v2112
        %v2287 = vsel %vm2277, %v2256, %v2114
        %v2288 = vsel %vm2277, %v2257, %v2116
        %v2289 = vsel %vm2277, %v2258, %v2118
        %v2290 = vsel %vm2277, %v2259, %v2120
        %v2291 = vsel %vm2277, %v2260, %v2122
        %v2292 = vsel %vm2277, %v2261, %v2124
        %v2293 = vsel %vm2277, %v2262, %v2126
        %v2294 = vsel %vm2277, %v2263, %v2128
        %v2295 = vsel %vm2277, %v2264, %v2130
        %v2296 = vsel %vm2277, %v2265, %v2132
        %v2297 = vsel %vm2277, %v2266, %v2134
        %v2298 = vsel %vm2277, %v2267, %v2136
        %v2299 = vsel %vm2277, %v2268, %v2138
        %v2300 = vsel %vm2277, %v2269, %v2140
        %v2301 = vsel %vm2277, %v2270, %v2142
        %v2302 = vsel %vm2277, %v2271, %v2144
        %v2303 = vsel %vm2277, %v2272, %v2146
        %v2304 = vsel %vm2277, %v2273, %v2148
        %v2305 = vsel %vm2277, %v2274, %v2150
        %v2306 = vsel %vm2277, %v2275, %v2152
        %v2307 = vsel %vm2277, %v2276, %v2154
        %v2308 = vld [vmem:[%s3] sm:$0xff]
        %v2309 = vld [vmem:[%s3 + $0x8] sm:$0xff]
        %v2310 = vld [vmem:[%s3 + $0x10] sm:$0xff]
        %v2311 = vld [vmem:[%s3 + $0x18] sm:$0xff]
        %v2312 = vld [vmem:[%s3 + $0x20] sm:$0xff]
        %v2315 = vrot.slane %v1474, 1
        %v2316 = vrot.slane %v1405, 1
        %v2317 = vsel %vm421, %v2315, %v2316
        %v2318 = vrot.slane %v1491, 1
        %v2319 = vsel %vm421, %v2316, %v2318
        %v2320 = vrot.slane %v1474, 2
        %v2321 = vrot.slane %v1405, 2
        %v2322 = vsel %vm566, %v2320, %v2321
        %v2323 = vrot.slane %v1491, 2
        %v2324 = vsel %vm566, %v2321, %v2323
        %v2325 = vrot.slane %v1474, 3
        %v2326 = vrot.slane %v1405, 3
        %v2327 = vsel %vm1673, %v2325, %v2326
        %v2328 = vrot.slane %v1491, 3
        %v2329 = vsel %vm1673, %v2326, %v2328
        %v2330 = vrot.slane %v1474, 4
        %v2331 = vrot.slane %v1405, 4
        %v2332 = vsel %vm1749, %v2330, %v2331
        %v2333 = vrot.slane %v1491, 4
        %v2334 = vsel %vm1749, %v2331, %v2333
        %2335 = vrot.lane.b32.xlu0 %v2317, 8
        %v2336 = vpop.permute.xlu0 %2335
        %2337 = vrot.lane.b32.xlu0 %v2319, 8
        %v2338 = vpop.permute.xlu0 %2337
        %2341 = vrot.lane.b32.xlu0 %v2322, 16
        %v2342 = vpop.permute.xlu0 %2341
        %2343 = vrot.lane.b32.xlu0 %v2324, 16
        %v2344 = vpop.permute.xlu0 %2343
        %2347 = vrot.lane.b32.xlu0 %v2327, 24
        %v2348 = vpop.permute.xlu0 %2347
        %2349 = vrot.lane.b32.xlu0 %v2329, 24
        %v2350 = vpop.permute.xlu0 %2349
        %2353 = vrot.lane.b32.xlu0 %v2332, 32
        %v2354 = vpop.permute.xlu0 %2353
        %2355 = vrot.lane.b32.xlu0 %v2334, 32
        %v2356 = vpop.permute.xlu0 %2355
        %v2359 = vsel %vm938, %v1474, %v2336
        %v2360 = vsel %vm938, %v1405, %v2338
        %v2361 = vsel %vm2215, %v2359, %v2342
        %v2362 = vsel %vm2215, %v2360, %v2344
        %v2363 = vsel %vm2246, %v2361, %v2348
        %v2364 = vsel %vm2246, %v2362, %v2350
        %v2365 = vsel %vm2277, %v2363, %v2354
        %v2366 = vsel %vm2277, %v2364, %v2356
        %s2367 = scalar_lea.vmem %s3, 40
        %v2368 = vld [vmem:[%s2367] sm:$0xff]
        %v2369 = vld [vmem:[%s2367 + $0x8] sm:$0xff]
        %v2370 = vld [vmem:[%s2367 + $0x10] sm:$0xff]
        %v2371 = vld [vmem:[%s2367 + $0x18] sm:$0xff]
        %v2372 = vld [vmem:[%s2367 + $0x20] sm:$0xff]
        %vm2373 = vcmask 326656
        %v2375 = vsel %vm2373, %v2278, 0
        %v2378 = vsel %vm2373, %v2279, 0
        %v2381 = vsel %vm2373, %v2280, 0
        %v2384 = vsel %vm2373, %v2281, 0
        %v2387 = vsel %vm2373, %v2282, 0
        %v2390 = vsel %vm2373, %v2283, 0
        %v2393 = vsel %vm2373, %v2284, 0
        %v2396 = vsel %vm2373, %v2285, 0
        %v2399 = vsel %vm2373, %v2286, 0
        %v2402 = vsel %vm2373, %v2287, 0
        %v2405 = vsel %vm2373, %v2288, 0
        %v2408 = vsel %vm2373, %v2289, 0
        %v2411 = vsel %vm2373, %v2290, 0
        %v2414 = vsel %vm2373, %v2291, 0
        %v2417 = vsel %vm2373, %v2292, 0
        %v2420 = vsel %vm2373, %v2293, 0
        %v2423 = vsel %vm2373, %v2294, 0
        %v2426 = vsel %vm2373, %v2295, 0
        %v2429 = vsel %vm2373, %v2296, 0
        %v2432 = vsel %vm2373, %v2297, 0
        %v2435 = vsel %vm2373, %v2298, 0
        %v2438 = vsel %vm2373, %v2299, 0
        %v2441 = vsel %vm2373, %v2300, 0
        %v2444 = vsel %vm2373, %v2301, 0
        %v2447 = vsel %vm2373, %v2302, 0
        %v2450 = vsel %vm2373, %v2303, 0
        %v2453 = vsel %vm2373, %v2304, 0
        %v2456 = vsel %vm2373, %v2305, 0
        %v2459 = vsel %vm2373, %v2306, 0
        %v2462 = vsel %vm2373, %v2307, 0
        %v2465 = vsel %vm2373, %v2365, 0
        %v2468 = vsel %vm2373, %v2366, 0
        %2470 = vmatpush.msra.mxu0 0.0
        %2471 = vmatpush.msra.mxu0 0.0
        %2472 = vmatpush.msra.mxu0 0.0
        %2473 = vmatpush.msra.mxu0 0.0
        %2474 = vmatpush.msra.mxu0 0.0
        %2475 = vmatpush.msra.mxu0 0.0
        %2476 = vmatpush.msra.mxu0 0.0
        %2477 = vmatpush.msra.mxu0 0.0
        %2478 = vmatpush.msra.mxu0 0.0
        %2479 = vmatpush.msra.mxu0 0.0
        %2480 = vmatpush.msra.mxu0 0.0
        %2481 = vmatpush.msra.mxu0 %v2372
        %2482 = vmatpush.msra.mxu0 %v2371
        %2483 = vmatpush.msra.mxu0 %v2370
        %2484 = vmatpush.msra.mxu0 %v2369
        %2485 = vmatpush.msra.mxu0 %v2368
        %2486 = vmatmul.f32.gmra.mxu0 %v2375
        %v2487 = vpop.f32.mrf.mxu0
        %v2488 = vadd.f32 0.0, %v2487
        %2489 = vmatmul.f32.gmra.mxu0 %v2378
        %v2490 = vpop.f32.mrf.mxu0
        %v2491 = vadd.f32 0.0, %v2490
        %2492 = vmatmul.f32.gmra.mxu0 %v2381
        %v2493 = vpop.f32.mrf.mxu0
        %v2494 = vadd.f32 0.0, %v2493
        %2495 = vmatmul.f32.gmra.mxu0 %v2384
        %v2496 = vpop.f32.mrf.mxu0
        %v2497 = vadd.f32 0.0, %v2496
        %2498 = vmatmul.f32.gmra.mxu0 %v2387
        %v2499 = vpop.f32.mrf.mxu0
        %v2500 = vadd.f32 0.0, %v2499
        %2501 = vmatmul.f32.gmra.mxu0 %v2390
        %v2502 = vpop.f32.mrf.mxu0
        %v2503 = vadd.f32 0.0, %v2502
        %2504 = vmatmul.f32.gmra.mxu0 %v2393
        %v2505 = vpop.f32.mrf.mxu0
        %v2506 = vadd.f32 0.0, %v2505
        %2507 = vmatmul.f32.gmra.mxu0 %v2396
        %v2508 = vpop.f32.mrf.mxu0
        %v2509 = vadd.f32 0.0, %v2508
        %2510 = vmatmul.f32.gmra.mxu0 %v2399
        %v2511 = vpop.f32.mrf.mxu0
        %v2512 = vadd.f32 0.0, %v2511
        %2513 = vmatmul.f32.gmra.mxu0 %v2402
        %v2514 = vpop.f32.mrf.mxu0
        %v2515 = vadd.f32 0.0, %v2514
        %2516 = vmatmul.f32.gmra.mxu0 %v2405
        %v2517 = vpop.f32.mrf.mxu0
        %v2518 = vadd.f32 0.0, %v2517
        %2519 = vmatmul.f32.gmra.mxu0 %v2408
        %v2520 = vpop.f32.mrf.mxu0
        %v2521 = vadd.f32 0.0, %v2520
        %2522 = vmatmul.f32.gmra.mxu0 %v2411
        %v2523 = vpop.f32.mrf.mxu0
        %v2524 = vadd.f32 0.0, %v2523
        %2525 = vmatmul.f32.gmra.mxu0 %v2414
        %v2526 = vpop.f32.mrf.mxu0
        %v2527 = vadd.f32 0.0, %v2526
        %2528 = vmatmul.f32.gmra.mxu0 %v2417
        %v2529 = vpop.f32.mrf.mxu0
        %v2530 = vadd.f32 0.0, %v2529
        %2531 = vmatmul.f32.gmra.mxu0 %v2420
        %v2532 = vpop.f32.mrf.mxu0
        %v2533 = vadd.f32 0.0, %v2532
        %2534 = vmatmul.f32.gmra.mxu0 %v2423
        %v2535 = vpop.f32.mrf.mxu0
        %v2536 = vadd.f32 0.0, %v2535
        %2537 = vmatmul.f32.gmra.mxu0 %v2426
        %v2538 = vpop.f32.mrf.mxu0
        %v2539 = vadd.f32 0.0, %v2538
        %2540 = vmatmul.f32.gmra.mxu0 %v2429
        %v2541 = vpop.f32.mrf.mxu0
        %v2542 = vadd.f32 0.0, %v2541
        %2543 = vmatmul.f32.gmra.mxu0 %v2432
        %v2544 = vpop.f32.mrf.mxu0
        %v2545 = vadd.f32 0.0, %v2544
        %2546 = vmatmul.f32.gmra.mxu0 %v2435
        %v2547 = vpop.f32.mrf.mxu0
        %v2548 = vadd.f32 0.0, %v2547
        %2549 = vmatmul.f32.gmra.mxu0 %v2438
        %v2550 = vpop.f32.mrf.mxu0
        %v2551 = vadd.f32 0.0, %v2550
        %2552 = vmatmul.f32.gmra.mxu0 %v2441
        %v2553 = vpop.f32.mrf.mxu0
        %v2554 = vadd.f32 0.0, %v2553
        %2555 = vmatmul.f32.gmra.mxu0 %v2444
        %v2556 = vpop.f32.mrf.mxu0
        %v2557 = vadd.f32 0.0, %v2556
        %2558 = vmatmul.f32.gmra.mxu0 %v2447
        %v2559 = vpop.f32.mrf.mxu0
        %v2560 = vadd.f32 0.0, %v2559
        %2561 = vmatmul.f32.gmra.mxu0 %v2450
        %v2562 = vpop.f32.mrf.mxu0
        %v2563 = vadd.f32 0.0, %v2562
        %2564 = vmatmul.f32.gmra.mxu0 %v2453
        %v2565 = vpop.f32.mrf.mxu0
        %v2566 = vadd.f32 0.0, %v2565
        %2567 = vmatmul.f32.gmra.mxu0 %v2456
        %v2568 = vpop.f32.mrf.mxu0
        %v2569 = vadd.f32 0.0, %v2568
        %2570 = vmatmul.f32.gmra.mxu0 %v2459
        %v2571 = vpop.f32.mrf.mxu0
        %v2572 = vadd.f32 0.0, %v2571
        %2573 = vmatmul.f32.gmra.mxu0 %v2462
        %v2574 = vpop.f32.mrf.mxu0
        %v2575 = vadd.f32 0.0, %v2574
        %2576 = vmatmul.f32.gmra.mxu0 %v2465
        %v2577 = vpop.f32.mrf.mxu0
        %v2578 = vadd.f32 0.0, %v2577
        %2579 = vmatmul.f32.gmra.mxu0 %v2468
        %v2580 = vpop.f32.mrf.mxu0
        %v2581 = vadd.f32 0.0, %v2580
        %2582 = vdwg.mxu0
        %2583 = vmatpush.msra.mxu0 0.0
        %2584 = vmatpush.msra.mxu0 0.0
        %2585 = vmatpush.msra.mxu0 0.0
        %2586 = vmatpush.msra.mxu0 0.0
        %2587 = vmatpush.msra.mxu0 0.0
        %2588 = vmatpush.msra.mxu0 0.0
        %2589 = vmatpush.msra.mxu0 0.0
        %2590 = vmatpush.msra.mxu0 0.0
        %2591 = vmatpush.msra.mxu0 0.0
        %2592 = vmatpush.msra.mxu0 0.0
        %2593 = vmatpush.msra.mxu0 0.0
        %2594 = vmatpush.msra.mxu0 %v2312
        %2595 = vmatpush.msra.mxu0 %v2311
        %2596 = vmatpush.msra.mxu0 %v2310
        %2597 = vmatpush.msra.mxu0 %v2309
        %2598 = vmatpush.msra.mxu0 %v2308
        %2599 = vmatmul.f32.gmra.mxu0 %v2375
        %v2600 = vpop.f32.mrf.mxu0
        %v2601 = vadd.f32 %v2488, %v2600
        %2602 = vmatmul.f32.gmra.mxu0 %v2378
        %v2603 = vpop.f32.mrf.mxu0
        %v2604 = vadd.f32 %v2491, %v2603
        %2605 = vmatmul.f32.gmra.mxu0 %v2375
        %v2606 = vpop.f32.mrf.mxu0
        %v2607 = vadd.f32 %v2494, %v2606
        %2608 = vmatmul.f32.gmra.mxu0 %v2378
        %v2609 = vpop.f32.mrf.mxu0
        %v2610 = vadd.f32 %v2497, %v2609
        %2611 = vmatmul.f32.gmra.mxu0 %v2381
        %v2612 = vpop.f32.mrf.mxu0
        %v2613 = vadd.f32 %v2500, %v2612
        %2614 = vmatmul.f32.gmra.mxu0 %v2384
        %v2615 = vpop.f32.mrf.mxu0
        %v2616 = vadd.f32 %v2503, %v2615
        %2617 = vmatmul.f32.gmra.mxu0 %v2387
        %v2618 = vpop.f32.mrf.mxu0
        %v2619 = vadd.f32 %v2506, %v2618
        %2620 = vmatmul.f32.gmra.mxu0 %v2390
        %v2621 = vpop.f32.mrf.mxu0
        %v2622 = vadd.f32 %v2509, %v2621
        %2623 = vmatmul.f32.gmra.mxu0 %v2393
        %v2624 = vpop.f32.mrf.mxu0
        %v2625 = vadd.f32 %v2512, %v2624
        %2626 = vmatmul.f32.gmra.mxu0 %v2396
        %v2627 = vpop.f32.mrf.mxu0
        %v2628 = vadd.f32 %v2515, %v2627
        %2629 = vmatmul.f32.gmra.mxu0 %v2399
        %v2630 = vpop.f32.mrf.mxu0
        %v2631 = vadd.f32 %v2518, %v2630
        %2632 = vmatmul.f32.gmra.mxu0 %v2402
        %v2633 = vpop.f32.mrf.mxu0
        %v2634 = vadd.f32 %v2521, %v2633
        %2635 = vmatmul.f32.gmra.mxu0 %v2405
        %v2636 = vpop.f32.mrf.mxu0
        %v2637 = vadd.f32 %v2524, %v2636
        %2638 = vmatmul.f32.gmra.mxu0 %v2408
        %v2639 = vpop.f32.mrf.mxu0
        %v2640 = vadd.f32 %v2527, %v2639
        %2641 = vmatmul.f32.gmra.mxu0 %v2411
        %v2642 = vpop.f32.mrf.mxu0
        %v2643 = vadd.f32 %v2530, %v2642
        %2644 = vmatmul.f32.gmra.mxu0 %v2414
        %v2645 = vpop.f32.mrf.mxu0
        %v2646 = vadd.f32 %v2533, %v2645
        %2647 = vmatmul.f32.gmra.mxu0 %v2417
        %v2648 = vpop.f32.mrf.mxu0
        %v2649 = vadd.f32 %v2536, %v2648
        %2650 = vmatmul.f32.gmra.mxu0 %v2420
        %v2651 = vpop.f32.mrf.mxu0
        %v2652 = vadd.f32 %v2539, %v2651
        %2653 = vmatmul.f32.gmra.mxu0 %v2423
        %v2654 = vpop.f32.mrf.mxu0
        %v2655 = vadd.f32 %v2542, %v2654
        %2656 = vmatmul.f32.gmra.mxu0 %v2426
        %v2657 = vpop.f32.mrf.mxu0
        %v2658 = vadd.f32 %v2545, %v2657
        %2659 = vmatmul.f32.gmra.mxu0 %v2429
        %v2660 = vpop.f32.mrf.mxu0
        %v2661 = vadd.f32 %v2548, %v2660
        %2662 = vmatmul.f32.gmra.mxu0 %v2432
        %v2663 = vpop.f32.mrf.mxu0
        %v2664 = vadd.f32 %v2551, %v2663
        %2665 = vmatmul.f32.gmra.mxu0 %v2435
        %v2666 = vpop.f32.mrf.mxu0
        %v2667 = vadd.f32 %v2554, %v2666
        %2668 = vmatmul.f32.gmra.mxu0 %v2438
        %v2669 = vpop.f32.mrf.mxu0
        %v2670 = vadd.f32 %v2557, %v2669
        %2671 = vmatmul.f32.gmra.mxu0 %v2441
        %v2672 = vpop.f32.mrf.mxu0
        %v2673 = vadd.f32 %v2560, %v2672
        %2674 = vmatmul.f32.gmra.mxu0 %v2444
        %v2675 = vpop.f32.mrf.mxu0
        %v2676 = vadd.f32 %v2563, %v2675
        %2677 = vmatmul.f32.gmra.mxu0 %v2447
        %v2678 = vpop.f32.mrf.mxu0
        %v2679 = vadd.f32 %v2566, %v2678
        %2680 = vmatmul.f32.gmra.mxu0 %v2450
        %v2681 = vpop.f32.mrf.mxu0
        %v2682 = vadd.f32 %v2569, %v2681
        %2683 = vmatmul.f32.gmra.mxu0 %v2453
        %v2684 = vpop.f32.mrf.mxu0
        %v2685 = vadd.f32 %v2572, %v2684
        %2686 = vmatmul.f32.gmra.mxu0 %v2456
        %v2687 = vpop.f32.mrf.mxu0
        %v2688 = vadd.f32 %v2575, %v2687
        %2689 = vmatmul.f32.gmra.mxu0 %v2459
        %v2690 = vpop.f32.mrf.mxu0
        %v2691 = vadd.f32 %v2578, %v2690
        %2692 = vmatmul.f32.gmra.mxu0 %v2462
        %v2693 = vpop.f32.mrf.mxu0
        %v2694 = vadd.f32 %v2581, %v2693
        %2695 = vdwg.mxu0
        %v2698 = vrot.slane %v1475, 1
        %v2699 = vrot.slane %v1408, 1
        %v2700 = vsel %vm421, %v2698, %v2699
        %v2701 = vrot.slane %v1492, 1
        %v2702 = vsel %vm421, %v2699, %v2701
        %v2703 = vrot.slane %v1475, 2
        %v2704 = vrot.slane %v1408, 2
        %v2705 = vsel %vm566, %v2703, %v2704
        %v2706 = vrot.slane %v1492, 2
        %v2707 = vsel %vm566, %v2704, %v2706
        %v2708 = vrot.slane %v1475, 3
        %v2709 = vrot.slane %v1408, 3
        %v2710 = vsel %vm1673, %v2708, %v2709
        %v2711 = vrot.slane %v1492, 3
        %v2712 = vsel %vm1673, %v2709, %v2711
        %v2713 = vrot.slane %v1475, 4
        %v2714 = vrot.slane %v1408, 4
        %v2715 = vsel %vm1749, %v2713, %v2714
        %v2716 = vrot.slane %v1492, 4
        %v2717 = vsel %vm1749, %v2714, %v2716
        %2718 = vrot.lane.b32.xlu0 %v2700, 8
        %v2719 = vpop.permute.xlu0 %2718
        %2720 = vrot.lane.b32.xlu0 %v2702, 8
        %v2721 = vpop.permute.xlu0 %2720
        %2724 = vrot.lane.b32.xlu0 %v2705, 16
        %v2725 = vpop.permute.xlu0 %2724
        %2726 = vrot.lane.b32.xlu0 %v2707, 16
        %v2727 = vpop.permute.xlu0 %2726
        %2730 = vrot.lane.b32.xlu0 %v2710, 24
        %v2731 = vpop.permute.xlu0 %2730
        %2732 = vrot.lane.b32.xlu0 %v2712, 24
        %v2733 = vpop.permute.xlu0 %2732
        %2736 = vrot.lane.b32.xlu0 %v2715, 32
        %v2737 = vpop.permute.xlu0 %2736
        %2738 = vrot.lane.b32.xlu0 %v2717, 32
        %v2739 = vpop.permute.xlu0 %2738
        %v2742 = vsel %vm938, %v1475, %v2719
        %v2743 = vsel %vm938, %v1408, %v2721
        %v2744 = vsel %vm2215, %v2742, %v2725
        %v2745 = vsel %vm2215, %v2743, %v2727
        %v2746 = vsel %vm2246, %v2744, %v2731
        %v2747 = vsel %vm2246, %v2745, %v2733
        %v2748 = vsel %vm2277, %v2746, %v2737
        %v2749 = vsel %vm2277, %v2747, %v2739
        %s2750 = scalar_lea.vmem %s3, 80
        %v2751 = vld [vmem:[%s2750] sm:$0xff]
        %v2752 = vld [vmem:[%s2750 + $0x8] sm:$0xff]
        %v2753 = vld [vmem:[%s2750 + $0x10] sm:$0xff]
        %v2754 = vld [vmem:[%s2750 + $0x18] sm:$0xff]
        %v2755 = vld [vmem:[%s2750 + $0x20] sm:$0xff]
        %v2757 = vsel %vm2373, %v2748, 0
        %v2760 = vsel %vm2373, %v2749, 0
        %2762 = vmatpush.msra.mxu0 0.0
        %2763 = vmatpush.msra.mxu0 0.0
        %2764 = vmatpush.msra.mxu0 0.0
        %2765 = vmatpush.msra.mxu0 0.0
        %2766 = vmatpush.msra.mxu0 0.0
        %2767 = vmatpush.msra.mxu0 0.0
        %2768 = vmatpush.msra.mxu0 0.0
        %2769 = vmatpush.msra.mxu0 0.0
        %2770 = vmatpush.msra.mxu0 0.0
        %2771 = vmatpush.msra.mxu0 0.0
        %2772 = vmatpush.msra.mxu0 0.0
        %2773 = vmatpush.msra.mxu0 %v2755
        %2774 = vmatpush.msra.mxu0 %v2754
        %2775 = vmatpush.msra.mxu0 %v2753
        %2776 = vmatpush.msra.mxu0 %v2752
        %2777 = vmatpush.msra.mxu0 %v2751
        %2778 = vmatmul.f32.gmra.mxu0 %v2381
        %v2779 = vpop.f32.mrf.mxu0
        %v2780 = vadd.f32 0.0, %v2779
        %2781 = vmatmul.f32.gmra.mxu0 %v2384
        %v2782 = vpop.f32.mrf.mxu0
        %v2783 = vadd.f32 0.0, %v2782
        %2784 = vmatmul.f32.gmra.mxu0 %v2387
        %v2785 = vpop.f32.mrf.mxu0
        %v2786 = vadd.f32 0.0, %v2785
        %2787 = vmatmul.f32.gmra.mxu0 %v2390
        %v2788 = vpop.f32.mrf.mxu0
        %v2789 = vadd.f32 0.0, %v2788
        %2790 = vmatmul.f32.gmra.mxu0 %v2393
        %v2791 = vpop.f32.mrf.mxu0
        %v2792 = vadd.f32 0.0, %v2791
        %2793 = vmatmul.f32.gmra.mxu0 %v2396
        %v2794 = vpop.f32.mrf.mxu0
        %v2795 = vadd.f32 0.0, %v2794
        %2796 = vmatmul.f32.gmra.mxu0 %v2399
        %v2797 = vpop.f32.mrf.mxu0
        %v2798 = vadd.f32 0.0, %v2797
        %2799 = vmatmul.f32.gmra.mxu0 %v2402
        %v2800 = vpop.f32.mrf.mxu0
        %v2801 = vadd.f32 0.0, %v2800
        %2802 = vmatmul.f32.gmra.mxu0 %v2405
        %v2803 = vpop.f32.mrf.mxu0
        %v2804 = vadd.f32 0.0, %v2803
        %2805 = vmatmul.f32.gmra.mxu0 %v2408
        %v2806 = vpop.f32.mrf.mxu0
        %v2807 = vadd.f32 0.0, %v2806
        %2808 = vmatmul.f32.gmra.mxu0 %v2411
        %v2809 = vpop.f32.mrf.mxu0
        %v2810 = vadd.f32 0.0, %v2809
        %2811 = vmatmul.f32.gmra.mxu0 %v2414
        %v2812 = vpop.f32.mrf.mxu0
        %v2813 = vadd.f32 0.0, %v2812
        %2814 = vmatmul.f32.gmra.mxu0 %v2417
        %v2815 = vpop.f32.mrf.mxu0
        %v2816 = vadd.f32 0.0, %v2815
        %2817 = vmatmul.f32.gmra.mxu0 %v2420
        %v2818 = vpop.f32.mrf.mxu0
        %v2819 = vadd.f32 0.0, %v2818
        %2820 = vmatmul.f32.gmra.mxu0 %v2423
        %v2821 = vpop.f32.mrf.mxu0
        %v2822 = vadd.f32 0.0, %v2821
        %2823 = vmatmul.f32.gmra.mxu0 %v2426
        %v2824 = vpop.f32.mrf.mxu0
        %v2825 = vadd.f32 0.0, %v2824
        %2826 = vmatmul.f32.gmra.mxu0 %v2429
        %v2827 = vpop.f32.mrf.mxu0
        %v2828 = vadd.f32 0.0, %v2827
        %2829 = vmatmul.f32.gmra.mxu0 %v2432
        %v2830 = vpop.f32.mrf.mxu0
        %v2831 = vadd.f32 0.0, %v2830
        %2832 = vmatmul.f32.gmra.mxu0 %v2435
        %v2833 = vpop.f32.mrf.mxu0
        %v2834 = vadd.f32 0.0, %v2833
        %2835 = vmatmul.f32.gmra.mxu0 %v2438
        %v2836 = vpop.f32.mrf.mxu0
        %v2837 = vadd.f32 0.0, %v2836
        %2838 = vmatmul.f32.gmra.mxu0 %v2441
        %v2839 = vpop.f32.mrf.mxu0
        %v2840 = vadd.f32 0.0, %v2839
        %2841 = vmatmul.f32.gmra.mxu0 %v2444
        %v2842 = vpop.f32.mrf.mxu0
        %v2843 = vadd.f32 0.0, %v2842
        %2844 = vmatmul.f32.gmra.mxu0 %v2447
        %v2845 = vpop.f32.mrf.mxu0
        %v2846 = vadd.f32 0.0, %v2845
        %2847 = vmatmul.f32.gmra.mxu0 %v2450
        %v2848 = vpop.f32.mrf.mxu0
        %v2849 = vadd.f32 0.0, %v2848
        %2850 = vmatmul.f32.gmra.mxu0 %v2453
        %v2851 = vpop.f32.mrf.mxu0
        %v2852 = vadd.f32 0.0, %v2851
        %2853 = vmatmul.f32.gmra.mxu0 %v2456
        %v2854 = vpop.f32.mrf.mxu0
        %v2855 = vadd.f32 0.0, %v2854
        %2856 = vmatmul.f32.gmra.mxu0 %v2459
        %v2857 = vpop.f32.mrf.mxu0
        %v2858 = vadd.f32 0.0, %v2857
        %2859 = vmatmul.f32.gmra.mxu0 %v2462
        %v2860 = vpop.f32.mrf.mxu0
        %v2861 = vadd.f32 0.0, %v2860
        %2862 = vmatmul.f32.gmra.mxu0 %v2465
        %v2863 = vpop.f32.mrf.mxu0
        %v2864 = vadd.f32 0.0, %v2863
        %2865 = vmatmul.f32.gmra.mxu0 %v2468
        %v2866 = vpop.f32.mrf.mxu0
        %v2867 = vadd.f32 0.0, %v2866
        %2868 = vmatmul.f32.gmra.mxu0 %v2757
        %v2869 = vpop.f32.mrf.mxu0
        %v2870 = vadd.f32 0.0, %v2869
        %2871 = vmatmul.f32.gmra.mxu0 %v2760
        %v2872 = vpop.f32.mrf.mxu0
        %v2873 = vadd.f32 0.0, %v2872
        %2874 = vdwg.mxu0
        %v2875 = vadd.f32 %v2601, %v2780
        %v2876 = vadd.f32 %v2604, %v2783
        %v2877 = vadd.f32 %v2607, %v2786
        %v2878 = vadd.f32 %v2610, %v2789
        %v2879 = vadd.f32 %v2613, %v2792
        %v2880 = vadd.f32 %v2616, %v2795
        %v2881 = vadd.f32 %v2619, %v2798
        %v2882 = vadd.f32 %v2622, %v2801
        %v2883 = vadd.f32 %v2625, %v2804
        %v2884 = vadd.f32 %v2628, %v2807
        %v2885 = vadd.f32 %v2631, %v2810
        %v2886 = vadd.f32 %v2634, %v2813
        %v2887 = vadd.f32 %v2637, %v2816
        %v2888 = vadd.f32 %v2640, %v2819
        %v2889 = vadd.f32 %v2643, %v2822
        %v2890 = vadd.f32 %v2646, %v2825
        %v2891 = vadd.f32 %v2649, %v2828
        %v2892 = vadd.f32 %v2652, %v2831
        %v2893 = vadd.f32 %v2655, %v2834
        %v2894 = vadd.f32 %v2658, %v2837
        %v2895 = vadd.f32 %v2661, %v2840
        %v2896 = vadd.f32 %v2664, %v2843
        %v2897 = vadd.f32 %v2667, %v2846
        %v2898 = vadd.f32 %v2670, %v2849
        %v2899 = vadd.f32 %v2673, %v2852
        %v2900 = vadd.f32 %v2676, %v2855
        %v2901 = vadd.f32 %v2679, %v2858
        %v2902 = vadd.f32 %v2682, %v2861
        %v2903 = vadd.f32 %v2685, %v2864
        %v2904 = vadd.f32 %v2688, %v2867
        %v2905 = vadd.f32 %v2691, %v2870
        %v2906 = vadd.f32 %v2694, %v2873
        %s2907 = scalar_lea.vmem %s3, 120
        %v2908 = vld [vmem:[%s2907] sm:$0xff]
        %v2909 = vld [vmem:[%s2907 + $0x8] sm:$0xff]
        %v2910 = vld [vmem:[%s2907 + $0x10] sm:$0xff]
        %v2911 = vld [vmem:[%s2907 + $0x18] sm:$0xff]
        %v2912 = vld [vmem:[%s2907 + $0x20] sm:$0xff]
        %2913 = vmatpush.msra.mxu0 0.0
        %2914 = vmatpush.msra.mxu0 0.0
        %2915 = vmatpush.msra.mxu0 0.0
        %2916 = vmatpush.msra.mxu0 0.0
        %2917 = vmatpush.msra.mxu0 0.0
        %2918 = vmatpush.msra.mxu0 0.0
        %2919 = vmatpush.msra.mxu0 0.0
        %2920 = vmatpush.msra.mxu0 0.0
        %2921 = vmatpush.msra.mxu0 0.0
        %2922 = vmatpush.msra.mxu0 0.0
        %2923 = vmatpush.msra.mxu0 0.0
        %2924 = vmatpush.msra.mxu0 %v2912
        %2925 = vmatpush.msra.mxu0 %v2911
        %2926 = vmatpush.msra.mxu0 %v2910
        %2927 = vmatpush.msra.mxu0 %v2909
        %2928 = vmatpush.msra.mxu0 %v2908
        %2929 = vmatmul.f32.gmra.mxu0 %v2387
        %v2930 = vpop.f32.mrf.mxu0
        %v2931 = vadd.f32 0.0, %v2930
        %2932 = vmatmul.f32.gmra.mxu0 %v2390
        %v2933 = vpop.f32.mrf.mxu0
        %v2934 = vadd.f32 0.0, %v2933
        %2935 = vmatmul.f32.gmra.mxu0 %v2393
        %v2936 = vpop.f32.mrf.mxu0
        %v2937 = vadd.f32 0.0, %v2936
        %2938 = vmatmul.f32.gmra.mxu0 %v2396
        %v2939 = vpop.f32.mrf.mxu0
        %v2940 = vadd.f32 0.0, %v2939
        %2941 = vmatmul.f32.gmra.mxu0 %v2399
        %v2942 = vpop.f32.mrf.mxu0
        %v2943 = vadd.f32 0.0, %v2942
        %2944 = vmatmul.f32.gmra.mxu0 %v2402
        %v2945 = vpop.f32.mrf.mxu0
        %v2946 = vadd.f32 0.0, %v2945
        %2947 = vmatmul.f32.gmra.mxu0 %v2405
        %v2948 = vpop.f32.mrf.mxu0
        %v2949 = vadd.f32 0.0, %v2948
        %2950 = vmatmul.f32.gmra.mxu0 %v2408
        %v2951 = vpop.f32.mrf.mxu0
        %v2952 = vadd.f32 0.0, %v2951
        %2953 = vmatmul.f32.gmra.mxu0 %v2411
        %v2954 = vpop.f32.mrf.mxu0
        %v2955 = vadd.f32 0.0, %v2954
        %2956 = vmatmul.f32.gmra.mxu0 %v2414
        %v2957 = vpop.f32.mrf.mxu0
        %v2958 = vadd.f32 0.0, %v2957
        %2959 = vmatmul.f32.gmra.mxu0 %v2417
        %v2960 = vpop.f32.mrf.mxu0
        %v2961 = vadd.f32 0.0, %v2960
        %2962 = vmatmul.f32.gmra.mxu0 %v2420
        %v2963 = vpop.f32.mrf.mxu0
        %v2964 = vadd.f32 0.0, %v2963
        %2965 = vmatmul.f32.gmra.mxu0 %v2423
        %v2966 = vpop.f32.mrf.mxu0
        %v2967 = vadd.f32 0.0, %v2966
        %2968 = vmatmul.f32.gmra.mxu0 %v2426
        %v2969 = vpop.f32.mrf.mxu0
        %v2970 = vadd.f32 0.0, %v2969
        %2971 = vmatmul.f32.gmra.mxu0 %v2429
        %v2972 = vpop.f32.mrf.mxu0
        %v2973 = vadd.f32 0.0, %v2972
        %2974 = vmatmul.f32.gmra.mxu0 %v2432
        %v2975 = vpop.f32.mrf.mxu0
        %v2976 = vadd.f32 0.0, %v2975
        %2977 = vmatmul.f32.gmra.mxu0 %v2435
        %v2978 = vpop.f32.mrf.mxu0
        %v2979 = vadd.f32 0.0, %v2978
        %2980 = vmatmul.f32.gmra.mxu0 %v2438
        %v2981 = vpop.f32.mrf.mxu0
        %v2982 = vadd.f32 0.0, %v2981
        %2983 = vmatmul.f32.gmra.mxu0 %v2441
        %v2984 = vpop.f32.mrf.mxu0
        %v2985 = vadd.f32 0.0, %v2984
        %2986 = vmatmul.f32.gmra.mxu0 %v2444
        %v2987 = vpop.f32.mrf.mxu0
        %v2988 = vadd.f32 0.0, %v2987
        %2989 = vmatmul.f32.gmra.mxu0 %v2447
        %v2990 = vpop.f32.mrf.mxu0
        %v2991 = vadd.f32 0.0, %v2990
        %2992 = vmatmul.f32.gmra.mxu0 %v2450
        %v2993 = vpop.f32.mrf.mxu0
        %v2994 = vadd.f32 0.0, %v2993
        %2995 = vmatmul.f32.gmra.mxu0 %v2453
        %v2996 = vpop.f32.mrf.mxu0
        %v2997 = vadd.f32 0.0, %v2996
        %2998 = vmatmul.f32.gmra.mxu0 %v2456
        %v2999 = vpop.f32.mrf.mxu0
        %v3000 = vadd.f32 0.0, %v2999
        %3001 = vmatmul.f32.gmra.mxu0 %v2459
        %v3002 = vpop.f32.mrf.mxu0
        %v3003 = vadd.f32 0.0, %v3002
        %3004 = vmatmul.f32.gmra.mxu0 %v2462
        %v3005 = vpop.f32.mrf.mxu0
        %v3006 = vadd.f32 0.0, %v3005
        %3007 = vmatmul.f32.gmra.mxu0 %v2465
        %v3008 = vpop.f32.mrf.mxu0
        %v3009 = vadd.f32 0.0, %v3008
        %3010 = vmatmul.f32.gmra.mxu0 %v2468
        %v3011 = vpop.f32.mrf.mxu0
        %v3012 = vadd.f32 0.0, %v3011
        %3013 = vmatmul.f32.gmra.mxu0 %v2757
        %v3014 = vpop.f32.mrf.mxu0
        %v3015 = vadd.f32 0.0, %v3014
        %3016 = vmatmul.f32.gmra.mxu0 %v2760
        %v3017 = vpop.f32.mrf.mxu0
        %v3018 = vadd.f32 0.0, %v3017
        %3019 = vmatmul.f32.gmra.mxu0 %v2375
        %v3020 = vpop.f32.mrf.mxu0
        %v3021 = vadd.f32 0.0, %v3020
        %3022 = vmatmul.f32.gmra.mxu0 %v2378
        %v3023 = vpop.f32.mrf.mxu0
        %v3024 = vadd.f32 0.0, %v3023
        %3025 = vdwg.mxu0
        %v3026 = vadd.f32 %v2875, %v2931
        %v3027 = vadd.f32 %v2876, %v2934
        %v3028 = vadd.f32 %v2877, %v2937
        %v3029 = vadd.f32 %v2878, %v2940
        %v3030 = vadd.f32 %v2879, %v2943
        %v3031 = vadd.f32 %v2880, %v2946
        %v3032 = vadd.f32 %v2881, %v2949
        %v3033 = vadd.f32 %v2882, %v2952
        %v3034 = vadd.f32 %v2883, %v2955
        %v3035 = vadd.f32 %v2884, %v2958
        %v3036 = vadd.f32 %v2885, %v2961
        %v3037 = vadd.f32 %v2886, %v2964
        %v3038 = vadd.f32 %v2887, %v2967
        %v3039 = vadd.f32 %v2888, %v2970
        %v3040 = vadd.f32 %v2889, %v2973
        %v3041 = vadd.f32 %v2890, %v2976
        %v3042 = vadd.f32 %v2891, %v2979
        %v3043 = vadd.f32 %v2892, %v2982
        %v3044 = vadd.f32 %v2893, %v2985
        %v3045 = vadd.f32 %v2894, %v2988
        %v3046 = vadd.f32 %v2895, %v2991
        %v3047 = vadd.f32 %v2896, %v2994
        %v3048 = vadd.f32 %v2897, %v2997
        %v3049 = vadd.f32 %v2898, %v3000
        %v3050 = vadd.f32 %v2899, %v3003
        %v3051 = vadd.f32 %v2900, %v3006
        %v3052 = vadd.f32 %v2901, %v3009
        %v3053 = vadd.f32 %v2902, %v3012
        %v3054 = vadd.f32 %v2903, %v3015
        %v3055 = vadd.f32 %v2904, %v3018
        %v3056 = vadd.f32 %v2905, %v3021
        %v3057 = vadd.f32 %v2906, %v3024
        %s3058 = scalar_lea.vmem %s3, 160
        %v3059 = vld [vmem:[%s3058] sm:$0xff]
        %v3060 = vld [vmem:[%s3058 + $0x8] sm:$0xff]
        %v3061 = vld [vmem:[%s3058 + $0x10] sm:$0xff]
        %v3062 = vld [vmem:[%s3058 + $0x18] sm:$0xff]
        %v3063 = vld [vmem:[%s3058 + $0x20] sm:$0xff]
        %3064 = vmatpush.msra.mxu0 0.0
        %3065 = vmatpush.msra.mxu0 0.0
        %3066 = vmatpush.msra.mxu0 0.0
        %3067 = vmatpush.msra.mxu0 0.0
        %3068 = vmatpush.msra.mxu0 0.0
        %3069 = vmatpush.msra.mxu0 0.0
        %3070 = vmatpush.msra.mxu0 0.0
        %3071 = vmatpush.msra.mxu0 0.0
        %3072 = vmatpush.msra.mxu0 0.0
        %3073 = vmatpush.msra.mxu0 0.0
        %3074 = vmatpush.msra.mxu0 0.0
        %3075 = vmatpush.msra.mxu0 %v3063
        %3076 = vmatpush.msra.mxu0 %v3062
        %3077 = vmatpush.msra.mxu0 %v3061
        %3078 = vmatpush.msra.mxu0 %v3060
        %3079 = vmatpush.msra.mxu0 %v3059
        %3080 = vmatmul.f32.gmra.mxu0 %v2393
        %v3081 = vpop.f32.mrf.mxu0
        %v3082 = vadd.f32 0.0, %v3081
        %3083 = vmatmul.f32.gmra.mxu0 %v2396
        %v3084 = vpop.f32.mrf.mxu0
        %v3085 = vadd.f32 0.0, %v3084
        %3086 = vmatmul.f32.gmra.mxu0 %v2399
        %v3087 = vpop.f32.mrf.mxu0
        %v3088 = vadd.f32 0.0, %v3087
        %3089 = vmatmul.f32.gmra.mxu0 %v2402
        %v3090 = vpop.f32.mrf.mxu0
        %v3091 = vadd.f32 0.0, %v3090
        %3092 = vmatmul.f32.gmra.mxu0 %v2405
        %v3093 = vpop.f32.mrf.mxu0
        %v3094 = vadd.f32 0.0, %v3093
        %3095 = vmatmul.f32.gmra.mxu0 %v2408
        %v3096 = vpop.f32.mrf.mxu0
        %v3097 = vadd.f32 0.0, %v3096
        %3098 = vmatmul.f32.gmra.mxu0 %v2411
        %v3099 = vpop.f32.mrf.mxu0
        %v3100 = vadd.f32 0.0, %v3099
        %3101 = vmatmul.f32.gmra.mxu0 %v2414
        %v3102 = vpop.f32.mrf.mxu0
        %v3103 = vadd.f32 0.0, %v3102
        %3104 = vmatmul.f32.gmra.mxu0 %v2417
        %v3105 = vpop.f32.mrf.mxu0
        %v3106 = vadd.f32 0.0, %v3105
        %3107 = vmatmul.f32.gmra.mxu0 %v2420
        %v3108 = vpop.f32.mrf.mxu0
        %v3109 = vadd.f32 0.0, %v3108
        %3110 = vmatmul.f32.gmra.mxu0 %v2423
        %v3111 = vpop.f32.mrf.mxu0
        %v3112 = vadd.f32 0.0, %v3111
        %3113 = vmatmul.f32.gmra.mxu0 %v2426
        %v3114 = vpop.f32.mrf.mxu0
        %v3115 = vadd.f32 0.0, %v3114
        %3116 = vmatmul.f32.gmra.mxu0 %v2429
        %v3117 = vpop.f32.mrf.mxu0
        %v3118 = vadd.f32 0.0, %v3117
        %3119 = vmatmul.f32.gmra.mxu0 %v2432
        %v3120 = vpop.f32.mrf.mxu0
        %v3121 = vadd.f32 0.0, %v3120
        %3122 = vmatmul.f32.gmra.mxu0 %v2435
        %v3123 = vpop.f32.mrf.mxu0
        %v3124 = vadd.f32 0.0, %v3123
        %3125 = vmatmul.f32.gmra.mxu0 %v2438
        %v3126 = vpop.f32.mrf.mxu0
        %v3127 = vadd.f32 0.0, %v3126
        %3128 = vmatmul.f32.gmra.mxu0 %v2441
        %v3129 = vpop.f32.mrf.mxu0
        %v3130 = vadd.f32 0.0, %v3129
        %3131 = vmatmul.f32.gmra.mxu0 %v2444
        %v3132 = vpop.f32.mrf.mxu0
        %v3133 = vadd.f32 0.0, %v3132
        %3134 = vmatmul.f32.gmra.mxu0 %v2447
        %v3135 = vpop.f32.mrf.mxu0
        %v3136 = vadd.f32 0.0, %v3135
        %3137 = vmatmul.f32.gmra.mxu0 %v2450
        %v3138 = vpop.f32.mrf.mxu0
        %v3139 = vadd.f32 0.0, %v3138
        %3140 = vmatmul.f32.gmra.mxu0 %v2453
        %v3141 = vpop.f32.mrf.mxu0
        %v3142 = vadd.f32 0.0, %v3141
        %3143 = vmatmul.f32.gmra.mxu0 %v2456
        %v3144 = vpop.f32.mrf.mxu0
        %v3145 = vadd.f32 0.0, %v3144
        %3146 = vmatmul.f32.gmra.mxu0 %v2459
        %v3147 = vpop.f32.mrf.mxu0
        %v3148 = vadd.f32 0.0, %v3147
        %3149 = vmatmul.f32.gmra.mxu0 %v2462
        %v3150 = vpop.f32.mrf.mxu0
        %v3151 = vadd.f32 0.0, %v3150
        %3152 = vmatmul.f32.gmra.mxu0 %v2465
        %v3153 = vpop.f32.mrf.mxu0
        %v3154 = vadd.f32 0.0, %v3153
        %3155 = vmatmul.f32.gmra.mxu0 %v2468
        %v3156 = vpop.f32.mrf.mxu0
        %v3157 = vadd.f32 0.0, %v3156
        %3158 = vmatmul.f32.gmra.mxu0 %v2757
        %v3159 = vpop.f32.mrf.mxu0
        %v3160 = vadd.f32 0.0, %v3159
        %3161 = vmatmul.f32.gmra.mxu0 %v2760
        %v3162 = vpop.f32.mrf.mxu0
        %v3163 = vadd.f32 0.0, %v3162
        %3164 = vmatmul.f32.gmra.mxu0 %v2375
        %v3165 = vpop.f32.mrf.mxu0
        %v3166 = vadd.f32 0.0, %v3165
        %3167 = vmatmul.f32.gmra.mxu0 %v2378
        %v3168 = vpop.f32.mrf.mxu0
        %v3169 = vadd.f32 0.0, %v3168
        %3170 = vmatmul.f32.gmra.mxu0 %v2375
        %v3171 = vpop.f32.mrf.mxu0
        %v3172 = vadd.f32 0.0, %v3171
        %3173 = vmatmul.f32.gmra.mxu0 %v2378
        %v3174 = vpop.f32.mrf.mxu0
        %v3175 = vadd.f32 0.0, %v3174
        %3176 = vdwg.mxu0
        %v3177 = vadd.f32 %v3026, %v3082
        %v3178 = vadd.f32 %v3027, %v3085
        %v3179 = vadd.f32 %v3028, %v3088
        %v3180 = vadd.f32 %v3029, %v3091
        %v3181 = vadd.f32 %v3030, %v3094
        %v3182 = vadd.f32 %v3031, %v3097
        %v3183 = vadd.f32 %v3032, %v3100
        %v3184 = vadd.f32 %v3033, %v3103
        %v3185 = vadd.f32 %v3034, %v3106
        %v3186 = vadd.f32 %v3035, %v3109
        %v3187 = vadd.f32 %v3036, %v3112
        %v3188 = vadd.f32 %v3037, %v3115
        %v3189 = vadd.f32 %v3038, %v3118
        %v3190 = vadd.f32 %v3039, %v3121
        %v3191 = vadd.f32 %v3040, %v3124
        %v3192 = vadd.f32 %v3041, %v3127
        %v3193 = vadd.f32 %v3042, %v3130
        %v3194 = vadd.f32 %v3043, %v3133
        %v3195 = vadd.f32 %v3044, %v3136
        %v3196 = vadd.f32 %v3045, %v3139
        %v3197 = vadd.f32 %v3046, %v3142
        %v3198 = vadd.f32 %v3047, %v3145
        %v3199 = vadd.f32 %v3048, %v3148
        %v3200 = vadd.f32 %v3049, %v3151
        %v3201 = vadd.f32 %v3050, %v3154
        %v3202 = vadd.f32 %v3051, %v3157
        %v3203 = vadd.f32 %v3052, %v3160
        %v3204 = vadd.f32 %v3053, %v3163
        %v3205 = vadd.f32 %v3054, %v3166
        %v3206 = vadd.f32 %v3055, %v3169
        %v3207 = vadd.f32 %v3056, %v3172
        %v3208 = vadd.f32 %v3057, %v3175
        %3241 = vrot.lane.b32.xlu0 %v3177, 8
        %v3242 = vpop.permute.xlu0 %3241
        %3243 = vrot.lane.b32.xlu0 %v3178, 8
        %v3244 = vpop.permute.xlu0 %3243
        %3245 = vrot.lane.b32.xlu0 %v3179, 8
        %v3246 = vpop.permute.xlu0 %3245
        %3247 = vrot.lane.b32.xlu0 %v3180, 8
        %v3248 = vpop.permute.xlu0 %3247
        %3249 = vrot.lane.b32.xlu0 %v3181, 8
        %v3250 = vpop.permute.xlu0 %3249
        %3251 = vrot.lane.b32.xlu0 %v3182, 8
        %v3252 = vpop.permute.xlu0 %3251
        %3253 = vrot.lane.b32.xlu0 %v3183, 8
        %v3254 = vpop.permute.xlu0 %3253
        %3255 = vrot.lane.b32.xlu0 %v3184, 8
        %v3256 = vpop.permute.xlu0 %3255
        %3257 = vrot.lane.b32.xlu0 %v3185, 8
        %v3258 = vpop.permute.xlu0 %3257
        %3259 = vrot.lane.b32.xlu0 %v3186, 8
        %v3260 = vpop.permute.xlu0 %3259
        %3261 = vrot.lane.b32.xlu0 %v3187, 8
        %v3262 = vpop.permute.xlu0 %3261
        %3263 = vrot.lane.b32.xlu0 %v3188, 8
        %v3264 = vpop.permute.xlu0 %3263
        %3265 = vrot.lane.b32.xlu0 %v3189, 8
        %v3266 = vpop.permute.xlu0 %3265
        %3267 = vrot.lane.b32.xlu0 %v3190, 8
        %v3268 = vpop.permute.xlu0 %3267
        %3269 = vrot.lane.b32.xlu0 %v3191, 8
        %v3270 = vpop.permute.xlu0 %3269
        %3271 = vrot.lane.b32.xlu0 %v3192, 8
        %v3272 = vpop.permute.xlu0 %3271
        %3273 = vrot.lane.b32.xlu0 %v3193, 8
        %v3274 = vpop.permute.xlu0 %3273
        %3275 = vrot.lane.b32.xlu0 %v3194, 8
        %v3276 = vpop.permute.xlu0 %3275
        %3277 = vrot.lane.b32.xlu0 %v3195, 8
        %v3278 = vpop.permute.xlu0 %3277
        %3279 = vrot.lane.b32.xlu0 %v3196, 8
        %v3280 = vpop.permute.xlu0 %3279
        %3281 = vrot.lane.b32.xlu0 %v3197, 8
        %v3282 = vpop.permute.xlu0 %3281
        %3283 = vrot.lane.b32.xlu0 %v3198, 8
        %v3284 = vpop.permute.xlu0 %3283
        %3285 = vrot.lane.b32.xlu0 %v3199, 8
        %v3286 = vpop.permute.xlu0 %3285
        %3287 = vrot.lane.b32.xlu0 %v3200, 8
        %v3288 = vpop.permute.xlu0 %3287
        %3289 = vrot.lane.b32.xlu0 %v3201, 8
        %v3290 = vpop.permute.xlu0 %3289
        %3291 = vrot.lane.b32.xlu0 %v3202, 8
        %v3292 = vpop.permute.xlu0 %3291
        %3293 = vrot.lane.b32.xlu0 %v3203, 8
        %v3294 = vpop.permute.xlu0 %3293
        %3295 = vrot.lane.b32.xlu0 %v3204, 8
        %v3296 = vpop.permute.xlu0 %3295
        %3297 = vrot.lane.b32.xlu0 %v3205, 8
        %v3298 = vpop.permute.xlu0 %3297
        %3299 = vrot.lane.b32.xlu0 %v3206, 8
        %v3300 = vpop.permute.xlu0 %3299
        %3301 = vrot.lane.b32.xlu0 %v3207, 8
        %v3302 = vpop.permute.xlu0 %3301
        %3303 = vrot.lane.b32.xlu0 %v3208, 8
        %v3304 = vpop.permute.xlu0 %3303
        %3337 = vrot.lane.b32.xlu0 %v1053, 8
        %v3338 = vpop.permute.xlu0 %3337
        %3339 = vrot.lane.b32.xlu0 %v1056, 8
        %v3340 = vpop.permute.xlu0 %3339
        %3341 = vrot.lane.b32.xlu0 %v1059, 8
        %v3342 = vpop.permute.xlu0 %3341
        %3343 = vrot.lane.b32.xlu0 %v1062, 8
        %v3344 = vpop.permute.xlu0 %3343
        %3345 = vrot.lane.b32.xlu0 %v1065, 8
        %v3346 = vpop.permute.xlu0 %3345
        %3347 = vrot.lane.b32.xlu0 %v1068, 8
        %v3348 = vpop.permute.xlu0 %3347
        %3349 = vrot.lane.b32.xlu0 %v1071, 8
        %v3350 = vpop.permute.xlu0 %3349
        %3351 = vrot.lane.b32.xlu0 %v1074, 8
        %v3352 = vpop.permute.xlu0 %3351
        %3353 = vrot.lane.b32.xlu0 %v1077, 8
        %v3354 = vpop.permute.xlu0 %3353
        %3355 = vrot.lane.b32.xlu0 %v1080, 8
        %v3356 = vpop.permute.xlu0 %3355
        %3357 = vrot.lane.b32.xlu0 %v1083, 8
        %v3358 = vpop.permute.xlu0 %3357
        %3359 = vrot.lane.b32.xlu0 %v1086, 8
        %v3360 = vpop.permute.xlu0 %3359
        %3361 = vrot.lane.b32.xlu0 %v1089, 8
        %v3362 = vpop.permute.xlu0 %3361
        %3363 = vrot.lane.b32.xlu0 %v1092, 8
        %v3364 = vpop.permute.xlu0 %3363
        %3365 = vrot.lane.b32.xlu0 %v1095, 8
        %v3366 = vpop.permute.xlu0 %3365
        %3367 = vrot.lane.b32.xlu0 %v1098, 8
        %v3368 = vpop.permute.xlu0 %3367
        %3369 = vrot.lane.b32.xlu0 %v1101, 8
        %v3370 = vpop.permute.xlu0 %3369
        %3371 = vrot.lane.b32.xlu0 %v1104, 8
        %v3372 = vpop.permute.xlu0 %3371
        %3373 = vrot.lane.b32.xlu0 %v1107, 8
        %v3374 = vpop.permute.xlu0 %3373
        %3375 = vrot.lane.b32.xlu0 %v1110, 8
        %v3376 = vpop.permute.xlu0 %3375
        %3377 = vrot.lane.b32.xlu0 %v1113, 8
        %v3378 = vpop.permute.xlu0 %3377
        %3379 = vrot.lane.b32.xlu0 %v1116, 8
        %v3380 = vpop.permute.xlu0 %3379
        %3381 = vrot.lane.b32.xlu0 %v1119, 8
        %v3382 = vpop.permute.xlu0 %3381
        %3383 = vrot.lane.b32.xlu0 %v1122, 8
        %v3384 = vpop.permute.xlu0 %3383
        %3385 = vrot.lane.b32.xlu0 %v1125, 8
        %v3386 = vpop.permute.xlu0 %3385
        %3387 = vrot.lane.b32.xlu0 %v1128, 8
        %v3388 = vpop.permute.xlu0 %3387
        %3389 = vrot.lane.b32.xlu0 %v1131, 8
        %v3390 = vpop.permute.xlu0 %3389
        %3391 = vrot.lane.b32.xlu0 %v1134, 8
        %v3392 = vpop.permute.xlu0 %3391
        %3393 = vrot.lane.b32.xlu0 %v1137, 8
        %v3394 = vpop.permute.xlu0 %3393
        %3395 = vrot.lane.b32.xlu0 %v1140, 8
        %v3396 = vpop.permute.xlu0 %3395
        %3397 = vrot.lane.b32.xlu0 %v1143, 8
        %v3398 = vpop.permute.xlu0 %3397
        %3399 = vrot.lane.b32.xlu0 %v1146, 8
        %v3400 = vpop.permute.xlu0 %3399
        %v3433 = vsel %vm938, %v1053, %v3242
        %v3434 = vsel %vm938, %v1056, %v3244
        %v3435 = vsel %vm938, %v1059, %v3246
        %v3436 = vsel %vm938, %v1062, %v3248
        %v3437 = vsel %vm938, %v1065, %v3250
        %v3438 = vsel %vm938, %v1068, %v3252
        %v3439 = vsel %vm938, %v1071, %v3254
        %v3440 = vsel %vm938, %v1074, %v3256
        %v3441 = vsel %vm938, %v1077, %v3258
        %v3442 = vsel %vm938, %v1080, %v3260
        %v3443 = vsel %vm938, %v1083, %v3262
        %v3444 = vsel %vm938, %v1086, %v3264
        %v3445 = vsel %vm938, %v1089, %v3266
        %v3446 = vsel %vm938, %v1092, %v3268
        %v3447 = vsel %vm938, %v1095, %v3270
        %v3448 = vsel %vm938, %v1098, %v3272
        %v3449 = vsel %vm938, %v1101, %v3274
        %v3450 = vsel %vm938, %v1104, %v3276
        %v3451 = vsel %vm938, %v1107, %v3278
        %v3452 = vsel %vm938, %v1110, %v3280
        %v3453 = vsel %vm938, %v1113, %v3282
        %v3454 = vsel %vm938, %v1116, %v3284
        %v3455 = vsel %vm938, %v1119, %v3286
        %v3456 = vsel %vm938, %v1122, %v3288
        %v3457 = vsel %vm938, %v1125, %v3290
        %v3458 = vsel %vm938, %v1128, %v3292
        %v3459 = vsel %vm938, %v1131, %v3294
        %v3460 = vsel %vm938, %v1134, %v3296
        %v3461 = vsel %vm938, %v1137, %v3298
        %v3462 = vsel %vm938, %v1140, %v3300
        %v3463 = vsel %vm938, %v1143, %v3302
        %v3464 = vsel %vm938, %v1146, %v3304
        %v3465 = vsel %vm2246, %v3433, %v3338
        %v3466 = vsel %vm2246, %v3434, %v3340
        %v3467 = vsel %vm2246, %v3435, %v3342
        %v3468 = vsel %vm2246, %v3436, %v3344
        %v3469 = vsel %vm2246, %v3437, %v3346
        %v3470 = vsel %vm2246, %v3438, %v3348
        %v3471 = vsel %vm2246, %v3439, %v3350
        %v3472 = vsel %vm2246, %v3440, %v3352
        %v3473 = vsel %vm2246, %v3441, %v3354
        %v3474 = vsel %vm2246, %v3442, %v3356
        %v3475 = vsel %vm2246, %v3443, %v3358
        %v3476 = vsel %vm2246, %v3444, %v3360
        %v3477 = vsel %vm2246, %v3445, %v3362
        %v3478 = vsel %vm2246, %v3446, %v3364
        %v3479 = vsel %vm2246, %v3447, %v3366
        %v3480 = vsel %vm2246, %v3448, %v3368
        %v3481 = vsel %vm2246, %v3449, %v3370
        %v3482 = vsel %vm2246, %v3450, %v3372
        %v3483 = vsel %vm2246, %v3451, %v3374
        %v3484 = vsel %vm2246, %v3452, %v3376
        %v3485 = vsel %vm2246, %v3453, %v3378
        %v3486 = vsel %vm2246, %v3454, %v3380
        %v3487 = vsel %vm2246, %v3455, %v3382
        %v3488 = vsel %vm2246, %v3456, %v3384
        %v3489 = vsel %vm2246, %v3457, %v3386
        %v3490 = vsel %vm2246, %v3458, %v3388
        %v3491 = vsel %vm2246, %v3459, %v3390
        %v3492 = vsel %vm2246, %v3460, %v3392
        %v3493 = vsel %vm2246, %v3461, %v3394
        %v3494 = vsel %vm2246, %v3462, %v3396
        %v3495 = vsel %vm2246, %v3463, %v3398
        %v3496 = vsel %vm2246, %v3464, %v3400
        %3529 = vrot.lane.b32.xlu0 %v1166, 8
        %v3530 = vpop.permute.xlu0 %3529
        %3531 = vrot.lane.b32.xlu0 %v1169, 8
        %v3532 = vpop.permute.xlu0 %3531
        %3533 = vrot.lane.b32.xlu0 %v1172, 8
        %v3534 = vpop.permute.xlu0 %3533
        %3535 = vrot.lane.b32.xlu0 %v1175, 8
        %v3536 = vpop.permute.xlu0 %3535
        %3537 = vrot.lane.b32.xlu0 %v1178, 8
        %v3538 = vpop.permute.xlu0 %3537
        %3539 = vrot.lane.b32.xlu0 %v1181, 8
        %v3540 = vpop.permute.xlu0 %3539
        %3541 = vrot.lane.b32.xlu0 %v1184, 8
        %v3542 = vpop.permute.xlu0 %3541
        %3543 = vrot.lane.b32.xlu0 %v1187, 8
        %v3544 = vpop.permute.xlu0 %3543
        %3545 = vrot.lane.b32.xlu0 %v1190, 8
        %v3546 = vpop.permute.xlu0 %3545
        %3547 = vrot.lane.b32.xlu0 %v1193, 8
        %v3548 = vpop.permute.xlu0 %3547
        %3549 = vrot.lane.b32.xlu0 %v1196, 8
        %v3550 = vpop.permute.xlu0 %3549
        %3551 = vrot.lane.b32.xlu0 %v1199, 8
        %v3552 = vpop.permute.xlu0 %3551
        %3553 = vrot.lane.b32.xlu0 %v1202, 8
        %v3554 = vpop.permute.xlu0 %3553
        %3555 = vrot.lane.b32.xlu0 %v1205, 8
        %v3556 = vpop.permute.xlu0 %3555
        %3557 = vrot.lane.b32.xlu0 %v1208, 8
        %v3558 = vpop.permute.xlu0 %3557
        %3559 = vrot.lane.b32.xlu0 %v1211, 8
        %v3560 = vpop.permute.xlu0 %3559
        %3561 = vrot.lane.b32.xlu0 %v1214, 8
        %v3562 = vpop.permute.xlu0 %3561
        %3563 = vrot.lane.b32.xlu0 %v1217, 8
        %v3564 = vpop.permute.xlu0 %3563
        %3565 = vrot.lane.b32.xlu0 %v1220, 8
        %v3566 = vpop.permute.xlu0 %3565
        %3567 = vrot.lane.b32.xlu0 %v1223, 8
        %v3568 = vpop.permute.xlu0 %3567
        %3569 = vrot.lane.b32.xlu0 %v1226, 8
        %v3570 = vpop.permute.xlu0 %3569
        %3571 = vrot.lane.b32.xlu0 %v1229, 8
        %v3572 = vpop.permute.xlu0 %3571
        %3573 = vrot.lane.b32.xlu0 %v1232, 8
        %v3574 = vpop.permute.xlu0 %3573
        %3575 = vrot.lane.b32.xlu0 %v1235, 8
        %v3576 = vpop.permute.xlu0 %3575
        %3577 = vrot.lane.b32.xlu0 %v1238, 8
        %v3578 = vpop.permute.xlu0 %3577
        %3579 = vrot.lane.b32.xlu0 %v1241, 8
        %v3580 = vpop.permute.xlu0 %3579
        %3581 = vrot.lane.b32.xlu0 %v1244, 8
        %v3582 = vpop.permute.xlu0 %3581
        %3583 = vrot.lane.b32.xlu0 %v1247, 8
        %v3584 = vpop.permute.xlu0 %3583
        %3585 = vrot.lane.b32.xlu0 %v1250, 8
        %v3586 = vpop.permute.xlu0 %3585
        %3587 = vrot.lane.b32.xlu0 %v1253, 8
        %v3588 = vpop.permute.xlu0 %3587
        %3589 = vrot.lane.b32.xlu0 %v1256, 8
        %v3590 = vpop.permute.xlu0 %3589
        %3591 = vrot.lane.b32.xlu0 %v1259, 8
        %v3592 = vpop.permute.xlu0 %3591
        %v3593 = vsel %vm938, %v3338, %v3530
        %v3594 = vsel %vm938, %v3340, %v3532
        %v3595 = vsel %vm938, %v3342, %v3534
        %v3596 = vsel %vm938, %v3344, %v3536
        %v3597 = vsel %vm938, %v3346, %v3538
        %v3598 = vsel %vm938, %v3348, %v3540
        %v3599 = vsel %vm938, %v3350, %v3542
        %v3600 = vsel %vm938, %v3352, %v3544
        %v3601 = vsel %vm938, %v3354, %v3546
        %v3602 = vsel %vm938, %v3356, %v3548
        %v3603 = vsel %vm938, %v3358, %v3550
        %v3604 = vsel %vm938, %v3360, %v3552
        %v3605 = vsel %vm938, %v3362, %v3554
        %v3606 = vsel %vm938, %v3364, %v3556
        %v3607 = vsel %vm938, %v3366, %v3558
        %v3608 = vsel %vm938, %v3368, %v3560
        %v3609 = vsel %vm938, %v3370, %v3562
        %v3610 = vsel %vm938, %v3372, %v3564
        %v3611 = vsel %vm938, %v3374, %v3566
        %v3612 = vsel %vm938, %v3376, %v3568
        %v3613 = vsel %vm938, %v3378, %v3570
        %v3614 = vsel %vm938, %v3380, %v3572
        %v3615 = vsel %vm938, %v3382, %v3574
        %v3616 = vsel %vm938, %v3384, %v3576
        %v3617 = vsel %vm938, %v3386, %v3578
        %v3618 = vsel %vm938, %v3388, %v3580
        %v3619 = vsel %vm938, %v3390, %v3582
        %v3620 = vsel %vm938, %v3392, %v3584
        %v3621 = vsel %vm938, %v3394, %v3586
        %v3622 = vsel %vm938, %v3396, %v3588
        %v3623 = vsel %vm938, %v3398, %v3590
        %v3624 = vsel %vm938, %v3400, %v3592
        %v3657 = vadd.f32 %v3465, %v3593
        %v3658 = vadd.f32 %v3466, %v3594
        %v3659 = vadd.f32 %v3467, %v3595
        %v3660 = vadd.f32 %v3468, %v3596
        %v3661 = vadd.f32 %v3469, %v3597
        %v3662 = vadd.f32 %v3470, %v3598
        %v3663 = vadd.f32 %v3471, %v3599
        %v3664 = vadd.f32 %v3472, %v3600
        %v3665 = vadd.f32 %v3473, %v3601
        %v3666 = vadd.f32 %v3474, %v3602
        %v3667 = vadd.f32 %v3475, %v3603
        %v3668 = vadd.f32 %v3476, %v3604
        %v3669 = vadd.f32 %v3477, %v3605
        %v3670 = vadd.f32 %v3478, %v3606
        %v3671 = vadd.f32 %v3479, %v3607
        %v3672 = vadd.f32 %v3480, %v3608
        %v3673 = vadd.f32 %v3481, %v3609
        %v3674 = vadd.f32 %v3482, %v3610
        %v3675 = vadd.f32 %v3483, %v3611
        %v3676 = vadd.f32 %v3484, %v3612
        %v3677 = vadd.f32 %v3485, %v3613
        %v3678 = vadd.f32 %v3486, %v3614
        %v3679 = vadd.f32 %v3487, %v3615
        %v3680 = vadd.f32 %v3488, %v3616
        %v3681 = vadd.f32 %v3489, %v3617
        %v3682 = vadd.f32 %v3490, %v3618
        %v3683 = vadd.f32 %v3491, %v3619
        %v3684 = vadd.f32 %v3492, %v3620
        %v3685 = vadd.f32 %v3493, %v3621
        %v3686 = vadd.f32 %v3494, %v3622
        %v3687 = vadd.f32 %v3495, %v3623
        %v3688 = vadd.f32 %v3496, %v3624
        %3689 = vst [vmem:[%s190] sm:$0xff] %v3657
        %3690 = vst [vmem:[%s190 + $0x8] sm:$0xff] %v3658
        %3691 = vst [vmem:[%s190 + $0x10] sm:$0xff] %v3659
        %3692 = vst [vmem:[%s190 + $0x18] sm:$0xff] %v3660
        %3693 = vst [vmem:[%s190 + $0x20] sm:$0xff] %v3661
        %3694 = vst [vmem:[%s190 + $0x28] sm:$0xff] %v3662
        %3695 = vst [vmem:[%s190 + $0x30] sm:$0xff] %v3663
        %3696 = vst [vmem:[%s190 + $0x38] sm:$0xff] %v3664
        %3697 = vst [vmem:[%s190 + $0x40] sm:$0xff] %v3665
        %3698 = vst [vmem:[%s190 + $0x48] sm:$0xff] %v3666
        %3699 = vst [vmem:[%s190 + $0x50] sm:$0xff] %v3667
        %3700 = vst [vmem:[%s190 + $0x58] sm:$0xff] %v3668
        %3701 = vst [vmem:[%s190 + $0x60] sm:$0xff] %v3669
        %3702 = vst [vmem:[%s190 + $0x68] sm:$0xff] %v3670
        %3703 = vst [vmem:[%s190 + $0x70] sm:$0xff] %v3671
        %3704 = vst [vmem:[%s190 + $0x78] sm:$0xff] %v3672
        %3705 = vst [vmem:[%s190 + $0x80] sm:$0xff] %v3673
        %3706 = vst [vmem:[%s190 + $0x88] sm:$0xff] %v3674
        %3707 = vst [vmem:[%s190 + $0x90] sm:$0xff] %v3675
        %3708 = vst [vmem:[%s190 + $0x98] sm:$0xff] %v3676
        %3709 = vst [vmem:[%s190 + $0xa0] sm:$0xff] %v3677
        %3710 = vst [vmem:[%s190 + $0xa8] sm:$0xff] %v3678
        %3711 = vst [vmem:[%s190 + $0xb0] sm:$0xff] %v3679
        %3712 = vst [vmem:[%s190 + $0xb8] sm:$0xff] %v3680
        %3713 = vst [vmem:[%s190 + $0xc0] sm:$0xff] %v3681
        %3714 = vst [vmem:[%s190 + $0xc8] sm:$0xff] %v3682
        %3715 = vst [vmem:[%s190 + $0xd0] sm:$0xff] %v3683
        %3716 = vst [vmem:[%s190 + $0xd8] sm:$0xff] %v3684
        %3717 = vst [vmem:[%s190 + $0xe0] sm:$0xff] %v3685
        %3718 = vst [vmem:[%s190 + $0xe8] sm:$0xff] %v3686
        %3719 = vst [vmem:[%s190 + $0xf0] sm:$0xff] %v3687
        %3720 = vst [vmem:[%s190 + $0xf8] sm:$0xff] %v3688
        %s3721 = sand.u32 %s115, 1
        %s3722 = scalar_lea.sflag [#allocation3], %s3721
        %s3723 = sand.u32 %s115, 1
        %s3724 = smul.addr %s3723, 256
        %s3725 = scalar_lea.vmem [#allocation2], %s3724
        // Predicated region
        $region37: #{tpu_custom_call.1} parent=35 // pred_check
          %p3726 = pneg %p125
        $region38: #{tpu_custom_call.1} parent=35 // pred_check_branch
          %3728 = sbr.rel (%p3726) target = $region40
        $region39: #{tpu_custom_call.1} parent=35 // pred_region
          %3730 = vsyncadd %s3722, 0
          %s3731 = smul.addr %s18, 32
          %s3732 = smul.addr %s3731, 8
          %s3733 = scalar_lea.hbm %s4, %s3732
          %s3734 = sshll.u32 %s3725, 4
          %s3735 = int_to_ptr.vmem [resolvable:$true] %s3734
          %s3736 = sshll.u32 %s3733, 4
          %s3737 = int_to_ptr.hbm [resolvable:$true] %s3736
          %3742 = dma.vmem_to_hbm [thread:$0]  %s3735, 4096, %s3737, %s3722, 128, 128, 8
        $region40: #{tpu_custom_call.1} parent=35 // pred_fallthru
          _
      $region36: #{tpu_custom_call.1} parent=5 // pred_fallthru
        _
      %p3743 = scmp.le.s32.totalorder 2, %s13
      // Predicated region
      $region41: #{tpu_custom_call.1} parent=5 // pred_check
        %p3744 = pneg %p3743
      $region42: #{tpu_custom_call.1} parent=5 // pred_check_branch
        %3746 = sbr.rel (%p3744) target = $region44
      $region43: #{tpu_custom_call.1} parent=5 // pred_region
        %s3747 = ssub.s32 %s13, 2
        // Predicated region
        $region45: #{tpu_custom_call.1} parent=43 // pred_check
          %p3748 = pneg %p131
        $region46: #{tpu_custom_call.1} parent=43 // pred_check_branch
          %3750 = sbr.rel (%p3748) target = $region48
        $region47: #{tpu_custom_call.1} parent=43 // pred_region
          %s3751 = sand.u32 %s116, 1
          %s3752 = scalar_lea.sflag [#allocation3], %s3751
          %s3753 = sand.u32 %s116, 1
          %s3754 = smul.addr %s3753, 256
          %s3755 = scalar_lea.vmem [#allocation2], %s3754
          %3757 = dma.done %s3752, 4096
        $region48: #{tpu_custom_call.1} parent=43 // pred_fallthru
          _
      $region44: #{tpu_custom_call.1} parent=5 // pred_fallthru
        _
    $region6: #{tpu_custom_call.1} parent=1 // loop_footer
      %s17 = sadd.s32 1, %s13
    $region7: #{tpu_custom_call.1} parent=1 // loop_footer_branch
      %12 = sbr.rel target = $region3
    $region8: #{tpu_custom_call.1} parent=1 // loop_exit
      _
    %3758 = vsyncpa [#allocation3], 1
    %s3759 = scalar_lea.sflag [#allocation3], 1
    %3760 = vsyncpa %s3759, 1

</llo_original>
